<compile_context>
chip_gen: v6e
topology: v6e:2x2x1
jax: 0.10.0
libtpu: 0.0.40
codegen_flags: <defaults>
</compile_context>

<pallas_src>
import numpy as np
import jax
import jax.numpy as jnp
from jax import lax
from jax.experimental import pallas as pl
from jax.experimental.pallas import tpu as pltpu

EPS = 1e-5
NEG = -3.4028235e38          # -float32.max, same mask value as the reference
BIG = 3.4028235e38


# --------------------------------------------------------------------------
# wrapper-side constant builders (numpy; all shapes static under jit)
# --------------------------------------------------------------------------

def _shift_matrices(K, L, B):
    """T[k] (B*L, B*L): T[k][j + (k - K//2), j] = 1 for in-range, same-batch
    source positions.  (Cout, B*L) @ T[k] realises the per-batch 'same'-padded
    shift of the length axis entirely as a matmul."""
    P = K // 2
    T = np.zeros((K, B * L, B * L), np.float32)
    for k in range(K):
        d = k - P
        for b in range(B):
            for l in range(L):
                src = l + d
                if 0 <= src < L:
                    T[k, b * L + src, b * L + l] = 1.0
    return T


def _pool_selectors(L, B):
    """Se/So (B*L, B*N) gather the even/odd element of each pool-2 window;
    padmask (1, B*N) marks windows whose odd slot is padding (odd L only)."""
    rem = L % 2
    N = (L + rem) // 2
    Se = np.zeros((B * L, B * N), np.float32)
    So = np.zeros((B * L, B * N), np.float32)
    for b in range(B):
        for n in range(N):
            if 2 * n < L:
                Se[b * L + 2 * n, b * N + n] = 1.0
            if 2 * n + 1 < L:
                So[b * L + 2 * n + 1, b * N + n] = 1.0
    padmask = np.zeros((1, B * N), np.float32)
    if rem:
        for b in range(B):
            padmask[0, b * N + N - 1] = 1.0
    return Se, So, padmask, N, rem


def _batch_addmasks(L, B):
    """Per-batch (1, B*L) additive masks: 0 inside the batch segment, -FLT_MAX
    outside.  h + mask then a plain lane-max gives the per-batch max."""
    masks = []
    for b in range(B):
        m = np.full((1, B * L), NEG, np.float32)
        m[0, b * L:(b + 1) * L] = 0.0
        masks.append(m)
    return masks


def _onehot_rows(B):
    """(1, B) one-hot rows used to scatter per-batch max columns into (C, B)."""
    eye = np.eye(B, dtype=np.float32)
    return [eye[b:b + 1] for b in range(B)]


# --------------------------------------------------------------------------
# fused forward pass
# --------------------------------------------------------------------------

def forward(params, x):
    """x: (B, 4, L) float32 -> (B, 1) float32.  One fused Pallas kernel."""
    B, Cin, L0 = x.shape

    # -------- trace-time input preparation (tiny constants / layout only) ---
    def prep_conv(w, b, L):
        Cout, Ci, K = w.shape
        d = {"b": b.reshape(Cout, 1).astype(jnp.float32)}
        if K == 1:
            d["w"] = w.reshape(Cout, Ci).astype(jnp.float32)
        else:
            # Wstack[k*Cout + o, c] = W[o, c, k]
            d["w"] = jnp.transpose(w, (2, 0, 1)).reshape(K * Cout, Ci).astype(jnp.float32)
            d["t"] = jnp.asarray(_shift_matrices(K, L, B))
        return d

    def prep_convblock(p, L):
        Ci = p["gamma"].shape[0]
        return {"gamma": p["gamma"].reshape(Ci, 1).astype(jnp.float32),
                "beta": p["beta"].reshape(Ci, 1).astype(jnp.float32),
                "conv": prep_conv(p["w"], p["b"], L)}

    def prep_pool(w, L):
        se, so, pm, N, rem = _pool_selectors(L, B)
        d = {"w": w.astype(jnp.float32),
             "se": jnp.asarray(se), "so": jnp.asarray(so)}
        if rem:
            d["padmask"] = jnp.asarray(pm)
        return d, N

    L = L0
    x2 = jnp.transpose(x, (1, 0, 2)).reshape(Cin, B * L0).astype(jnp.float32)

    stem_conv = prep_conv(params["stem_conv_w"], params["stem_conv_b"], L)
    stem_res = prep_convblock(params["stem_res"], L)
    stem_pool, L = prep_pool(params["stem_pool_w"], L)

    blocks_prep = []
    for blk in params["blocks"]:
        cb1 = prep_convblock(blk["cb1"], L)
        cb2 = prep_convblock(blk["cb2"], L)
        pool, L = prep_pool(blk["pool_w"], L)
        blocks_prep.append({"cb1": cb1, "cb2": cb2, "pool": pool})

    head_prep = {"w": params["linear_w"].astype(jnp.float32),
                 "b": params["linear_b"].reshape(1, 1).astype(jnp.float32),
                 "am": [jnp.asarray(m) for m in _batch_addmasks(L, B)],
                 "oh": [jnp.asarray(o) for o in _onehot_rows(B)]}

    prep = {"x": x2,
            "stem": {"conv": stem_conv, "res": stem_res, "pool": stem_pool},
            "blocks": blocks_prep,
            "head": head_prep}

    flat, treedef = jax.tree_util.tree_flatten(prep)

    # ----------------------------- the kernel -------------------------------
    def kernel(*refs):
        tree = jax.tree_util.tree_unflatten(treedef, refs[:-1])
        out_ref = refs[-1]

        def conv(h, p):
            # h: (Cin, B*L).  K>1: y = sum_k (W_k @ h) @ T_k  + bias
            w = p["w"][...]
            bias = p["b"][...]
            if "t" in p:
                t_ref = p["t"]                              # (K, BL, BL) 0/1
                K = t_ref.shape[0]
                Cout = w.shape[0] // K
                g = jnp.dot(w, h, preferred_element_type=jnp.float32)  # (K*Cout, BL)
                y = jnp.dot(g[0:Cout, :], t_ref[0],
                            preferred_element_type=jnp.float32)
                for k in range(1, K):
                    y = y + jnp.dot(g[k * Cout:(k + 1) * Cout, :], t_ref[k],
                                    preferred_element_type=jnp.float32)
                return y + bias
            return jnp.dot(w, h, preferred_element_type=jnp.float32) + bias

        def bn_gelu(h, p):
            # BatchNorm1d (training-mode batch stats, biased var) + sigmoid-GELU
            xc = h - jnp.mean(h, axis=1, keepdims=True)
            var = jnp.mean(xc * xc, axis=1, keepdims=True)
            y = xc * lax.rsqrt(var + EPS) * p["gamma"][...] + p["beta"][...]
            return jax.nn.sigmoid(1.702 * y) * y

        def conv_block(h, p):
            return conv(bn_gelu(h, p), p["conv"])

        def attn_pool(h, p):
            # pool_size=2 softmax == sigmoid gate on the logit difference:
            #   a = sigmoid(W @ (xe - xo)),   out = xo + a * (xe - xo)
            xe = jnp.dot(h, p["se"][...], preferred_element_type=jnp.float32)  # (C, BN)
            xo = jnp.dot(h, p["so"][...], preferred_element_type=jnp.float32)  # (C, BN)
            d = xe - xo
            g = jnp.dot(p["w"][...], d, preferred_element_type=jnp.float32)    # le - lo
            if "padmask" in p:
                # odd-length last window: odd slot is padding -> force weight 1 on even
                g = jnp.where(p["padmask"][...] > 0.0, BIG, g)
            a = jax.nn.sigmoid(g)
            return xo + a * d

        def head(h, p):
            # per-batch max over length -> Linear(C, 1) -> ReLU, output (1, B)
            wlin = p["w"][...]                              # (1, C)
            blin = p["b"][...]                              # (1, 1)
            C = h.shape[0]
            m = jnp.zeros((C, B), jnp.float32)
            for b in range(B):
                col = jnp.max(h + p["am"][b][...], axis=1, keepdims=True)  # (C, 1)
                m = m + col * p["oh"][b][...]                              # (C, B)
            y = jnp.dot(wlin, m, preferred_element_type=jnp.float32) + blin
            return jnp.maximum(y, 0.0)

        h = tree["x"][...]
        h = conv(h, tree["stem"]["conv"])
        h = conv_block(h, tree["stem"]["res"]) + h           # Residual
        h = attn_pool(h, tree["stem"]["pool"])
        for blk in tree["blocks"]:
            h = conv_block(h, blk["cb1"])
            h = conv_block(h, blk["cb2"]) + h                # Residual
            h = attn_pool(h, blk["pool"])
        out_ref[...] = head(h, tree["head"])

    out = pl.pallas_call(
        kernel,
        out_shape=jax.ShapeDtypeStruct((1, B), jnp.float32),
        in_specs=[pl.BlockSpec(memory_space=pltpu.MemorySpace.VMEM)
                  for _ in flat],
        out_specs=pl.BlockSpec(memory_space=pltpu.MemorySpace.VMEM),
    )(*flat)
    return out.reshape(B, 1)


# --------------------------------------------------------------------------
# parameters
# --------------------------------------------------------------------------

def init_params(key, n_block=2, filter_size=16, vocab=4,
                kernel_size=7, stem_kernel_size=7):
    keys = iter(jax.random.split(key, 128))

    def nrm(shape, scale=0.1):
        return scale * jax.random.normal(next(keys), shape, jnp.float32)

    params = {
        "stem_conv_w": nrm((filter_size, vocab, stem_kernel_size)),
        "stem_conv_b": nrm((filter_size,)),
        "stem_res": dict(gamma=1.0 + nrm((filter_size,)), beta=nrm((filter_size,)),
                         w=nrm((filter_size, filter_size, 1)), b=nrm((filter_size,))),
        "stem_pool_w": nrm((filter_size, filter_size)),
    }
    blocks = []
    initial, prev, fs = filter_size, filter_size, filter_size
    for blk in range(n_block):
        if blk > 4:
            fs = int(initial * 0.2)
        blocks.append(dict(
            cb1=dict(gamma=1.0 + nrm((prev,)), beta=nrm((prev,)),
                     w=nrm((fs, prev, kernel_size)), b=nrm((fs,))),
            cb2=dict(gamma=1.0 + nrm((fs,)), beta=nrm((fs,)),
                     w=nrm((fs, fs, 1)), b=nrm((fs,))),
            pool_w=nrm((fs, fs)),
        ))
        prev = fs
    params["blocks"] = blocks
    params["linear_w"] = nrm((1, prev))          # PyTorch Linear weight (out, in)
    params["linear_b"] = nrm((1,))
    return params


# --------------------------------------------------------------------------
# pure-JAX reference
# --------------------------------------------------------------------------

def _ref_conv1d_same(x, w, b):
    B, Cin, L = x.shape
    Cout, _, K = w.shape
    P = K // 2
    xpad = jnp.pad(x, ((0, 0), (0, 0), (P, K - 1 - P)))
    out = jnp.zeros((B, Cout, L), jnp.float32)
    for k in range(K):
        out = out + jnp.einsum("oi,bil->bol", w[:, :, k], xpad[:, :, k:k + L])
    return out + b[None, :, None]


def _ref_bn_gelu(x, gamma, beta):
    mean = jnp.mean(x, axis=(0, 2), keepdims=True)
    var = jnp.mean((x - mean) ** 2, axis=(0, 2), keepdims=True)
    y = (x - mean) / jnp.sqrt(var + EPS) * gamma[None, :, None] + beta[None, :, None]
    return jax.nn.sigmoid(1.702 * y) * y


def _ref_attention_pool(x, w):
    B, C, n = x.shape
    rem = n % 2
    if rem:
        x = jnp.pad(x, ((0, 0), (0, 0), (0, rem)))
    N = x.shape[-1] // 2
    xp = x.reshape(B, C, N, 2)
    logits = jnp.einsum("oi,binp->bonp", w, xp)
    if rem:
        mask = jnp.zeros((1, 1, N, 2), bool).at[0, 0, N - 1, 1].set(True)
        logits = jnp.where(mask, jnp.float32(NEG), logits)
    attn = jax.nn.softmax(logits, axis=-1)
    return jnp.sum(xp * attn, axis=-1)


def _ref_forward(params, x):
    def cb(h, p):
        return _ref_conv1d_same(_ref_bn_gelu(h, p["gamma"], p["beta"]), p["w"], p["b"])
    h = _ref_conv1d_same(x, params["stem_conv_w"], params["stem_conv_b"])
    h = cb(h, params["stem_res"]) + h
    h = _ref_attention_pool(h, params["stem_pool_w"])
    for blk in params["blocks"]:
        h = cb(h, blk["cb1"])
        h = cb(h, blk["cb2"]) + h
        h = _ref_attention_pool(h, blk["pool_w"])
    hm = jnp.max(h, axis=-1)
    y = hm @ params["linear_w"].T + params["linear_b"][None, :]
    return jnp.maximum(y, 0.0)


# --------------------------------------------------------------------------
# main
# --------------------------------------------------------------------------

if __name__ == "__main__":
    key = jax.random.PRNGKey(0)
    k_param, k_x = jax.random.split(key)

    B, VOCAB, L = 2, 4, 32            # batch=2, 4-letter vocab, seq=32
    N_BLOCK, FILTERS = 2, 16

    params = init_params(k_param, n_block=N_BLOCK, filter_size=FILTERS, vocab=VOCAB)
    x = jax.random.normal(k_x, (B, VOCAB, L), jnp.float32)

    out = jax.jit(forward)(params, x)
    out = jax.block_until_ready(out)
    assert out.shape == (B, 1), out.shape

    ref = _ref_forward(params, x)
    assert jnp.allclose(out, ref, rtol=2e-3, atol=2e-3), (out, ref)

    # TODO(synk): odd-length AttentionPool masking path (padmask) is implemented
    # but not exercised at these power-of-two sequence lengths.
    print("KERNEL_OK")
</pallas_src>

<mosaic_0001>
module attributes {stable_mosaic.version = 11 : i64} {
  func.func @kernel(%arg0: memref<16x1xf32, #tpu.memory_space<vmem>>, %arg1: memref<16x1xf32, #tpu.memory_space<vmem>>, %arg2: memref<7x32x32xf32, #tpu.memory_space<vmem>>, %arg3: memref<112x16xf32, #tpu.memory_space<vmem>>, %arg4: memref<16x1xf32, #tpu.memory_space<vmem>>, %arg5: memref<16x1xf32, #tpu.memory_space<vmem>>, %arg6: memref<16x1xf32, #tpu.memory_space<vmem>>, %arg7: memref<16x16xf32, #tpu.memory_space<vmem>>, %arg8: memref<16x1xf32, #tpu.memory_space<vmem>>, %arg9: memref<32x16xf32, #tpu.memory_space<vmem>>, %arg10: memref<32x16xf32, #tpu.memory_space<vmem>>, %arg11: memref<16x16xf32, #tpu.memory_space<vmem>>, %arg12: memref<16x1xf32, #tpu.memory_space<vmem>>, %arg13: memref<16x1xf32, #tpu.memory_space<vmem>>, %arg14: memref<7x16x16xf32, #tpu.memory_space<vmem>>, %arg15: memref<112x16xf32, #tpu.memory_space<vmem>>, %arg16: memref<16x1xf32, #tpu.memory_space<vmem>>, %arg17: memref<16x1xf32, #tpu.memory_space<vmem>>, %arg18: memref<16x1xf32, #tpu.memory_space<vmem>>, %arg19: memref<16x16xf32, #tpu.memory_space<vmem>>, %arg20: memref<16x1xf32, #tpu.memory_space<vmem>>, %arg21: memref<16x8xf32, #tpu.memory_space<vmem>>, %arg22: memref<16x8xf32, #tpu.memory_space<vmem>>, %arg23: memref<16x16xf32, #tpu.memory_space<vmem>>, %arg24: memref<1x8xf32, #tpu.memory_space<vmem>>, %arg25: memref<1x8xf32, #tpu.memory_space<vmem>>, %arg26: memref<1x1xf32, #tpu.memory_space<vmem>>, %arg27: memref<1x2xf32, #tpu.memory_space<vmem>>, %arg28: memref<1x2xf32, #tpu.memory_space<vmem>>, %arg29: memref<1x16xf32, #tpu.memory_space<vmem>>, %arg30: memref<16x1xf32, #tpu.memory_space<vmem>>, %arg31: memref<7x64x64xf32, #tpu.memory_space<vmem>>, %arg32: memref<112x4xf32, #tpu.memory_space<vmem>>, %arg33: memref<64x32xf32, #tpu.memory_space<vmem>>, %arg34: memref<64x32xf32, #tpu.memory_space<vmem>>, %arg35: memref<16x16xf32, #tpu.memory_space<vmem>>, %arg36: memref<16x1xf32, #tpu.memory_space<vmem>>, %arg37: memref<16x1xf32, #tpu.memory_space<vmem>>, %arg38: memref<16x16xf32, #tpu.memory_space<vmem>>, %arg39: memref<16x1xf32, #tpu.memory_space<vmem>>, %arg40: memref<4x64xf32, #tpu.memory_space<vmem>>, %arg41: memref<1x2xf32, #tpu.memory_space<vmem>>) attributes {dimension_semantics = [], scalar_prefetch = 0 : i64, scratch_operands = 0 : i64, tpu.core_type = #tpu.core_type<tc>} {
    %c0 = arith.constant 0 : index
    %c0_0 = arith.constant 0 : index
    %0 = vector.load %arg40[%c0, %c0_0] : memref<4x64xf32, #tpu.memory_space<vmem>>, vector<4x64xf32>
    %c0_1 = arith.constant 0 : index
    %c0_2 = arith.constant 0 : index
    %1 = vector.load %arg32[%c0_1, %c0_2] : memref<112x4xf32, #tpu.memory_space<vmem>>, vector<112x4xf32>
    %c0_3 = arith.constant 0 : index
    %c0_4 = arith.constant 0 : index
    %2 = vector.load %arg30[%c0_3, %c0_4] : memref<16x1xf32, #tpu.memory_space<vmem>>, vector<16x1xf32>
    %cst = arith.constant dense<0.000000e+00> : vector<112x64xf32>
    %3 = tpu.matmul %1, %0, %cst {dimension_numbers = #tpu.dot_dimension_numbers<[1], [0], [0], [1], [0, 0, 1, 1], [], []>} : vector<112x4xf32>, vector<4x64xf32>, vector<112x64xf32> -> vector<112x64xf32>
    %4 = vector.extract_strided_slice %3 {offsets = [0, 0], sizes = [16, 64], strides = [1, 1]} : vector<112x64xf32> to vector<16x64xf32>
    %c0_5 = arith.constant 0 : index
    %c0_6 = arith.constant 0 : index
    %c0_7 = arith.constant 0 : index
    %5 = vector.load %arg31[%c0_5, %c0_6, %c0_7] : memref<7x64x64xf32, #tpu.memory_space<vmem>>, vector<1x64x64xf32>
    %6 = vector.shape_cast %5 : vector<1x64x64xf32> to vector<64x64xf32>
    %cst_8 = arith.constant dense<0.000000e+00> : vector<16x64xf32>
    %7 = tpu.matmul %4, %6, %cst_8 {dimension_numbers = #tpu.dot_dimension_numbers<[1], [0], [0], [1], [0, 0, 1, 1], [], []>} : vector<16x64xf32>, vector<64x64xf32>, vector<16x64xf32> -> vector<16x64xf32>
    %8 = vector.extract_strided_slice %3 {offsets = [16, 0], sizes = [16, 64], strides = [1, 1]} : vector<112x64xf32> to vector<16x64xf32>
    %c1 = arith.constant 1 : index
    %c0_9 = arith.constant 0 : index
    %c0_10 = arith.constant 0 : index
    %9 = vector.load %arg31[%c1, %c0_9, %c0_10] : memref<7x64x64xf32, #tpu.memory_space<vmem>>, vector<1x64x64xf32>
    %10 = vector.shape_cast %9 : vector<1x64x64xf32> to vector<64x64xf32>
    %cst_11 = arith.constant dense<0.000000e+00> : vector<16x64xf32>
    %11 = tpu.matmul %8, %10, %cst_11 {dimension_numbers = #tpu.dot_dimension_numbers<[1], [0], [0], [1], [0, 0, 1, 1], [], []>} : vector<16x64xf32>, vector<64x64xf32>, vector<16x64xf32> -> vector<16x64xf32>
    %12 = arith.addf %7, %11 : vector<16x64xf32>
    %13 = vector.extract_strided_slice %3 {offsets = [32, 0], sizes = [16, 64], strides = [1, 1]} : vector<112x64xf32> to vector<16x64xf32>
    %c2 = arith.constant 2 : index
    %c0_12 = arith.constant 0 : index
    %c0_13 = arith.constant 0 : index
    %14 = vector.load %arg31[%c2, %c0_12, %c0_13] : memref<7x64x64xf32, #tpu.memory_space<vmem>>, vector<1x64x64xf32>
    %15 = vector.shape_cast %14 : vector<1x64x64xf32> to vector<64x64xf32>
    %cst_14 = arith.constant dense<0.000000e+00> : vector<16x64xf32>
    %16 = tpu.matmul %13, %15, %cst_14 {dimension_numbers = #tpu.dot_dimension_numbers<[1], [0], [0], [1], [0, 0, 1, 1], [], []>} : vector<16x64xf32>, vector<64x64xf32>, vector<16x64xf32> -> vector<16x64xf32>
    %17 = arith.addf %12, %16 : vector<16x64xf32>
    %18 = vector.extract_strided_slice %3 {offsets = [48, 0], sizes = [16, 64], strides = [1, 1]} : vector<112x64xf32> to vector<16x64xf32>
    %c3 = arith.constant 3 : index
    %c0_15 = arith.constant 0 : index
    %c0_16 = arith.constant 0 : index
    %19 = vector.load %arg31[%c3, %c0_15, %c0_16] : memref<7x64x64xf32, #tpu.memory_space<vmem>>, vector<1x64x64xf32>
    %20 = vector.shape_cast %19 : vector<1x64x64xf32> to vector<64x64xf32>
    %cst_17 = arith.constant dense<0.000000e+00> : vector<16x64xf32>
    %21 = tpu.matmul %18, %20, %cst_17 {dimension_numbers = #tpu.dot_dimension_numbers<[1], [0], [0], [1], [0, 0, 1, 1], [], []>} : vector<16x64xf32>, vector<64x64xf32>, vector<16x64xf32> -> vector<16x64xf32>
    %22 = arith.addf %17, %21 : vector<16x64xf32>
    %23 = vector.extract_strided_slice %3 {offsets = [64, 0], sizes = [16, 64], strides = [1, 1]} : vector<112x64xf32> to vector<16x64xf32>
    %c4 = arith.constant 4 : index
    %c0_18 = arith.constant 0 : index
    %c0_19 = arith.constant 0 : index
    %24 = vector.load %arg31[%c4, %c0_18, %c0_19] : memref<7x64x64xf32, #tpu.memory_space<vmem>>, vector<1x64x64xf32>
    %25 = vector.shape_cast %24 : vector<1x64x64xf32> to vector<64x64xf32>
    %cst_20 = arith.constant dense<0.000000e+00> : vector<16x64xf32>
    %26 = tpu.matmul %23, %25, %cst_20 {dimension_numbers = #tpu.dot_dimension_numbers<[1], [0], [0], [1], [0, 0, 1, 1], [], []>} : vector<16x64xf32>, vector<64x64xf32>, vector<16x64xf32> -> vector<16x64xf32>
    %27 = arith.addf %22, %26 : vector<16x64xf32>
    %28 = vector.extract_strided_slice %3 {offsets = [80, 0], sizes = [16, 64], strides = [1, 1]} : vector<112x64xf32> to vector<16x64xf32>
    %c5 = arith.constant 5 : index
    %c0_21 = arith.constant 0 : index
    %c0_22 = arith.constant 0 : index
    %29 = vector.load %arg31[%c5, %c0_21, %c0_22] : memref<7x64x64xf32, #tpu.memory_space<vmem>>, vector<1x64x64xf32>
    %30 = vector.shape_cast %29 : vector<1x64x64xf32> to vector<64x64xf32>
    %cst_23 = arith.constant dense<0.000000e+00> : vector<16x64xf32>
    %31 = tpu.matmul %28, %30, %cst_23 {dimension_numbers = #tpu.dot_dimension_numbers<[1], [0], [0], [1], [0, 0, 1, 1], [], []>} : vector<16x64xf32>, vector<64x64xf32>, vector<16x64xf32> -> vector<16x64xf32>
    %32 = arith.addf %27, %31 : vector<16x64xf32>
    %33 = vector.extract_strided_slice %3 {offsets = [96, 0], sizes = [16, 64], strides = [1, 1]} : vector<112x64xf32> to vector<16x64xf32>
    %c6 = arith.constant 6 : index
    %c0_24 = arith.constant 0 : index
    %c0_25 = arith.constant 0 : index
    %34 = vector.load %arg31[%c6, %c0_24, %c0_25] : memref<7x64x64xf32, #tpu.memory_space<vmem>>, vector<1x64x64xf32>
    %35 = vector.shape_cast %34 : vector<1x64x64xf32> to vector<64x64xf32>
    %cst_26 = arith.constant dense<0.000000e+00> : vector<16x64xf32>
    %36 = tpu.matmul %33, %35, %cst_26 {dimension_numbers = #tpu.dot_dimension_numbers<[1], [0], [0], [1], [0, 0, 1, 1], [], []>} : vector<16x64xf32>, vector<64x64xf32>, vector<16x64xf32> -> vector<16x64xf32>
    %37 = arith.addf %32, %36 : vector<16x64xf32>
    %38 = vector.broadcast %2 : vector<16x1xf32> to vector<16x64xf32>
    %39 = arith.addf %37, %38 : vector<16x64xf32>
    %cst_27 = arith.constant dense<0.000000e+00> : vector<16xf32>
    %40 = vector.multi_reduction <add>, %39, %cst_27 [1] : vector<16x64xf32> to vector<16xf32>
    %41 = vector.shape_cast %40 : vector<16xf32> to vector<16x1xf32>
    %cst_28 = arith.constant 6.400000e+01 : f32
    %42 = vector.broadcast %cst_28 : f32 to vector<16x1xf32>
    %43 = arith.divf %41, %42 : vector<16x1xf32>
    %44 = vector.broadcast %43 : vector<16x1xf32> to vector<16x64xf32>
    %45 = arith.subf %39, %44 : vector<16x64xf32>
    %46 = arith.mulf %45, %45 : vector<16x64xf32>
    %cst_29 = arith.constant dense<0.000000e+00> : vector<16xf32>
    %47 = vector.multi_reduction <add>, %46, %cst_29 [1] : vector<16x64xf32> to vector<16xf32>
    %48 = vector.shape_cast %47 : vector<16xf32> to vector<16x1xf32>
    %cst_30 = arith.constant 6.400000e+01 : f32
    %49 = vector.broadcast %cst_30 : f32 to vector<16x1xf32>
    %50 = arith.divf %48, %49 : vector<16x1xf32>
    %cst_31 = arith.constant 9.99999974E-6 : f32
    %51 = vector.broadcast %cst_31 : f32 to vector<16x1xf32>
    %52 = arith.addf %50, %51 : vector<16x1xf32>
    %53 = math.rsqrt %52 : vector<16x1xf32>
    %54 = vector.broadcast %53 : vector<16x1xf32> to vector<16x64xf32>
    %55 = arith.mulf %45, %54 : vector<16x64xf32>
    %c0_32 = arith.constant 0 : index
    %c0_33 = arith.constant 0 : index
    %56 = vector.load %arg39[%c0_32, %c0_33] : memref<16x1xf32, #tpu.memory_space<vmem>>, vector<16x1xf32>
    %57 = vector.broadcast %56 : vector<16x1xf32> to vector<16x64xf32>
    %58 = arith.mulf %55, %57 : vector<16x64xf32>
    %c0_34 = arith.constant 0 : index
    %c0_35 = arith.constant 0 : index
    %59 = vector.load %arg36[%c0_34, %c0_35] : memref<16x1xf32, #tpu.memory_space<vmem>>, vector<16x1xf32>
    %60 = vector.broadcast %59 : vector<16x1xf32> to vector<16x64xf32>
    %61 = arith.addf %58, %60 : vector<16x64xf32>
    %cst_36 = arith.constant 1.702000e+00 : f32
    %62 = vector.broadcast %cst_36 : f32 to vector<16x64xf32>
    %63 = arith.mulf %62, %61 : vector<16x64xf32>
    %64 = arith.negf %63 : vector<16x64xf32>
    %65 = math.exp %64 : vector<16x64xf32>
    %cst_37 = arith.constant 1.000000e+00 : f32
    %66 = vector.broadcast %cst_37 : f32 to vector<16x64xf32>
    %67 = arith.addf %66, %65 : vector<16x64xf32>
    %68 = arith.divf %66, %67 : vector<16x64xf32>
    %69 = arith.mulf %68, %61 : vector<16x64xf32>
    %c0_38 = arith.constant 0 : index
    %c0_39 = arith.constant 0 : index
    %70 = vector.load %arg38[%c0_38, %c0_39] : memref<16x16xf32, #tpu.memory_space<vmem>>, vector<16x16xf32>
    %c0_40 = arith.constant 0 : index
    %c0_41 = arith.constant 0 : index
    %71 = vector.load %arg37[%c0_40, %c0_41] : memref<16x1xf32, #tpu.memory_space<vmem>>, vector<16x1xf32>
    %cst_42 = arith.constant dense<0.000000e+00> : vector<16x64xf32>
    %72 = tpu.matmul %70, %69, %cst_42 {dimension_numbers = #tpu.dot_dimension_numbers<[1], [0], [0], [1], [0, 0, 1, 1], [], []>} : vector<16x16xf32>, vector<16x64xf32>, vector<16x64xf32> -> vector<16x64xf32>
    %73 = vector.broadcast %71 : vector<16x1xf32> to vector<16x64xf32>
    %74 = arith.addf %72, %73 : vector<16x64xf32>
    %75 = arith.addf %74, %39 : vector<16x64xf32>
    %c0_43 = arith.constant 0 : index
    %c0_44 = arith.constant 0 : index
    %76 = vector.load %arg33[%c0_43, %c0_44] : memref<64x32xf32, #tpu.memory_space<vmem>>, vector<64x32xf32>
    %cst_45 = arith.constant dense<0.000000e+00> : vector<16x32xf32>
    %77 = tpu.matmul %75, %76, %cst_45 {dimension_numbers = #tpu.dot_dimension_numbers<[1], [0], [0], [1], [0, 0, 1, 1], [], []>} : vector<16x64xf32>, vector<64x32xf32>, vector<16x32xf32> -> vector<16x32xf32>
    %c0_46 = arith.constant 0 : index
    %c0_47 = arith.constant 0 : index
    %78 = vector.load %arg34[%c0_46, %c0_47] : memref<64x32xf32, #tpu.memory_space<vmem>>, vector<64x32xf32>
    %cst_48 = arith.constant dense<0.000000e+00> : vector<16x32xf32>
    %79 = tpu.matmul %75, %78, %cst_48 {dimension_numbers = #tpu.dot_dimension_numbers<[1], [0], [0], [1], [0, 0, 1, 1], [], []>} : vector<16x64xf32>, vector<64x32xf32>, vector<16x32xf32> -> vector<16x32xf32>
    %80 = arith.subf %77, %79 : vector<16x32xf32>
    %c0_49 = arith.constant 0 : index
    %c0_50 = arith.constant 0 : index
    %81 = vector.load %arg35[%c0_49, %c0_50] : memref<16x16xf32, #tpu.memory_space<vmem>>, vector<16x16xf32>
    %cst_51 = arith.constant dense<0.000000e+00> : vector<16x32xf32>
    %82 = tpu.matmul %81, %80, %cst_51 {dimension_numbers = #tpu.dot_dimension_numbers<[1], [0], [0], [1], [0, 0, 1, 1], [], []>} : vector<16x16xf32>, vector<16x32xf32>, vector<16x32xf32> -> vector<16x32xf32>
    %83 = arith.negf %82 : vector<16x32xf32>
    %84 = math.exp %83 : vector<16x32xf32>
    %cst_52 = arith.constant 1.000000e+00 : f32
    %85 = vector.broadcast %cst_52 : f32 to vector<16x32xf32>
    %86 = arith.addf %85, %84 : vector<16x32xf32>
    %87 = arith.divf %85, %86 : vector<16x32xf32>
    %88 = arith.mulf %87, %80 : vector<16x32xf32>
    %89 = arith.addf %79, %88 : vector<16x32xf32>
    %cst_53 = arith.constant dense<0.000000e+00> : vector<16xf32>
    %90 = vector.multi_reduction <add>, %89, %cst_53 [1] : vector<16x32xf32> to vector<16xf32>
    %91 = vector.shape_cast %90 : vector<16xf32> to vector<16x1xf32>
    %cst_54 = arith.constant 3.200000e+01 : f32
    %92 = vector.broadcast %cst_54 : f32 to vector<16x1xf32>
    %93 = arith.divf %91, %92 : vector<16x1xf32>
    %94 = vector.broadcast %93 : vector<16x1xf32> to vector<16x32xf32>
    %95 = arith.subf %89, %94 : vector<16x32xf32>
    %96 = arith.mulf %95, %95 : vector<16x32xf32>
    %cst_55 = arith.constant dense<0.000000e+00> : vector<16xf32>
    %97 = vector.multi_reduction <add>, %96, %cst_55 [1] : vector<16x32xf32> to vector<16xf32>
    %98 = vector.shape_cast %97 : vector<16xf32> to vector<16x1xf32>
    %cst_56 = arith.constant 3.200000e+01 : f32
    %99 = vector.broadcast %cst_56 : f32 to vector<16x1xf32>
    %100 = arith.divf %98, %99 : vector<16x1xf32>
    %cst_57 = arith.constant 9.99999974E-6 : f32
    %101 = vector.broadcast %cst_57 : f32 to vector<16x1xf32>
    %102 = arith.addf %100, %101 : vector<16x1xf32>
    %103 = math.rsqrt %102 : vector<16x1xf32>
    %104 = vector.broadcast %103 : vector<16x1xf32> to vector<16x32xf32>
    %105 = arith.mulf %95, %104 : vector<16x32xf32>
    %c0_58 = arith.constant 0 : index
    %c0_59 = arith.constant 0 : index
    %106 = vector.load %arg4[%c0_58, %c0_59] : memref<16x1xf32, #tpu.memory_space<vmem>>, vector<16x1xf32>
    %107 = vector.broadcast %106 : vector<16x1xf32> to vector<16x32xf32>
    %108 = arith.mulf %105, %107 : vector<16x32xf32>
    %c0_60 = arith.constant 0 : index
    %c0_61 = arith.constant 0 : index
    %109 = vector.load %arg0[%c0_60, %c0_61] : memref<16x1xf32, #tpu.memory_space<vmem>>, vector<16x1xf32>
    %110 = vector.broadcast %109 : vector<16x1xf32> to vector<16x32xf32>
    %111 = arith.addf %108, %110 : vector<16x32xf32>
    %cst_62 = arith.constant 1.702000e+00 : f32
    %112 = vector.broadcast %cst_62 : f32 to vector<16x32xf32>
    %113 = arith.mulf %112, %111 : vector<16x32xf32>
    %114 = arith.negf %113 : vector<16x32xf32>
    %115 = math.exp %114 : vector<16x32xf32>
    %cst_63 = arith.constant 1.000000e+00 : f32
    %116 = vector.broadcast %cst_63 : f32 to vector<16x32xf32>
    %117 = arith.addf %116, %115 : vector<16x32xf32>
    %118 = arith.divf %116, %117 : vector<16x32xf32>
    %119 = arith.mulf %118, %111 : vector<16x32xf32>
    %c0_64 = arith.constant 0 : index
    %c0_65 = arith.constant 0 : index
    %120 = vector.load %arg3[%c0_64, %c0_65] : memref<112x16xf32, #tpu.memory_space<vmem>>, vector<112x16xf32>
    %c0_66 = arith.constant 0 : index
    %c0_67 = arith.constant 0 : index
    %121 = vector.load %arg1[%c0_66, %c0_67] : memref<16x1xf32, #tpu.memory_space<vmem>>, vector<16x1xf32>
    %cst_68 = arith.constant dense<0.000000e+00> : vector<112x32xf32>
    %122 = tpu.matmul %120, %119, %cst_68 {dimension_numbers = #tpu.dot_dimension_numbers<[1], [0], [0], [1], [0, 0, 1, 1], [], []>} : vector<112x16xf32>, vector<16x32xf32>, vector<112x32xf32> -> vector<112x32xf32>
    %123 = vector.extract_strided_slice %122 {offsets = [0, 0], sizes = [16, 32], strides = [1, 1]} : vector<112x32xf32> to vector<16x32xf32>
    %c0_69 = arith.constant 0 : index
    %c0_70 = arith.constant 0 : index
    %c0_71 = arith.constant 0 : index
    %124 = vector.load %arg2[%c0_69, %c0_70, %c0_71] : memref<7x32x32xf32, #tpu.memory_space<vmem>>, vector<1x32x32xf32>
    %125 = vector.shape_cast %124 : vector<1x32x32xf32> to vector<32x32xf32>
    %cst_72 = arith.constant dense<0.000000e+00> : vector<16x32xf32>
    %126 = tpu.matmul %123, %125, %cst_72 {dimension_numbers = #tpu.dot_dimension_numbers<[1], [0], [0], [1], [0, 0, 1, 1], [], []>} : vector<16x32xf32>, vector<32x32xf32>, vector<16x32xf32> -> vector<16x32xf32>
    %127 = vector.extract_strided_slice %122 {offsets = [16, 0], sizes = [16, 32], strides = [1, 1]} : vector<112x32xf32> to vector<16x32xf32>
    %c1_73 = arith.constant 1 : index
    %c0_74 = arith.constant 0 : index
    %c0_75 = arith.constant 0 : index
    %128 = vector.load %arg2[%c1_73, %c0_74, %c0_75] : memref<7x32x32xf32, #tpu.memory_space<vmem>>, vector<1x32x32xf32>
    %129 = vector.shape_cast %128 : vector<1x32x32xf32> to vector<32x32xf32>
    %cst_76 = arith.constant dense<0.000000e+00> : vector<16x32xf32>
    %130 = tpu.matmul %127, %129, %cst_76 {dimension_numbers = #tpu.dot_dimension_numbers<[1], [0], [0], [1], [0, 0, 1, 1], [], []>} : vector<16x32xf32>, vector<32x32xf32>, vector<16x32xf32> -> vector<16x32xf32>
    %131 = arith.addf %126, %130 : vector<16x32xf32>
    %132 = vector.extract_strided_slice %122 {offsets = [32, 0], sizes = [16, 32], strides = [1, 1]} : vector<112x32xf32> to vector<16x32xf32>
    %c2_77 = arith.constant 2 : index
    %c0_78 = arith.constant 0 : index
    %c0_79 = arith.constant 0 : index
    %133 = vector.load %arg2[%c2_77, %c0_78, %c0_79] : memref<7x32x32xf32, #tpu.memory_space<vmem>>, vector<1x32x32xf32>
    %134 = vector.shape_cast %133 : vector<1x32x32xf32> to vector<32x32xf32>
    %cst_80 = arith.constant dense<0.000000e+00> : vector<16x32xf32>
    %135 = tpu.matmul %132, %134, %cst_80 {dimension_numbers = #tpu.dot_dimension_numbers<[1], [0], [0], [1], [0, 0, 1, 1], [], []>} : vector<16x32xf32>, vector<32x32xf32>, vector<16x32xf32> -> vector<16x32xf32>
    %136 = arith.addf %131, %135 : vector<16x32xf32>
    %137 = vector.extract_strided_slice %122 {offsets = [48, 0], sizes = [16, 32], strides = [1, 1]} : vector<112x32xf32> to vector<16x32xf32>
    %c3_81 = arith.constant 3 : index
    %c0_82 = arith.constant 0 : index
    %c0_83 = arith.constant 0 : index
    %138 = vector.load %arg2[%c3_81, %c0_82, %c0_83] : memref<7x32x32xf32, #tpu.memory_space<vmem>>, vector<1x32x32xf32>
    %139 = vector.shape_cast %138 : vector<1x32x32xf32> to vector<32x32xf32>
    %cst_84 = arith.constant dense<0.000000e+00> : vector<16x32xf32>
    %140 = tpu.matmul %137, %139, %cst_84 {dimension_numbers = #tpu.dot_dimension_numbers<[1], [0], [0], [1], [0, 0, 1, 1], [], []>} : vector<16x32xf32>, vector<32x32xf32>, vector<16x32xf32> -> vector<16x32xf32>
    %141 = arith.addf %136, %140 : vector<16x32xf32>
    %142 = vector.extract_strided_slice %122 {offsets = [64, 0], sizes = [16, 32], strides = [1, 1]} : vector<112x32xf32> to vector<16x32xf32>
    %c4_85 = arith.constant 4 : index
    %c0_86 = arith.constant 0 : index
    %c0_87 = arith.constant 0 : index
    %143 = vector.load %arg2[%c4_85, %c0_86, %c0_87] : memref<7x32x32xf32, #tpu.memory_space<vmem>>, vector<1x32x32xf32>
    %144 = vector.shape_cast %143 : vector<1x32x32xf32> to vector<32x32xf32>
    %cst_88 = arith.constant dense<0.000000e+00> : vector<16x32xf32>
    %145 = tpu.matmul %142, %144, %cst_88 {dimension_numbers = #tpu.dot_dimension_numbers<[1], [0], [0], [1], [0, 0, 1, 1], [], []>} : vector<16x32xf32>, vector<32x32xf32>, vector<16x32xf32> -> vector<16x32xf32>
    %146 = arith.addf %141, %145 : vector<16x32xf32>
    %147 = vector.extract_strided_slice %122 {offsets = [80, 0], sizes = [16, 32], strides = [1, 1]} : vector<112x32xf32> to vector<16x32xf32>
    %c5_89 = arith.constant 5 : index
    %c0_90 = arith.constant 0 : index
    %c0_91 = arith.constant 0 : index
    %148 = vector.load %arg2[%c5_89, %c0_90, %c0_91] : memref<7x32x32xf32, #tpu.memory_space<vmem>>, vector<1x32x32xf32>
    %149 = vector.shape_cast %148 : vector<1x32x32xf32> to vector<32x32xf32>
    %cst_92 = arith.constant dense<0.000000e+00> : vector<16x32xf32>
    %150 = tpu.matmul %147, %149, %cst_92 {dimension_numbers = #tpu.dot_dimension_numbers<[1], [0], [0], [1], [0, 0, 1, 1], [], []>} : vector<16x32xf32>, vector<32x32xf32>, vector<16x32xf32> -> vector<16x32xf32>
    %151 = arith.addf %146, %150 : vector<16x32xf32>
    %152 = vector.extract_strided_slice %122 {offsets = [96, 0], sizes = [16, 32], strides = [1, 1]} : vector<112x32xf32> to vector<16x32xf32>
    %c6_93 = arith.constant 6 : index
    %c0_94 = arith.constant 0 : index
    %c0_95 = arith.constant 0 : index
    %153 = vector.load %arg2[%c6_93, %c0_94, %c0_95] : memref<7x32x32xf32, #tpu.memory_space<vmem>>, vector<1x32x32xf32>
    %154 = vector.shape_cast %153 : vector<1x32x32xf32> to vector<32x32xf32>
    %cst_96 = arith.constant dense<0.000000e+00> : vector<16x32xf32>
    %155 = tpu.matmul %152, %154, %cst_96 {dimension_numbers = #tpu.dot_dimension_numbers<[1], [0], [0], [1], [0, 0, 1, 1], [], []>} : vector<16x32xf32>, vector<32x32xf32>, vector<16x32xf32> -> vector<16x32xf32>
    %156 = arith.addf %151, %155 : vector<16x32xf32>
    %157 = vector.broadcast %121 : vector<16x1xf32> to vector<16x32xf32>
    %158 = arith.addf %156, %157 : vector<16x32xf32>
    %cst_97 = arith.constant dense<0.000000e+00> : vector<16xf32>
    %159 = vector.multi_reduction <add>, %158, %cst_97 [1] : vector<16x32xf32> to vector<16xf32>
    %160 = vector.shape_cast %159 : vector<16xf32> to vector<16x1xf32>
    %cst_98 = arith.constant 3.200000e+01 : f32
    %161 = vector.broadcast %cst_98 : f32 to vector<16x1xf32>
    %162 = arith.divf %160, %161 : vector<16x1xf32>
    %163 = vector.broadcast %162 : vector<16x1xf32> to vector<16x32xf32>
    %164 = arith.subf %158, %163 : vector<16x32xf32>
    %165 = arith.mulf %164, %164 : vector<16x32xf32>
    %cst_99 = arith.constant dense<0.000000e+00> : vector<16xf32>
    %166 = vector.multi_reduction <add>, %165, %cst_99 [1] : vector<16x32xf32> to vector<16xf32>
    %167 = vector.shape_cast %166 : vector<16xf32> to vector<16x1xf32>
    %cst_100 = arith.constant 3.200000e+01 : f32
    %168 = vector.broadcast %cst_100 : f32 to vector<16x1xf32>
    %169 = arith.divf %167, %168 : vector<16x1xf32>
    %cst_101 = arith.constant 9.99999974E-6 : f32
    %170 = vector.broadcast %cst_101 : f32 to vector<16x1xf32>
    %171 = arith.addf %169, %170 : vector<16x1xf32>
    %172 = math.rsqrt %171 : vector<16x1xf32>
    %173 = vector.broadcast %172 : vector<16x1xf32> to vector<16x32xf32>
    %174 = arith.mulf %164, %173 : vector<16x32xf32>
    %c0_102 = arith.constant 0 : index
    %c0_103 = arith.constant 0 : index
    %175 = vector.load %arg8[%c0_102, %c0_103] : memref<16x1xf32, #tpu.memory_space<vmem>>, vector<16x1xf32>
    %176 = vector.broadcast %175 : vector<16x1xf32> to vector<16x32xf32>
    %177 = arith.mulf %174, %176 : vector<16x32xf32>
    %c0_104 = arith.constant 0 : index
    %c0_105 = arith.constant 0 : index
    %178 = vector.load %arg5[%c0_104, %c0_105] : memref<16x1xf32, #tpu.memory_space<vmem>>, vector<16x1xf32>
    %179 = vector.broadcast %178 : vector<16x1xf32> to vector<16x32xf32>
    %180 = arith.addf %177, %179 : vector<16x32xf32>
    %cst_106 = arith.constant 1.702000e+00 : f32
    %181 = vector.broadcast %cst_106 : f32 to vector<16x32xf32>
    %182 = arith.mulf %181, %180 : vector<16x32xf32>
    %183 = arith.negf %182 : vector<16x32xf32>
    %184 = math.exp %183 : vector<16x32xf32>
    %cst_107 = arith.constant 1.000000e+00 : f32
    %185 = vector.broadcast %cst_107 : f32 to vector<16x32xf32>
    %186 = arith.addf %185, %184 : vector<16x32xf32>
    %187 = arith.divf %185, %186 : vector<16x32xf32>
    %188 = arith.mulf %187, %180 : vector<16x32xf32>
    %c0_108 = arith.constant 0 : index
    %c0_109 = arith.constant 0 : index
    %189 = vector.load %arg7[%c0_108, %c0_109] : memref<16x16xf32, #tpu.memory_space<vmem>>, vector<16x16xf32>
    %c0_110 = arith.constant 0 : index
    %c0_111 = arith.constant 0 : index
    %190 = vector.load %arg6[%c0_110, %c0_111] : memref<16x1xf32, #tpu.memory_space<vmem>>, vector<16x1xf32>
    %cst_112 = arith.constant dense<0.000000e+00> : vector<16x32xf32>
    %191 = tpu.matmul %189, %188, %cst_112 {dimension_numbers = #tpu.dot_dimension_numbers<[1], [0], [0], [1], [0, 0, 1, 1], [], []>} : vector<16x16xf32>, vector<16x32xf32>, vector<16x32xf32> -> vector<16x32xf32>
    %192 = vector.broadcast %190 : vector<16x1xf32> to vector<16x32xf32>
    %193 = arith.addf %191, %192 : vector<16x32xf32>
    %194 = arith.addf %193, %158 : vector<16x32xf32>
    %c0_113 = arith.constant 0 : index
    %c0_114 = arith.constant 0 : index
    %195 = vector.load %arg9[%c0_113, %c0_114] : memref<32x16xf32, #tpu.memory_space<vmem>>, vector<32x16xf32>
    %cst_115 = arith.constant dense<0.000000e+00> : vector<16x16xf32>
    %196 = tpu.matmul %194, %195, %cst_115 {dimension_numbers = #tpu.dot_dimension_numbers<[1], [0], [0], [1], [0, 0, 1, 1], [], []>} : vector<16x32xf32>, vector<32x16xf32>, vector<16x16xf32> -> vector<16x16xf32>
    %c0_116 = arith.constant 0 : index
    %c0_117 = arith.constant 0 : index
    %197 = vector.load %arg10[%c0_116, %c0_117] : memref<32x16xf32, #tpu.memory_space<vmem>>, vector<32x16xf32>
    %cst_118 = arith.constant dense<0.000000e+00> : vector<16x16xf32>
    %198 = tpu.matmul %194, %197, %cst_118 {dimension_numbers = #tpu.dot_dimension_numbers<[1], [0], [0], [1], [0, 0, 1, 1], [], []>} : vector<16x32xf32>, vector<32x16xf32>, vector<16x16xf32> -> vector<16x16xf32>
    %199 = arith.subf %196, %198 : vector<16x16xf32>
    %c0_119 = arith.constant 0 : index
    %c0_120 = arith.constant 0 : index
    %200 = vector.load %arg11[%c0_119, %c0_120] : memref<16x16xf32, #tpu.memory_space<vmem>>, vector<16x16xf32>
    %cst_121 = arith.constant dense<0.000000e+00> : vector<16x16xf32>
    %201 = tpu.matmul %200, %199, %cst_121 {dimension_numbers = #tpu.dot_dimension_numbers<[1], [0], [0], [1], [0, 0, 1, 1], [], []>} : vector<16x16xf32>, vector<16x16xf32>, vector<16x16xf32> -> vector<16x16xf32>
    %202 = arith.negf %201 : vector<16x16xf32>
    %203 = math.exp %202 : vector<16x16xf32>
    %cst_122 = arith.constant 1.000000e+00 : f32
    %204 = vector.broadcast %cst_122 : f32 to vector<16x16xf32>
    %205 = arith.addf %204, %203 : vector<16x16xf32>
    %206 = arith.divf %204, %205 : vector<16x16xf32>
    %207 = arith.mulf %206, %199 : vector<16x16xf32>
    %208 = arith.addf %198, %207 : vector<16x16xf32>
    %cst_123 = arith.constant dense<0.000000e+00> : vector<16xf32>
    %209 = vector.multi_reduction <add>, %208, %cst_123 [1] : vector<16x16xf32> to vector<16xf32>
    %210 = vector.shape_cast %209 : vector<16xf32> to vector<16x1xf32>
    %cst_124 = arith.constant 1.600000e+01 : f32
    %211 = vector.broadcast %cst_124 : f32 to vector<16x1xf32>
    %212 = arith.divf %210, %211 : vector<16x1xf32>
    %213 = vector.broadcast %212 : vector<16x1xf32> to vector<16x16xf32>
    %214 = arith.subf %208, %213 : vector<16x16xf32>
    %215 = arith.mulf %214, %214 : vector<16x16xf32>
    %cst_125 = arith.constant dense<0.000000e+00> : vector<16xf32>
    %216 = vector.multi_reduction <add>, %215, %cst_125 [1] : vector<16x16xf32> to vector<16xf32>
    %217 = vector.shape_cast %216 : vector<16xf32> to vector<16x1xf32>
    %cst_126 = arith.constant 1.600000e+01 : f32
    %218 = vector.broadcast %cst_126 : f32 to vector<16x1xf32>
    %219 = arith.divf %217, %218 : vector<16x1xf32>
    %cst_127 = arith.constant 9.99999974E-6 : f32
    %220 = vector.broadcast %cst_127 : f32 to vector<16x1xf32>
    %221 = arith.addf %219, %220 : vector<16x1xf32>
    %222 = math.rsqrt %221 : vector<16x1xf32>
    %223 = vector.broadcast %222 : vector<16x1xf32> to vector<16x16xf32>
    %224 = arith.mulf %214, %223 : vector<16x16xf32>
    %c0_128 = arith.constant 0 : index
    %c0_129 = arith.constant 0 : index
    %225 = vector.load %arg16[%c0_128, %c0_129] : memref<16x1xf32, #tpu.memory_space<vmem>>, vector<16x1xf32>
    %226 = vector.broadcast %225 : vector<16x1xf32> to vector<16x16xf32>
    %227 = arith.mulf %224, %226 : vector<16x16xf32>
    %c0_130 = arith.constant 0 : index
    %c0_131 = arith.constant 0 : index
    %228 = vector.load %arg12[%c0_130, %c0_131] : memref<16x1xf32, #tpu.memory_space<vmem>>, vector<16x1xf32>
    %229 = vector.broadcast %228 : vector<16x1xf32> to vector<16x16xf32>
    %230 = arith.addf %227, %229 : vector<16x16xf32>
    %cst_132 = arith.constant 1.702000e+00 : f32
    %231 = vector.broadcast %cst_132 : f32 to vector<16x16xf32>
    %232 = arith.mulf %231, %230 : vector<16x16xf32>
    %233 = arith.negf %232 : vector<16x16xf32>
    %234 = math.exp %233 : vector<16x16xf32>
    %cst_133 = arith.constant 1.000000e+00 : f32
    %235 = vector.broadcast %cst_133 : f32 to vector<16x16xf32>
    %236 = arith.addf %235, %234 : vector<16x16xf32>
    %237 = arith.divf %235, %236 : vector<16x16xf32>
    %238 = arith.mulf %237, %230 : vector<16x16xf32>
    %c0_134 = arith.constant 0 : index
    %c0_135 = arith.constant 0 : index
    %239 = vector.load %arg15[%c0_134, %c0_135] : memref<112x16xf32, #tpu.memory_space<vmem>>, vector<112x16xf32>
    %c0_136 = arith.constant 0 : index
    %c0_137 = arith.constant 0 : index
    %240 = vector.load %arg13[%c0_136, %c0_137] : memref<16x1xf32, #tpu.memory_space<vmem>>, vector<16x1xf32>
    %cst_138 = arith.constant dense<0.000000e+00> : vector<112x16xf32>
    %241 = tpu.matmul %239, %238, %cst_138 {dimension_numbers = #tpu.dot_dimension_numbers<[1], [0], [0], [1], [0, 0, 1, 1], [], []>} : vector<112x16xf32>, vector<16x16xf32>, vector<112x16xf32> -> vector<112x16xf32>
    %242 = vector.extract_strided_slice %241 {offsets = [0, 0], sizes = [16, 16], strides = [1, 1]} : vector<112x16xf32> to vector<16x16xf32>
    %c0_139 = arith.constant 0 : index
    %c0_140 = arith.constant 0 : index
    %c0_141 = arith.constant 0 : index
    %243 = vector.load %arg14[%c0_139, %c0_140, %c0_141] : memref<7x16x16xf32, #tpu.memory_space<vmem>>, vector<1x16x16xf32>
    %244 = vector.shape_cast %243 : vector<1x16x16xf32> to vector<16x16xf32>
    %cst_142 = arith.constant dense<0.000000e+00> : vector<16x16xf32>
    %245 = tpu.matmul %242, %244, %cst_142 {dimension_numbers = #tpu.dot_dimension_numbers<[1], [0], [0], [1], [0, 0, 1, 1], [], []>} : vector<16x16xf32>, vector<16x16xf32>, vector<16x16xf32> -> vector<16x16xf32>
    %246 = vector.extract_strided_slice %241 {offsets = [16, 0], sizes = [16, 16], strides = [1, 1]} : vector<112x16xf32> to vector<16x16xf32>
    %c1_143 = arith.constant 1 : index
    %c0_144 = arith.constant 0 : index
    %c0_145 = arith.constant 0 : index
    %247 = vector.load %arg14[%c1_143, %c0_144, %c0_145] : memref<7x16x16xf32, #tpu.memory_space<vmem>>, vector<1x16x16xf32>
    %248 = vector.shape_cast %247 : vector<1x16x16xf32> to vector<16x16xf32>
    %cst_146 = arith.constant dense<0.000000e+00> : vector<16x16xf32>
    %249 = tpu.matmul %246, %248, %cst_146 {dimension_numbers = #tpu.dot_dimension_numbers<[1], [0], [0], [1], [0, 0, 1, 1], [], []>} : vector<16x16xf32>, vector<16x16xf32>, vector<16x16xf32> -> vector<16x16xf32>
    %250 = arith.addf %245, %249 : vector<16x16xf32>
    %251 = vector.extract_strided_slice %241 {offsets = [32, 0], sizes = [16, 16], strides = [1, 1]} : vector<112x16xf32> to vector<16x16xf32>
    %c2_147 = arith.constant 2 : index
    %c0_148 = arith.constant 0 : index
    %c0_149 = arith.constant 0 : index
    %252 = vector.load %arg14[%c2_147, %c0_148, %c0_149] : memref<7x16x16xf32, #tpu.memory_space<vmem>>, vector<1x16x16xf32>
    %253 = vector.shape_cast %252 : vector<1x16x16xf32> to vector<16x16xf32>
    %cst_150 = arith.constant dense<0.000000e+00> : vector<16x16xf32>
    %254 = tpu.matmul %251, %253, %cst_150 {dimension_numbers = #tpu.dot_dimension_numbers<[1], [0], [0], [1], [0, 0, 1, 1], [], []>} : vector<16x16xf32>, vector<16x16xf32>, vector<16x16xf32> -> vector<16x16xf32>
    %255 = arith.addf %250, %254 : vector<16x16xf32>
    %256 = vector.extract_strided_slice %241 {offsets = [48, 0], sizes = [16, 16], strides = [1, 1]} : vector<112x16xf32> to vector<16x16xf32>
    %c3_151 = arith.constant 3 : index
    %c0_152 = arith.constant 0 : index
    %c0_153 = arith.constant 0 : index
    %257 = vector.load %arg14[%c3_151, %c0_152, %c0_153] : memref<7x16x16xf32, #tpu.memory_space<vmem>>, vector<1x16x16xf32>
    %258 = vector.shape_cast %257 : vector<1x16x16xf32> to vector<16x16xf32>
    %cst_154 = arith.constant dense<0.000000e+00> : vector<16x16xf32>
    %259 = tpu.matmul %256, %258, %cst_154 {dimension_numbers = #tpu.dot_dimension_numbers<[1], [0], [0], [1], [0, 0, 1, 1], [], []>} : vector<16x16xf32>, vector<16x16xf32>, vector<16x16xf32> -> vector<16x16xf32>
    %260 = arith.addf %255, %259 : vector<16x16xf32>
    %261 = vector.extract_strided_slice %241 {offsets = [64, 0], sizes = [16, 16], strides = [1, 1]} : vector<112x16xf32> to vector<16x16xf32>
    %c4_155 = arith.constant 4 : index
    %c0_156 = arith.constant 0 : index
    %c0_157 = arith.constant 0 : index
    %262 = vector.load %arg14[%c4_155, %c0_156, %c0_157] : memref<7x16x16xf32, #tpu.memory_space<vmem>>, vector<1x16x16xf32>
    %263 = vector.shape_cast %262 : vector<1x16x16xf32> to vector<16x16xf32>
    %cst_158 = arith.constant dense<0.000000e+00> : vector<16x16xf32>
    %264 = tpu.matmul %261, %263, %cst_158 {dimension_numbers = #tpu.dot_dimension_numbers<[1], [0], [0], [1], [0, 0, 1, 1], [], []>} : vector<16x16xf32>, vector<16x16xf32>, vector<16x16xf32> -> vector<16x16xf32>
    %265 = arith.addf %260, %264 : vector<16x16xf32>
    %266 = vector.extract_strided_slice %241 {offsets = [80, 0], sizes = [16, 16], strides = [1, 1]} : vector<112x16xf32> to vector<16x16xf32>
    %c5_159 = arith.constant 5 : index
    %c0_160 = arith.constant 0 : index
    %c0_161 = arith.constant 0 : index
    %267 = vector.load %arg14[%c5_159, %c0_160, %c0_161] : memref<7x16x16xf32, #tpu.memory_space<vmem>>, vector<1x16x16xf32>
    %268 = vector.shape_cast %267 : vector<1x16x16xf32> to vector<16x16xf32>
    %cst_162 = arith.constant dense<0.000000e+00> : vector<16x16xf32>
    %269 = tpu.matmul %266, %268, %cst_162 {dimension_numbers = #tpu.dot_dimension_numbers<[1], [0], [0], [1], [0, 0, 1, 1], [], []>} : vector<16x16xf32>, vector<16x16xf32>, vector<16x16xf32> -> vector<16x16xf32>
    %270 = arith.addf %265, %269 : vector<16x16xf32>
    %271 = vector.extract_strided_slice %241 {offsets = [96, 0], sizes = [16, 16], strides = [1, 1]} : vector<112x16xf32> to vector<16x16xf32>
    %c6_163 = arith.constant 6 : index
    %c0_164 = arith.constant 0 : index
    %c0_165 = arith.constant 0 : index
    %272 = vector.load %arg14[%c6_163, %c0_164, %c0_165] : memref<7x16x16xf32, #tpu.memory_space<vmem>>, vector<1x16x16xf32>
    %273 = vector.shape_cast %272 : vector<1x16x16xf32> to vector<16x16xf32>
    %cst_166 = arith.constant dense<0.000000e+00> : vector<16x16xf32>
    %274 = tpu.matmul %271, %273, %cst_166 {dimension_numbers = #tpu.dot_dimension_numbers<[1], [0], [0], [1], [0, 0, 1, 1], [], []>} : vector<16x16xf32>, vector<16x16xf32>, vector<16x16xf32> -> vector<16x16xf32>
    %275 = arith.addf %270, %274 : vector<16x16xf32>
    %276 = vector.broadcast %240 : vector<16x1xf32> to vector<16x16xf32>
    %277 = arith.addf %275, %276 : vector<16x16xf32>
    %cst_167 = arith.constant dense<0.000000e+00> : vector<16xf32>
    %278 = vector.multi_reduction <add>, %277, %cst_167 [1] : vector<16x16xf32> to vector<16xf32>
    %279 = vector.shape_cast %278 : vector<16xf32> to vector<16x1xf32>
    %cst_168 = arith.constant 1.600000e+01 : f32
    %280 = vector.broadcast %cst_168 : f32 to vector<16x1xf32>
    %281 = arith.divf %279, %280 : vector<16x1xf32>
    %282 = vector.broadcast %281 : vector<16x1xf32> to vector<16x16xf32>
    %283 = arith.subf %277, %282 : vector<16x16xf32>
    %284 = arith.mulf %283, %283 : vector<16x16xf32>
    %cst_169 = arith.constant dense<0.000000e+00> : vector<16xf32>
    %285 = vector.multi_reduction <add>, %284, %cst_169 [1] : vector<16x16xf32> to vector<16xf32>
    %286 = vector.shape_cast %285 : vector<16xf32> to vector<16x1xf32>
    %cst_170 = arith.constant 1.600000e+01 : f32
    %287 = vector.broadcast %cst_170 : f32 to vector<16x1xf32>
    %288 = arith.divf %286, %287 : vector<16x1xf32>
    %cst_171 = arith.constant 9.99999974E-6 : f32
    %289 = vector.broadcast %cst_171 : f32 to vector<16x1xf32>
    %290 = arith.addf %288, %289 : vector<16x1xf32>
    %291 = math.rsqrt %290 : vector<16x1xf32>
    %292 = vector.broadcast %291 : vector<16x1xf32> to vector<16x16xf32>
    %293 = arith.mulf %283, %292 : vector<16x16xf32>
    %c0_172 = arith.constant 0 : index
    %c0_173 = arith.constant 0 : index
    %294 = vector.load %arg20[%c0_172, %c0_173] : memref<16x1xf32, #tpu.memory_space<vmem>>, vector<16x1xf32>
    %295 = vector.broadcast %294 : vector<16x1xf32> to vector<16x16xf32>
    %296 = arith.mulf %293, %295 : vector<16x16xf32>
    %c0_174 = arith.constant 0 : index
    %c0_175 = arith.constant 0 : index
    %297 = vector.load %arg17[%c0_174, %c0_175] : memref<16x1xf32, #tpu.memory_space<vmem>>, vector<16x1xf32>
    %298 = vector.broadcast %297 : vector<16x1xf32> to vector<16x16xf32>
    %299 = arith.addf %296, %298 : vector<16x16xf32>
    %cst_176 = arith.constant 1.702000e+00 : f32
    %300 = vector.broadcast %cst_176 : f32 to vector<16x16xf32>
    %301 = arith.mulf %300, %299 : vector<16x16xf32>
    %302 = arith.negf %301 : vector<16x16xf32>
    %303 = math.exp %302 : vector<16x16xf32>
    %cst_177 = arith.constant 1.000000e+00 : f32
    %304 = vector.broadcast %cst_177 : f32 to vector<16x16xf32>
    %305 = arith.addf %304, %303 : vector<16x16xf32>
    %306 = arith.divf %304, %305 : vector<16x16xf32>
    %307 = arith.mulf %306, %299 : vector<16x16xf32>
    %c0_178 = arith.constant 0 : index
    %c0_179 = arith.constant 0 : index
    %308 = vector.load %arg19[%c0_178, %c0_179] : memref<16x16xf32, #tpu.memory_space<vmem>>, vector<16x16xf32>
    %c0_180 = arith.constant 0 : index
    %c0_181 = arith.constant 0 : index
    %309 = vector.load %arg18[%c0_180, %c0_181] : memref<16x1xf32, #tpu.memory_space<vmem>>, vector<16x1xf32>
    %cst_182 = arith.constant dense<0.000000e+00> : vector<16x16xf32>
    %310 = tpu.matmul %308, %307, %cst_182 {dimension_numbers = #tpu.dot_dimension_numbers<[1], [0], [0], [1], [0, 0, 1, 1], [], []>} : vector<16x16xf32>, vector<16x16xf32>, vector<16x16xf32> -> vector<16x16xf32>
    %311 = vector.broadcast %309 : vector<16x1xf32> to vector<16x16xf32>
    %312 = arith.addf %310, %311 : vector<16x16xf32>
    %313 = arith.addf %312, %277 : vector<16x16xf32>
    %c0_183 = arith.constant 0 : index
    %c0_184 = arith.constant 0 : index
    %314 = vector.load %arg21[%c0_183, %c0_184] : memref<16x8xf32, #tpu.memory_space<vmem>>, vector<16x8xf32>
    %cst_185 = arith.constant dense<0.000000e+00> : vector<16x8xf32>
    %315 = tpu.matmul %313, %314, %cst_185 {dimension_numbers = #tpu.dot_dimension_numbers<[1], [0], [0], [1], [0, 0, 1, 1], [], []>} : vector<16x16xf32>, vector<16x8xf32>, vector<16x8xf32> -> vector<16x8xf32>
    %c0_186 = arith.constant 0 : index
    %c0_187 = arith.constant 0 : index
    %316 = vector.load %arg22[%c0_186, %c0_187] : memref<16x8xf32, #tpu.memory_space<vmem>>, vector<16x8xf32>
    %cst_188 = arith.constant dense<0.000000e+00> : vector<16x8xf32>
    %317 = tpu.matmul %313, %316, %cst_188 {dimension_numbers = #tpu.dot_dimension_numbers<[1], [0], [0], [1], [0, 0, 1, 1], [], []>} : vector<16x16xf32>, vector<16x8xf32>, vector<16x8xf32> -> vector<16x8xf32>
    %318 = arith.subf %315, %317 : vector<16x8xf32>
    %c0_189 = arith.constant 0 : index
    %c0_190 = arith.constant 0 : index
    %319 = vector.load %arg23[%c0_189, %c0_190] : memref<16x16xf32, #tpu.memory_space<vmem>>, vector<16x16xf32>
    %cst_191 = arith.constant dense<0.000000e+00> : vector<16x8xf32>
    %320 = tpu.matmul %319, %318, %cst_191 {dimension_numbers = #tpu.dot_dimension_numbers<[1], [0], [0], [1], [0, 0, 1, 1], [], []>} : vector<16x16xf32>, vector<16x8xf32>, vector<16x8xf32> -> vector<16x8xf32>
    %321 = arith.negf %320 : vector<16x8xf32>
    %322 = math.exp %321 : vector<16x8xf32>
    %cst_192 = arith.constant 1.000000e+00 : f32
    %323 = vector.broadcast %cst_192 : f32 to vector<16x8xf32>
    %324 = arith.addf %323, %322 : vector<16x8xf32>
    %325 = arith.divf %323, %324 : vector<16x8xf32>
    %326 = arith.mulf %325, %318 : vector<16x8xf32>
    %327 = arith.addf %317, %326 : vector<16x8xf32>
    %c0_193 = arith.constant 0 : index
    %c0_194 = arith.constant 0 : index
    %328 = vector.load %arg29[%c0_193, %c0_194] : memref<1x16xf32, #tpu.memory_space<vmem>>, vector<1x16xf32>
    %c0_195 = arith.constant 0 : index
    %c0_196 = arith.constant 0 : index
    %329 = vector.load %arg26[%c0_195, %c0_196] : memref<1x1xf32, #tpu.memory_space<vmem>>, vector<1x1xf32>
    %cst_197 = arith.constant 0.000000e+00 : f32
    %330 = vector.broadcast %cst_197 : f32 to vector<16x2xf32>
    %c0_198 = arith.constant 0 : index
    %c0_199 = arith.constant 0 : index
    %331 = vector.load %arg24[%c0_198, %c0_199] : memref<1x8xf32, #tpu.memory_space<vmem>>, vector<1x8xf32>
    %332 = vector.broadcast %331 : vector<1x8xf32> to vector<16x8xf32>
    %333 = arith.addf %327, %332 : vector<16x8xf32>
    %cst_200 = arith.constant dense<0xFF800000> : vector<16xf32>
    %334 = vector.multi_reduction <maximumf>, %333, %cst_200 [1] : vector<16x8xf32> to vector<16xf32>
    %335 = vector.shape_cast %334 : vector<16xf32> to vector<16x1xf32>
    %c0_201 = arith.constant 0 : index
    %c0_202 = arith.constant 0 : index
    %336 = vector.load %arg27[%c0_201, %c0_202] : memref<1x2xf32, #tpu.memory_space<vmem>>, vector<1x2xf32>
    %337 = vector.broadcast %335 : vector<16x1xf32> to vector<16x2xf32>
    %338 = vector.broadcast %336 : vector<1x2xf32> to vector<16x2xf32>
    %339 = arith.mulf %337, %338 : vector<16x2xf32>
    %340 = arith.addf %330, %339 : vector<16x2xf32>
    %c0_203 = arith.constant 0 : index
    %c0_204 = arith.constant 0 : index
    %341 = vector.load %arg25[%c0_203, %c0_204] : memref<1x8xf32, #tpu.memory_space<vmem>>, vector<1x8xf32>
    %342 = vector.broadcast %341 : vector<1x8xf32> to vector<16x8xf32>
    %343 = arith.addf %327, %342 : vector<16x8xf32>
    %cst_205 = arith.constant dense<0xFF800000> : vector<16xf32>
    %344 = vector.multi_reduction <maximumf>, %343, %cst_205 [1] : vector<16x8xf32> to vector<16xf32>
    %345 = vector.shape_cast %344 : vector<16xf32> to vector<16x1xf32>
    %c0_206 = arith.constant 0 : index
    %c0_207 = arith.constant 0 : index
    %346 = vector.load %arg28[%c0_206, %c0_207] : memref<1x2xf32, #tpu.memory_space<vmem>>, vector<1x2xf32>
    %347 = vector.broadcast %345 : vector<16x1xf32> to vector<16x2xf32>
    %348 = vector.broadcast %346 : vector<1x2xf32> to vector<16x2xf32>
    %349 = arith.mulf %347, %348 : vector<16x2xf32>
    %350 = arith.addf %340, %349 : vector<16x2xf32>
    %cst_208 = arith.constant dense<0.000000e+00> : vector<1x2xf32>
    %351 = tpu.matmul %328, %350, %cst_208 {dimension_numbers = #tpu.dot_dimension_numbers<[1], [0], [0], [1], [0, 0, 1, 1], [], []>} : vector<1x16xf32>, vector<16x2xf32>, vector<1x2xf32> -> vector<1x2xf32>
    %352 = vector.broadcast %329 : vector<1x1xf32> to vector<1x2xf32>
    %353 = arith.addf %351, %352 : vector<1x2xf32>
    %cst_209 = arith.constant 0.000000e+00 : f32
    %354 = vector.broadcast %cst_209 : f32 to vector<1x2xf32>
    %355 = arith.maximumf %353, %354 : vector<1x2xf32>
    %c0_210 = arith.constant 0 : index
    %c0_211 = arith.constant 0 : index
    %356 = vector.load %arg41[%c0_210, %c0_211] : memref<1x2xf32, #tpu.memory_space<vmem>>, vector<1x2xf32>
    tpu.vector_store %arg41[%c0_210, %c0_211], %355 {strides = array<i32>} : memref<1x2xf32, #tpu.memory_space<vmem>>, vector<1x2xf32>,
    return
  }
}

</mosaic_0001>

<llo_original>
// kernel: forward.1
$region0: #{forward.1}
  #allocation0 [shape = 'u32[]', space=smem, size = 0x4, offset = 0x4, fixed_abs, tag = 'smem constant byte address 0x4 - core index']
  #allocation1 [shape = 'u32[144,128]{1,0:T(1,128)}', space=vmem, size = 0x12000, scoped, tag = 'internal scratch']
  #allocation2 [shape = 'f32[1,1]{1,0:T(1,128)S(1)}', space=vmem, size = 0x200, scoped, tag = 'scoped memory for forward.1']
  %s0 = inlined_call_operand.smem [shape: u32[42], index: -1, kind: input, shape index: {}]
  %s1 = sld [smem:[%s0]]
  %s2 = scalar_lea.smem %s0, 1
  %s3 = sld [smem:[%s2]]
  %s4 = scalar_lea.smem %s0, 2
  %s5 = sld [smem:[%s4]]
  %s6 = scalar_lea.smem %s0, 3
  %s7 = sld [smem:[%s6]]
  %s8 = scalar_lea.smem %s0, 4
  %s9 = sld [smem:[%s8]]
  %s10 = scalar_lea.smem %s0, 5
  %s11 = sld [smem:[%s10]]
  %s12 = scalar_lea.smem %s0, 6
  %s13 = sld [smem:[%s12]]
  %s14 = scalar_lea.smem %s0, 7
  %s15 = sld [smem:[%s14]]
  %s16 = scalar_lea.smem %s0, 8
  %s17 = sld [smem:[%s16]]
  %s18 = scalar_lea.smem %s0, 9
  %s19 = sld [smem:[%s18]]
  %s20 = scalar_lea.smem %s0, 10
  %s21 = sld [smem:[%s20]]
  %s22 = scalar_lea.smem %s0, 11
  %s23 = sld [smem:[%s22]]
  %s24 = scalar_lea.smem %s0, 12
  %s25 = sld [smem:[%s24]]
  %s26 = scalar_lea.smem %s0, 13
  %s27 = sld [smem:[%s26]]
  %s28 = scalar_lea.smem %s0, 14
  %s29 = sld [smem:[%s28]]
  %s30 = scalar_lea.smem %s0, 15
  %s31 = sld [smem:[%s30]]
  %s32 = scalar_lea.smem %s0, 16
  %s33 = sld [smem:[%s32]]
  %s34 = scalar_lea.smem %s0, 17
  %s35 = sld [smem:[%s34]]
  %s36 = scalar_lea.smem %s0, 18
  %s37 = sld [smem:[%s36]]
  %s38 = scalar_lea.smem %s0, 19
  %s39 = sld [smem:[%s38]]
  %s40 = scalar_lea.smem %s0, 20
  %s41 = sld [smem:[%s40]]
  %s42 = scalar_lea.smem %s0, 21
  %s43 = sld [smem:[%s42]]
  %s44 = scalar_lea.smem %s0, 22
  %s45 = sld [smem:[%s44]]
  %s46 = scalar_lea.smem %s0, 23
  %s47 = sld [smem:[%s46]]
  %s48 = scalar_lea.smem %s0, 24
  %s49 = sld [smem:[%s48]]
  %s50 = scalar_lea.smem %s0, 25
  %s51 = sld [smem:[%s50]]
  %s52 = scalar_lea.smem %s0, 26
  %s53 = sld [smem:[%s52]]
  %s54 = scalar_lea.smem %s0, 27
  %s55 = sld [smem:[%s54]]
  %s56 = scalar_lea.smem %s0, 28
  %s57 = sld [smem:[%s56]]
  %s58 = scalar_lea.smem %s0, 29
  %s59 = sld [smem:[%s58]]
  %s60 = scalar_lea.smem %s0, 30
  %s61 = sld [smem:[%s60]]
  %s62 = scalar_lea.smem %s0, 31
  %s63 = sld [smem:[%s62]]
  %s64 = scalar_lea.smem %s0, 32
  %s65 = sld [smem:[%s64]]
  %s66 = scalar_lea.smem %s0, 33
  %s67 = sld [smem:[%s66]]
  %s68 = scalar_lea.smem %s0, 34
  %s69 = sld [smem:[%s68]]
  %s70 = scalar_lea.smem %s0, 35
  %s71 = sld [smem:[%s70]]
  %s72 = scalar_lea.smem %s0, 36
  %s73 = sld [smem:[%s72]]
  %s74 = scalar_lea.smem %s0, 37
  %s75 = sld [smem:[%s74]]
  %s76 = scalar_lea.smem %s0, 38
  %s77 = sld [smem:[%s76]]
  %s78 = scalar_lea.smem %s0, 39
  %s79 = sld [smem:[%s78]]
  %s80 = scalar_lea.smem %s0, 40
  %s81 = sld [smem:[%s80]]
  %s82 = scalar_lea.smem %s0, 41
  %s83 = sld [smem:[%s82]]
  %s84 = sld [smem:[#allocation0]]
  $region230: #{forward.1} parent=0
    _
  %s86 = ssub.s32 1, %s84
  %s87 = scalar_select 0, %s86, %s84
  %v88 = vstv %s53
  %89 = vst [vmem:[#allocation2] sm:$0x1] %v88
  $region1: #{forward.1} parent=0
    #allocation3 [shape = 'u8[114688]{0}', space=vmem, size = 0x1c000, scoped, tag = 'input window, operand 2, single buffered']
    #allocation4 [shape = 's32[1]{0}', space=sflag, size = 0x4, scoped, tag = 'scoped memory for forward.1']
    #allocation5 [shape = 's32[1]{0}', space=sflag, size = 0x4, scoped, tag = 'scoped memory for forward.1']
    #allocation6 [shape = 'u8[57344]{0}', space=vmem, size = 0xe000, scoped, tag = 'input window, operand 3, single buffered']
    #allocation7 [shape = 's32[1]{0}', space=sflag, size = 0x4, scoped, tag = 'scoped memory for forward.1']
    #allocation8 [shape = 'u8[8192]{0}', space=vmem, size = 0x2000, scoped, tag = 'input window, operand 7, single buffered']
    #allocation9 [shape = 'u8[16384]{0}', space=vmem, size = 0x4000, scoped, tag = 'input window, operand 9, single buffered']
    #allocation10 [shape = 's32[1]{0}', space=sflag, size = 0x4, scoped, tag = 'scoped memory for forward.1']
    #allocation11 [shape = 'u8[8192]{0}', space=vmem, size = 0x2000, scoped, tag = 'input window, operand 11, single buffered']
    #allocation12 [shape = 'u8[57344]{0}', space=vmem, size = 0xe000, scoped, tag = 'input window, operand 14, single buffered']
    #allocation13 [shape = 's32[1]{0}', space=sflag, size = 0x4, scoped, tag = 'scoped memory for forward.1']
    #allocation14 [shape = 'u8[57344]{0}', space=vmem, size = 0xe000, scoped, tag = 'input window, operand 15, single buffered']
    #allocation15 [shape = 'u8[8192]{0}', space=vmem, size = 0x2000, scoped, tag = 'input window, operand 19, single buffered']
    #allocation16 [shape = 's32[1]{0}', space=sflag, size = 0x4, scoped, tag = 'scoped memory for forward.1']
    #allocation17 [shape = 'u8[8192]{0}', space=vmem, size = 0x2000, scoped, tag = 'input window, operand 21, single buffered']
    #allocation18 [shape = 'u8[8192]{0}', space=vmem, size = 0x2000, scoped, tag = 'input window, operand 22, single buffered']
    #allocation19 [shape = 's32[1]{0}', space=sflag, size = 0x4, scoped, tag = 'scoped memory for forward.1']
    #allocation20 [shape = 'u8[8192]{0}', space=vmem, size = 0x2000, scoped, tag = 'input window, operand 23, single buffered']
    #allocation21 [shape = 'u8[32768]{0}', space=vmem, size = 0x8000, scoped, tag = 'input window, operand 33, single buffered']
    #allocation22 [shape = 's32[1]{0}', space=sflag, size = 0x4, scoped, tag = 'scoped memory for forward.1']
    #allocation23 [shape = 'u8[8192]{0}', space=vmem, size = 0x2000, scoped, tag = 'input window, operand 35, single buffered']
    #allocation24 [shape = 'u8[8192]{0}', space=vmem, size = 0x2000, scoped, tag = 'input window, operand 38, single buffered']
    #allocation25 [shape = 's32[1]{0}', space=sflag, size = 0x4, scoped, tag = 'scoped memory for forward.1']
    #allocation26 [shape = 'u8[512]{0}', space=vmem, size = 0x400, scoped, tag = 'output window, operand 0, single buffered']
    %90 = vsyncpa [#allocation4], 0
    %91 = vsyncpa [#allocation7], 0
    %92 = vsyncpa [#allocation10], 0
    %93 = vsyncpa [#allocation13], 0
    %94 = vsyncpa [#allocation16], 0
    %95 = vsyncpa [#allocation19], 0
    %96 = vsyncpa [#allocation22], 0
    %97 = vsyncpa [#allocation25], 0
    %98 = vsyncpa [#allocation5], 0
    // Predicated region
    $region2: #{forward.1} parent=1 // pred_check
      _
    $region3: #{forward.1} parent=1 // pred_check_branch
      %100 = sbr.rel (0) target = $region5
    $region4: #{forward.1} parent=1 // pred_region
      _
    $region5: #{forward.1} parent=1 // pred_fallthru
      _
    // Predicated region
    $region6: #{forward.1} parent=1 // pred_check
      _
    $region7: #{forward.1} parent=1 // pred_check_branch
      %102 = sbr.rel (0) target = $region9
    $region8: #{forward.1} parent=1 // pred_region
      _
    $region9: #{forward.1} parent=1 // pred_fallthru
      _
    // Predicated region
    $region10: #{forward.1} parent=1 // pred_check
      _
    $region11: #{forward.1} parent=1 // pred_check_branch
      %104 = sbr.rel (0) target = $region13
    $region12: #{forward.1} parent=1 // pred_region
      %s106 = ssub.s32 3584, 3584
      %107 = vsyncadd [#allocation4], %s106
      %s108 = sshll.u32 [#allocation3], 4
      %s109 = int_to_ptr.vmem [resolvable:$true] %s108
      %114 = dma.hbm_to_vmem [thread:$0]  %s5, 3584, %s109, [#allocation4], 128, 128, 8
    $region13: #{forward.1} parent=1 // pred_fallthru
      _
    // Predicated region
    $region14: #{forward.1} parent=1 // pred_check
      _
    $region15: #{forward.1} parent=1 // pred_check_branch
      %116 = sbr.rel (0) target = $region17
    $region16: #{forward.1} parent=1 // pred_region
      %s118 = ssub.s32 1792, 1792
      %119 = vsyncadd [#allocation7], %s118
      %s120 = sshll.u32 [#allocation6], 4
      %s121 = int_to_ptr.vmem [resolvable:$true] %s120
      %126 = dma.hbm_to_vmem [thread:$0]  %s7, 1792, %s121, [#allocation7], 128, 128, 8
    $region17: #{forward.1} parent=1 // pred_fallthru
      _
    // Predicated region
    $region18: #{forward.1} parent=1 // pred_check
      _
    $region19: #{forward.1} parent=1 // pred_check_branch
      %128 = sbr.rel (0) target = $region21
    $region20: #{forward.1} parent=1 // pred_region
      _
    $region21: #{forward.1} parent=1 // pred_fallthru
      _
    // Predicated region
    $region22: #{forward.1} parent=1 // pred_check
      _
    $region23: #{forward.1} parent=1 // pred_check_branch
      %130 = sbr.rel (0) target = $region25
    $region24: #{forward.1} parent=1 // pred_region
      _
    $region25: #{forward.1} parent=1 // pred_fallthru
      _
    // Predicated region
    $region26: #{forward.1} parent=1 // pred_check
      _
    $region27: #{forward.1} parent=1 // pred_check_branch
      %132 = sbr.rel (0) target = $region29
    $region28: #{forward.1} parent=1 // pred_region
      _
    $region29: #{forward.1} parent=1 // pred_fallthru
      _
    // Predicated region
    $region30: #{forward.1} parent=1 // pred_check
      _
    $region31: #{forward.1} parent=1 // pred_check_branch
      %134 = sbr.rel (0) target = $region33
    $region32: #{forward.1} parent=1 // pred_region
      %s136 = ssub.s32 256, 256
      %137 = vsyncadd [#allocation7], %s136
      %s138 = sshll.u32 [#allocation8], 4
      %s139 = int_to_ptr.vmem [resolvable:$true] %s138
      %144 = dma.hbm_to_vmem [thread:$0]  %s15, 256, %s139, [#allocation7], 128, 128, 8
    $region33: #{forward.1} parent=1 // pred_fallthru
      _
    // Predicated region
    $region34: #{forward.1} parent=1 // pred_check
      _
    $region35: #{forward.1} parent=1 // pred_check_branch
      %146 = sbr.rel (0) target = $region37
    $region36: #{forward.1} parent=1 // pred_region
      _
    $region37: #{forward.1} parent=1 // pred_fallthru
      _
    // Predicated region
    $region38: #{forward.1} parent=1 // pred_check
      _
    $region39: #{forward.1} parent=1 // pred_check_branch
      %148 = sbr.rel (0) target = $region41
    $region40: #{forward.1} parent=1 // pred_region
      %s150 = ssub.s32 512, 512
      %151 = vsyncadd [#allocation10], %s150
      %s152 = sshll.u32 [#allocation9], 4
      %s153 = int_to_ptr.vmem [resolvable:$true] %s152
      %158 = dma.hbm_to_vmem [thread:$0]  %s19, 512, %s153, [#allocation10], 128, 128, 8
    $region41: #{forward.1} parent=1 // pred_fallthru
      _
    // Predicated region
    $region42: #{forward.1} parent=1 // pred_check
      _
    $region43: #{forward.1} parent=1 // pred_check_branch
      %160 = sbr.rel (0) target = $region45
    $region44: #{forward.1} parent=1 // pred_region
      _
    $region45: #{forward.1} parent=1 // pred_fallthru
      _
    // Predicated region
    $region46: #{forward.1} parent=1 // pred_check
      _
    $region47: #{forward.1} parent=1 // pred_check_branch
      %162 = sbr.rel (0) target = $region49
    $region48: #{forward.1} parent=1 // pred_region
      %s164 = ssub.s32 256, 256
      %165 = vsyncadd [#allocation10], %s164
      %s166 = sshll.u32 [#allocation11], 4
      %s167 = int_to_ptr.vmem [resolvable:$true] %s166
      %172 = dma.hbm_to_vmem [thread:$0]  %s23, 256, %s167, [#allocation10], 128, 128, 8
    $region49: #{forward.1} parent=1 // pred_fallthru
      _
    // Predicated region
    $region50: #{forward.1} parent=1 // pred_check
      _
    $region51: #{forward.1} parent=1 // pred_check_branch
      %174 = sbr.rel (0) target = $region53
    $region52: #{forward.1} parent=1 // pred_region
      _
    $region53: #{forward.1} parent=1 // pred_fallthru
      _
    // Predicated region
    $region54: #{forward.1} parent=1 // pred_check
      _
    $region55: #{forward.1} parent=1 // pred_check_branch
      %176 = sbr.rel (0) target = $region57
    $region56: #{forward.1} parent=1 // pred_region
      _
    $region57: #{forward.1} parent=1 // pred_fallthru
      _
    // Predicated region
    $region58: #{forward.1} parent=1 // pred_check
      _
    $region59: #{forward.1} parent=1 // pred_check_branch
      %178 = sbr.rel (0) target = $region61
    $region60: #{forward.1} parent=1 // pred_region
      %s180 = ssub.s32 1792, 1792
      %181 = vsyncadd [#allocation13], %s180
      %s182 = sshll.u32 [#allocation12], 4
      %s183 = int_to_ptr.vmem [resolvable:$true] %s182
      %188 = dma.hbm_to_vmem [thread:$0]  %s29, 1792, %s183, [#allocation13], 128, 128, 8
    $region61: #{forward.1} parent=1 // pred_fallthru
      _
    // Predicated region
    $region62: #{forward.1} parent=1 // pred_check
      _
    $region63: #{forward.1} parent=1 // pred_check_branch
      %190 = sbr.rel (0) target = $region65
    $region64: #{forward.1} parent=1 // pred_region
      %s192 = ssub.s32 1792, 1792
      %193 = vsyncadd [#allocation13], %s192
      %s194 = sshll.u32 [#allocation14], 4
      %s195 = int_to_ptr.vmem [resolvable:$true] %s194
      %200 = dma.hbm_to_vmem [thread:$0]  %s31, 1792, %s195, [#allocation13], 128, 128, 8
    $region65: #{forward.1} parent=1 // pred_fallthru
      _
    // Predicated region
    $region66: #{forward.1} parent=1 // pred_check
      _
    $region67: #{forward.1} parent=1 // pred_check_branch
      %202 = sbr.rel (0) target = $region69
    $region68: #{forward.1} parent=1 // pred_region
      _
    $region69: #{forward.1} parent=1 // pred_fallthru
      _
    // Predicated region
    $region70: #{forward.1} parent=1 // pred_check
      _
    $region71: #{forward.1} parent=1 // pred_check_branch
      %204 = sbr.rel (0) target = $region73
    $region72: #{forward.1} parent=1 // pred_region
      _
    $region73: #{forward.1} parent=1 // pred_fallthru
      _
    // Predicated region
    $region74: #{forward.1} parent=1 // pred_check
      _
    $region75: #{forward.1} parent=1 // pred_check_branch
      %206 = sbr.rel (0) target = $region77
    $region76: #{forward.1} parent=1 // pred_region
      _
    $region77: #{forward.1} parent=1 // pred_fallthru
      _
    // Predicated region
    $region78: #{forward.1} parent=1 // pred_check
      _
    $region79: #{forward.1} parent=1 // pred_check_branch
      %208 = sbr.rel (0) target = $region81
    $region80: #{forward.1} parent=1 // pred_region
      %s210 = ssub.s32 256, 256
      %211 = vsyncadd [#allocation16], %s210
      %s212 = sshll.u32 [#allocation15], 4
      %s213 = int_to_ptr.vmem [resolvable:$true] %s212
      %218 = dma.hbm_to_vmem [thread:$0]  %s39, 256, %s213, [#allocation16], 128, 128, 8
    $region81: #{forward.1} parent=1 // pred_fallthru
      _
    // Predicated region
    $region82: #{forward.1} parent=1 // pred_check
      _
    $region83: #{forward.1} parent=1 // pred_check_branch
      %220 = sbr.rel (0) target = $region85
    $region84: #{forward.1} parent=1 // pred_region
      _
    $region85: #{forward.1} parent=1 // pred_fallthru
      _
    // Predicated region
    $region86: #{forward.1} parent=1 // pred_check
      _
    $region87: #{forward.1} parent=1 // pred_check_branch
      %222 = sbr.rel (0) target = $region89
    $region88: #{forward.1} parent=1 // pred_region
      %s224 = ssub.s32 256, 256
      %225 = vsyncadd [#allocation16], %s224
      %s226 = sshll.u32 [#allocation17], 4
      %s227 = int_to_ptr.vmem [resolvable:$true] %s226
      %232 = dma.hbm_to_vmem [thread:$0]  %s43, 256, %s227, [#allocation16], 128, 128, 8
    $region89: #{forward.1} parent=1 // pred_fallthru
      _
    // Predicated region
    $region90: #{forward.1} parent=1 // pred_check
      _
    $region91: #{forward.1} parent=1 // pred_check_branch
      %234 = sbr.rel (0) target = $region93
    $region92: #{forward.1} parent=1 // pred_region
      %s236 = ssub.s32 256, 256
      %237 = vsyncadd [#allocation19], %s236
      %s238 = sshll.u32 [#allocation18], 4
      %s239 = int_to_ptr.vmem [resolvable:$true] %s238
      %244 = dma.hbm_to_vmem [thread:$0]  %s45, 256, %s239, [#allocation19], 128, 128, 8
    $region93: #{forward.1} parent=1 // pred_fallthru
      _
    // Predicated region
    $region94: #{forward.1} parent=1 // pred_check
      _
    $region95: #{forward.1} parent=1 // pred_check_branch
      %246 = sbr.rel (0) target = $region97
    $region96: #{forward.1} parent=1 // pred_region
      %s248 = ssub.s32 256, 256
      %249 = vsyncadd [#allocation19], %s248
      %s250 = sshll.u32 [#allocation20], 4
      %s251 = int_to_ptr.vmem [resolvable:$true] %s250
      %256 = dma.hbm_to_vmem [thread:$0]  %s47, 256, %s251, [#allocation19], 128, 128, 8
    $region97: #{forward.1} parent=1 // pred_fallthru
      _
    // Predicated region
    $region98: #{forward.1} parent=1 // pred_check
      _
    $region99: #{forward.1} parent=1 // pred_check_branch
      %258 = sbr.rel (0) target = $region101
    $region100: #{forward.1} parent=1 // pred_region
      _
    $region101: #{forward.1} parent=1 // pred_fallthru
      _
    // Predicated region
    $region102: #{forward.1} parent=1 // pred_check
      _
    $region103: #{forward.1} parent=1 // pred_check_branch
      %260 = sbr.rel (0) target = $region105
    $region104: #{forward.1} parent=1 // pred_region
      _
    $region105: #{forward.1} parent=1 // pred_fallthru
      _
    // Predicated region
    $region106: #{forward.1} parent=1 // pred_check
      _
    $region107: #{forward.1} parent=1 // pred_check_branch
      %262 = sbr.rel (0) target = $region109
    $region108: #{forward.1} parent=1 // pred_region
      _
    $region109: #{forward.1} parent=1 // pred_fallthru
      _
    // Predicated region
    $region110: #{forward.1} parent=1 // pred_check
      _
    $region111: #{forward.1} parent=1 // pred_check_branch
      %264 = sbr.rel (0) target = $region113
    $region112: #{forward.1} parent=1 // pred_region
      _
    $region113: #{forward.1} parent=1 // pred_fallthru
      _
    // Predicated region
    $region114: #{forward.1} parent=1 // pred_check
      _
    $region115: #{forward.1} parent=1 // pred_check_branch
      %266 = sbr.rel (0) target = $region117
    $region116: #{forward.1} parent=1 // pred_region
      _
    $region117: #{forward.1} parent=1 // pred_fallthru
      _
    // Predicated region
    $region118: #{forward.1} parent=1 // pred_check
      _
    $region119: #{forward.1} parent=1 // pred_check_branch
      %268 = sbr.rel (0) target = $region121
    $region120: #{forward.1} parent=1 // pred_region
      _
    $region121: #{forward.1} parent=1 // pred_fallthru
      _
    // Predicated region
    $region122: #{forward.1} parent=1 // pred_check
      _
    $region123: #{forward.1} parent=1 // pred_check_branch
      %270 = sbr.rel (0) target = $region125
    $region124: #{forward.1} parent=1 // pred_region
      _
    $region125: #{forward.1} parent=1 // pred_fallthru
      _
    // Predicated region
    $region126: #{forward.1} parent=1 // pred_check
      _
    $region127: #{forward.1} parent=1 // pred_check_branch
      %272 = sbr.rel (0) target = $region129
    $region128: #{forward.1} parent=1 // pred_region
      _
    $region129: #{forward.1} parent=1 // pred_fallthru
      _
    // Predicated region
    $region130: #{forward.1} parent=1 // pred_check
      _
    $region131: #{forward.1} parent=1 // pred_check_branch
      %274 = sbr.rel (0) target = $region133
    $region132: #{forward.1} parent=1 // pred_region
      _
    $region133: #{forward.1} parent=1 // pred_fallthru
      _
    // Predicated region
    $region134: #{forward.1} parent=1 // pred_check
      _
    $region135: #{forward.1} parent=1 // pred_check_branch
      %276 = sbr.rel (0) target = $region137
    $region136: #{forward.1} parent=1 // pred_region
      %s278 = ssub.s32 1024, 1024
      %279 = vsyncadd [#allocation22], %s278
      %s280 = sshll.u32 [#allocation21], 4
      %s281 = int_to_ptr.vmem [resolvable:$true] %s280
      %286 = dma.hbm_to_vmem [thread:$0]  %s67, 1024, %s281, [#allocation22], 128, 128, 8
    $region137: #{forward.1} parent=1 // pred_fallthru
      _
    // Predicated region
    $region138: #{forward.1} parent=1 // pred_check
      _
    $region139: #{forward.1} parent=1 // pred_check_branch
      %288 = sbr.rel (0) target = $region141
    $region140: #{forward.1} parent=1 // pred_region
      _
    $region141: #{forward.1} parent=1 // pred_fallthru
      _
    // Predicated region
    $region142: #{forward.1} parent=1 // pred_check
      _
    $region143: #{forward.1} parent=1 // pred_check_branch
      %290 = sbr.rel (0) target = $region145
    $region144: #{forward.1} parent=1 // pred_region
      %s292 = ssub.s32 256, 256
      %293 = vsyncadd [#allocation22], %s292
      %s294 = sshll.u32 [#allocation23], 4
      %s295 = int_to_ptr.vmem [resolvable:$true] %s294
      %300 = dma.hbm_to_vmem [thread:$0]  %s71, 256, %s295, [#allocation22], 128, 128, 8
    $region145: #{forward.1} parent=1 // pred_fallthru
      _
    // Predicated region
    $region146: #{forward.1} parent=1 // pred_check
      _
    $region147: #{forward.1} parent=1 // pred_check_branch
      %302 = sbr.rel (0) target = $region149
    $region148: #{forward.1} parent=1 // pred_region
      _
    $region149: #{forward.1} parent=1 // pred_fallthru
      _
    // Predicated region
    $region150: #{forward.1} parent=1 // pred_check
      _
    $region151: #{forward.1} parent=1 // pred_check_branch
      %304 = sbr.rel (0) target = $region153
    $region152: #{forward.1} parent=1 // pred_region
      _
    $region153: #{forward.1} parent=1 // pred_fallthru
      _
    // Predicated region
    $region154: #{forward.1} parent=1 // pred_check
      _
    $region155: #{forward.1} parent=1 // pred_check_branch
      %306 = sbr.rel (0) target = $region157
    $region156: #{forward.1} parent=1 // pred_region
      %s308 = ssub.s32 256, 256
      %309 = vsyncadd [#allocation25], %s308
      %s310 = sshll.u32 [#allocation24], 4
      %s311 = int_to_ptr.vmem [resolvable:$true] %s310
      %316 = dma.hbm_to_vmem [thread:$0]  %s77, 256, %s311, [#allocation25], 128, 128, 8
    $region157: #{forward.1} parent=1 // pred_fallthru
      _
    // Predicated region
    $region158: #{forward.1} parent=1 // pred_check
      _
    $region159: #{forward.1} parent=1 // pred_check_branch
      %318 = sbr.rel (0) target = $region161
    $region160: #{forward.1} parent=1 // pred_region
      _
    $region161: #{forward.1} parent=1 // pred_fallthru
      _
    // Predicated region
    $region162: #{forward.1} parent=1 // pred_check
      _
    $region163: #{forward.1} parent=1 // pred_check_branch
      %320 = sbr.rel (0) target = $region165
    $region164: #{forward.1} parent=1 // pred_region
      _
    $region165: #{forward.1} parent=1 // pred_fallthru
      _
    // Predicated region
    $region166: #{forward.1} parent=1 // pred_check
      _
    $region167: #{forward.1} parent=1 // pred_check_branch
      %322 = sbr.rel (0) target = $region169
    $region168: #{forward.1} parent=1 // pred_region
      %323 = dma.done [#allocation4], 3584
    $region169: #{forward.1} parent=1 // pred_fallthru
      _
    // Predicated region
    $region170: #{forward.1} parent=1 // pred_check
      _
    $region171: #{forward.1} parent=1 // pred_check_branch
      %325 = sbr.rel (0) target = $region173
    $region172: #{forward.1} parent=1 // pred_region
      %326 = dma.done [#allocation7], 1792
    $region173: #{forward.1} parent=1 // pred_fallthru
      _
    // Predicated region
    $region174: #{forward.1} parent=1 // pred_check
      _
    $region175: #{forward.1} parent=1 // pred_check_branch
      %328 = sbr.rel (0) target = $region177
    $region176: #{forward.1} parent=1 // pred_region
      %329 = dma.done [#allocation7], 256
    $region177: #{forward.1} parent=1 // pred_fallthru
      _
    // Predicated region
    $region178: #{forward.1} parent=1 // pred_check
      _
    $region179: #{forward.1} parent=1 // pred_check_branch
      %331 = sbr.rel (0) target = $region181
    $region180: #{forward.1} parent=1 // pred_region
      %332 = dma.done [#allocation10], 512
    $region181: #{forward.1} parent=1 // pred_fallthru
      _
    // Predicated region
    $region182: #{forward.1} parent=1 // pred_check
      _
    $region183: #{forward.1} parent=1 // pred_check_branch
      %334 = sbr.rel (0) target = $region185
    $region184: #{forward.1} parent=1 // pred_region
      %335 = dma.done [#allocation10], 256
    $region185: #{forward.1} parent=1 // pred_fallthru
      _
    // Predicated region
    $region186: #{forward.1} parent=1 // pred_check
      _
    $region187: #{forward.1} parent=1 // pred_check_branch
      %337 = sbr.rel (0) target = $region189
    $region188: #{forward.1} parent=1 // pred_region
      %338 = dma.done [#allocation13], 1792
    $region189: #{forward.1} parent=1 // pred_fallthru
      _
    // Predicated region
    $region190: #{forward.1} parent=1 // pred_check
      _
    $region191: #{forward.1} parent=1 // pred_check_branch
      %340 = sbr.rel (0) target = $region193
    $region192: #{forward.1} parent=1 // pred_region
      %341 = dma.done [#allocation13], 1792
    $region193: #{forward.1} parent=1 // pred_fallthru
      _
    // Predicated region
    $region194: #{forward.1} parent=1 // pred_check
      _
    $region195: #{forward.1} parent=1 // pred_check_branch
      %343 = sbr.rel (0) target = $region197
    $region196: #{forward.1} parent=1 // pred_region
      %344 = dma.done [#allocation16], 256
    $region197: #{forward.1} parent=1 // pred_fallthru
      _
    // Predicated region
    $region198: #{forward.1} parent=1 // pred_check
      _
    $region199: #{forward.1} parent=1 // pred_check_branch
      %346 = sbr.rel (0) target = $region201
    $region200: #{forward.1} parent=1 // pred_region
      %347 = dma.done [#allocation16], 256
    $region201: #{forward.1} parent=1 // pred_fallthru
      _
    // Predicated region
    $region202: #{forward.1} parent=1 // pred_check
      _
    $region203: #{forward.1} parent=1 // pred_check_branch
      %349 = sbr.rel (0) target = $region205
    $region204: #{forward.1} parent=1 // pred_region
      %350 = dma.done [#allocation19], 256
    $region205: #{forward.1} parent=1 // pred_fallthru
      _
    // Predicated region
    $region206: #{forward.1} parent=1 // pred_check
      _
    $region207: #{forward.1} parent=1 // pred_check_branch
      %352 = sbr.rel (0) target = $region209
    $region208: #{forward.1} parent=1 // pred_region
      %353 = dma.done [#allocation19], 256
    $region209: #{forward.1} parent=1 // pred_fallthru
      _
    // Predicated region
    $region210: #{forward.1} parent=1 // pred_check
      _
    $region211: #{forward.1} parent=1 // pred_check_branch
      %355 = sbr.rel (0) target = $region213
    $region212: #{forward.1} parent=1 // pred_region
      %356 = dma.done [#allocation22], 1024
    $region213: #{forward.1} parent=1 // pred_fallthru
      _
    // Predicated region
    $region214: #{forward.1} parent=1 // pred_check
      _
    $region215: #{forward.1} parent=1 // pred_check_branch
      %358 = sbr.rel (0) target = $region217
    $region216: #{forward.1} parent=1 // pred_region
      %359 = dma.done [#allocation22], 256
    $region217: #{forward.1} parent=1 // pred_fallthru
      _
    // Predicated region
    $region218: #{forward.1} parent=1 // pred_check
      _
    $region219: #{forward.1} parent=1 // pred_check_branch
      %361 = sbr.rel (0) target = $region221
    $region220: #{forward.1} parent=1 // pred_region
      %362 = dma.done [#allocation25], 256
    $region221: #{forward.1} parent=1 // pred_fallthru
      _
    %v363 = vld [vmem:[%s81] sm:$0xf]
    %v364 = vld [vmem:[%s65] sm:$0xff]
    %v365 = vld [vmem:[%s65 + $0x8] sm:$0xff]
    %v366 = vld [vmem:[%s65 + $0x10] sm:$0xff]
    %v367 = vld [vmem:[%s65 + $0x18] sm:$0xff]
    %v368 = vld [vmem:[%s65 + $0x20] sm:$0xff]
    %v369 = vld [vmem:[%s65 + $0x28] sm:$0xff]
    %v370 = vld [vmem:[%s65 + $0x30] sm:$0xff]
    %v371 = vld [vmem:[%s65 + $0x38] sm:$0xff]
    %v372 = vld [vmem:[%s65 + $0x40] sm:$0xff]
    %v373 = vld [vmem:[%s65 + $0x48] sm:$0xff]
    %v374 = vld [vmem:[%s65 + $0x50] sm:$0xff]
    %v375 = vld [vmem:[%s65 + $0x58] sm:$0xff]
    %v376 = vld [vmem:[%s65 + $0x60] sm:$0xff]
    %v377 = vld [vmem:[%s65 + $0x68] sm:$0xff]
    %v378 = vld [vmem:[%s61] sm:$0xff]
    %v379 = vld [vmem:[%s61 + $0x8] sm:$0xff]
    %vm380 = vcmask 31744
    %v382 = vsel %vm380, %v364, 0
    %v385 = vsel %vm380, %v365, 0
    %v388 = vsel %vm380, %v366, 0
    %v391 = vsel %vm380, %v367, 0
    %v394 = vsel %vm380, %v368, 0
    %v397 = vsel %vm380, %v369, 0
    %v400 = vsel %vm380, %v370, 0
    %v403 = vsel %vm380, %v371, 0
    %v406 = vsel %vm380, %v372, 0
    %v409 = vsel %vm380, %v373, 0
    %v412 = vsel %vm380, %v374, 0
    %v415 = vsel %vm380, %v375, 0
    %v418 = vsel %vm380, %v376, 0
    %v421 = vsel %vm380, %v377, 0
    %vm423 = vcmask 1043456
    %v425 = vsel %vm423, %v363, 0
    %427 = vmatprep.subr.mxu0 0.0
    %428 = vmatpush1.msra.mxu0 0.0
    %429 = vmatprep.subr.mxu0 0.0
    %430 = vmatpush1.msra.mxu0 0.0
    %431 = vmatprep.subr.mxu0 0.0
    %432 = vmatpush1.msra.mxu0 0.0
    %433 = vmatprep.subr.mxu0 0.0
    %434 = vmatpush1.msra.mxu0 0.0
    %435 = vmatprep.subr.mxu0 0.0
    %436 = vmatpush1.msra.mxu0 0.0
    %437 = vmatprep.subr.mxu0 0.0
    %438 = vmatpush1.msra.mxu0 0.0
    %439 = vmatprep.subr.mxu0 0.0
    %440 = vmatpush1.msra.mxu0 0.0
    %441 = vmatprep.subr.mxu0 0.0
    %442 = vmatpush1.msra.mxu0 0.0
    %443 = vmatprep.subr.mxu0 0.0
    %444 = vmatpush1.msra.mxu0 0.0
    %445 = vmatprep.subr.mxu0 0.0
    %446 = vmatpush1.msra.mxu0 0.0
    %447 = vmatprep.subr.mxu0 0.0
    %448 = vmatpush1.msra.mxu0 0.0
    %449 = vmatprep.subr.mxu0 0.0
    %450 = vmatpush1.msra.mxu0 0.0
    %451 = vmatprep.subr.mxu0 0.0
    %452 = vmatpush1.msra.mxu0 0.0
    %453 = vmatprep.subr.mxu0 0.0
    %454 = vmatpush1.msra.mxu0 0.0
    %455 = vmatprep.subr.mxu0 0.0
    %456 = vmatpush1.msra.mxu0 0.0
    %457 = vmatprep.subr.mxu0 0.0
    %458 = vmatpush1.msra.mxu0 %v425
    %459 = vmatprep.subr.mxu0 0.0
    %460 = vmatpush2.msra.mxu0 0.0
    %461 = vmatprep.subr.mxu0 0.0
    %462 = vmatpush2.msra.mxu0 0.0
    %463 = vmatprep.subr.mxu0 0.0
    %464 = vmatpush2.msra.mxu0 0.0
    %465 = vmatprep.subr.mxu0 0.0
    %466 = vmatpush2.msra.mxu0 0.0
    %467 = vmatprep.subr.mxu0 0.0
    %468 = vmatpush2.msra.mxu0 0.0
    %469 = vmatprep.subr.mxu0 0.0
    %470 = vmatpush2.msra.mxu0 0.0
    %471 = vmatprep.subr.mxu0 0.0
    %472 = vmatpush2.msra.mxu0 0.0
    %473 = vmatprep.subr.mxu0 0.0
    %474 = vmatpush2.msra.mxu0 0.0
    %475 = vmatprep.subr.mxu0 0.0
    %476 = vmatpush2.msra.mxu0 0.0
    %477 = vmatprep.subr.mxu0 0.0
    %478 = vmatpush2.msra.mxu0 0.0
    %479 = vmatprep.subr.mxu0 0.0
    %480 = vmatpush2.msra.mxu0 0.0
    %481 = vmatprep.subr.mxu0 0.0
    %482 = vmatpush2.msra.mxu0 0.0
    %483 = vmatprep.subr.mxu0 0.0
    %484 = vmatpush2.msra.mxu0 0.0
    %485 = vmatprep.subr.mxu0 0.0
    %486 = vmatpush2.msra.mxu0 0.0
    %487 = vmatprep.subr.mxu0 0.0
    %488 = vmatpush2.msra.mxu0 0.0
    %489 = vmatprep.subr.mxu0 0.0
    %490 = vmatpush2.msra.mxu0 0.0
    %491 = vmatprep.mubr.f32.mxu0 0.0
    %492 = vmatmul.mubr.f32.gmra.mxu0 %v382
    %v493 = vpop.f32.mrf.mxu0
    %v494 = vadd.f32 0.0, %v493
    %v495 = vpop.f32.mrf.mxu0
    %496 = vmatprep.mubr.f32.mxu0 0.0
    %497 = vmatmul.mubr.f32.gmra.mxu0 %v385
    %v498 = vpop.f32.mrf.mxu0
    %v499 = vadd.f32 0.0, %v498
    %v500 = vpop.f32.mrf.mxu0
    %501 = vmatprep.mubr.f32.mxu0 0.0
    %502 = vmatmul.mubr.f32.gmra.mxu0 %v388
    %v503 = vpop.f32.mrf.mxu0
    %v504 = vadd.f32 0.0, %v503
    %v505 = vpop.f32.mrf.mxu0
    %506 = vmatprep.mubr.f32.mxu0 0.0
    %507 = vmatmul.mubr.f32.gmra.mxu0 %v391
    %v508 = vpop.f32.mrf.mxu0
    %v509 = vadd.f32 0.0, %v508
    %v510 = vpop.f32.mrf.mxu0
    %511 = vmatprep.mubr.f32.mxu0 0.0
    %512 = vmatmul.mubr.f32.gmra.mxu0 %v394
    %v513 = vpop.f32.mrf.mxu0
    %v514 = vadd.f32 0.0, %v513
    %v515 = vpop.f32.mrf.mxu0
    %516 = vmatprep.mubr.f32.mxu0 0.0
    %517 = vmatmul.mubr.f32.gmra.mxu0 %v397
    %v518 = vpop.f32.mrf.mxu0
    %v519 = vadd.f32 0.0, %v518
    %v520 = vpop.f32.mrf.mxu0
    %521 = vmatprep.mubr.f32.mxu0 0.0
    %522 = vmatmul.mubr.f32.gmra.mxu0 %v400
    %v523 = vpop.f32.mrf.mxu0
    %v524 = vadd.f32 0.0, %v523
    %v525 = vpop.f32.mrf.mxu0
    %526 = vmatprep.mubr.f32.mxu0 0.0
    %527 = vmatmul.mubr.f32.gmra.mxu0 %v403
    %v528 = vpop.f32.mrf.mxu0
    %v529 = vadd.f32 0.0, %v528
    %v530 = vpop.f32.mrf.mxu0
    %531 = vmatprep.mubr.f32.mxu0 0.0
    %532 = vmatmul.mubr.f32.gmra.mxu0 %v406
    %v533 = vpop.f32.mrf.mxu0
    %v534 = vadd.f32 0.0, %v533
    %v535 = vpop.f32.mrf.mxu0
    %536 = vmatprep.mubr.f32.mxu0 0.0
    %537 = vmatmul.mubr.f32.gmra.mxu0 %v409
    %v538 = vpop.f32.mrf.mxu0
    %v539 = vadd.f32 0.0, %v538
    %v540 = vpop.f32.mrf.mxu0
    %541 = vmatprep.mubr.f32.mxu0 0.0
    %542 = vmatmul.mubr.f32.gmra.mxu0 %v412
    %v543 = vpop.f32.mrf.mxu0
    %v544 = vadd.f32 0.0, %v543
    %v545 = vpop.f32.mrf.mxu0
    %546 = vmatprep.mubr.f32.mxu0 0.0
    %547 = vmatmul.mubr.f32.gmra.mxu0 %v415
    %v548 = vpop.f32.mrf.mxu0
    %v549 = vadd.f32 0.0, %v548
    %v550 = vpop.f32.mrf.mxu0
    %551 = vmatprep.mubr.f32.mxu0 0.0
    %552 = vmatmul.mubr.f32.gmra.mxu0 %v418
    %v553 = vpop.f32.mrf.mxu0
    %v554 = vadd.f32 0.0, %v553
    %v555 = vpop.f32.mrf.mxu0
    %556 = vmatprep.mubr.f32.mxu0 0.0
    %557 = vmatmul.mubr.f32.gmra.mxu0 %v421
    %v558 = vpop.f32.mrf.mxu0
    %v559 = vadd.f32 0.0, %v558
    %v560 = vpop.f32.mrf.mxu0
    %561 = vdwg.mxu0
    %v562 = vld [vmem:[%s63] sm:$0xff]
    %v563 = vld [vmem:[%s63 + $0x8] sm:$0xff]
    %v564 = vld [vmem:[%s63 + $0x10] sm:$0xff]
    %v565 = vld [vmem:[%s63 + $0x18] sm:$0xff]
    %v566 = vld [vmem:[%s63 + $0x20] sm:$0xff]
    %v567 = vld [vmem:[%s63 + $0x28] sm:$0xff]
    %v568 = vld [vmem:[%s63 + $0x30] sm:$0xff]
    %v569 = vld [vmem:[%s63 + $0x38] sm:$0xff]
    %s570 = scalar_lea.vmem %s63, 64
    %v571 = vld [vmem:[%s570] sm:$0xff]
    %v572 = vld [vmem:[%s570 + $0x8] sm:$0xff]
    %v573 = vld [vmem:[%s570 + $0x10] sm:$0xff]
    %v574 = vld [vmem:[%s570 + $0x18] sm:$0xff]
    %v575 = vld [vmem:[%s570 + $0x20] sm:$0xff]
    %v576 = vld [vmem:[%s570 + $0x28] sm:$0xff]
    %v577 = vld [vmem:[%s570 + $0x30] sm:$0xff]
    %v578 = vld [vmem:[%s570 + $0x38] sm:$0xff]
    %vm579 = vcmask 523264
    %v581 = vsel %vm579, %v504, 0
    %v584 = vsel %vm579, %v509, 0
    %586 = vmatprep.subr.mxu0 0.0
    %587 = vmatpush1.msra.mxu0 0.0
    %588 = vmatprep.subr.mxu0 0.0
    %589 = vmatpush1.msra.mxu0 0.0
    %590 = vmatprep.subr.mxu0 0.0
    %591 = vmatpush1.msra.mxu0 0.0
    %592 = vmatprep.subr.mxu0 0.0
    %593 = vmatpush1.msra.mxu0 0.0
    %594 = vmatprep.subr.mxu0 0.0
    %595 = vmatpush1.msra.mxu0 0.0
    %596 = vmatprep.subr.mxu0 0.0
    %597 = vmatpush1.msra.mxu0 0.0
    %598 = vmatprep.subr.mxu0 0.0
    %599 = vmatpush1.msra.mxu0 0.0
    %600 = vmatprep.subr.mxu0 0.0
    %601 = vmatpush1.msra.mxu0 0.0
    %602 = vmatprep.subr.mxu0 0.0
    %603 = vmatpush1.msra.mxu0 %v578
    %604 = vmatprep.subr.mxu0 0.0
    %605 = vmatpush1.msra.mxu0 %v577
    %606 = vmatprep.subr.mxu0 0.0
    %607 = vmatpush1.msra.mxu0 %v576
    %608 = vmatprep.subr.mxu0 0.0
    %609 = vmatpush1.msra.mxu0 %v575
    %610 = vmatprep.subr.mxu0 0.0
    %611 = vmatpush1.msra.mxu0 %v574
    %612 = vmatprep.subr.mxu0 0.0
    %613 = vmatpush1.msra.mxu0 %v573
    %614 = vmatprep.subr.mxu0 0.0
    %615 = vmatpush1.msra.mxu0 %v572
    %616 = vmatprep.subr.mxu0 0.0
    %617 = vmatpush1.msra.mxu0 %v571
    %618 = vmatprep.subr.mxu0 0.0
    %619 = vmatpush2.msra.mxu0 0.0
    %620 = vmatprep.subr.mxu0 0.0
    %621 = vmatpush2.msra.mxu0 0.0
    %622 = vmatprep.subr.mxu0 0.0
    %623 = vmatpush2.msra.mxu0 0.0
    %624 = vmatprep.subr.mxu0 0.0
    %625 = vmatpush2.msra.mxu0 0.0
    %626 = vmatprep.subr.mxu0 0.0
    %627 = vmatpush2.msra.mxu0 0.0
    %628 = vmatprep.subr.mxu0 0.0
    %629 = vmatpush2.msra.mxu0 0.0
    %630 = vmatprep.subr.mxu0 0.0
    %631 = vmatpush2.msra.mxu0 0.0
    %632 = vmatprep.subr.mxu0 0.0
    %633 = vmatpush2.msra.mxu0 0.0
    %634 = vmatprep.subr.mxu0 0.0
    %635 = vmatpush2.msra.mxu0 0.0
    %636 = vmatprep.subr.mxu0 0.0
    %637 = vmatpush2.msra.mxu0 0.0
    %638 = vmatprep.subr.mxu0 0.0
    %639 = vmatpush2.msra.mxu0 0.0
    %640 = vmatprep.subr.mxu0 0.0
    %641 = vmatpush2.msra.mxu0 0.0
    %642 = vmatprep.subr.mxu0 0.0
    %643 = vmatpush2.msra.mxu0 0.0
    %644 = vmatprep.subr.mxu0 0.0
    %645 = vmatpush2.msra.mxu0 0.0
    %646 = vmatprep.subr.mxu0 0.0
    %647 = vmatpush2.msra.mxu0 0.0
    %648 = vmatprep.subr.mxu0 0.0
    %649 = vmatpush2.msra.mxu0 0.0
    %650 = vmatprep.mubr.f32.mxu0 0.0
    %651 = vmatmul.mubr.f32.gmra.mxu0 %v581
    %v652 = vpop.f32.mrf.mxu0
    %v653 = vadd.f32 0.0, %v652
    %v654 = vpop.f32.mrf.mxu0
    %655 = vmatprep.mubr.f32.mxu0 0.0
    %656 = vmatmul.mubr.f32.gmra.mxu0 %v584
    %v657 = vpop.f32.mrf.mxu0
    %v658 = vadd.f32 0.0, %v657
    %v659 = vpop.f32.mrf.mxu0
    %660 = vdwg.mxu0
    %v662 = vsel %vm579, %v494, 0
    %v665 = vsel %vm579, %v499, 0
    %667 = vmatprep.subr.mxu0 0.0
    %668 = vmatpush1.msra.mxu0 0.0
    %669 = vmatprep.subr.mxu0 0.0
    %670 = vmatpush1.msra.mxu0 0.0
    %671 = vmatprep.subr.mxu0 0.0
    %672 = vmatpush1.msra.mxu0 0.0
    %673 = vmatprep.subr.mxu0 0.0
    %674 = vmatpush1.msra.mxu0 0.0
    %675 = vmatprep.subr.mxu0 0.0
    %676 = vmatpush1.msra.mxu0 0.0
    %677 = vmatprep.subr.mxu0 0.0
    %678 = vmatpush1.msra.mxu0 0.0
    %679 = vmatprep.subr.mxu0 0.0
    %680 = vmatpush1.msra.mxu0 0.0
    %681 = vmatprep.subr.mxu0 0.0
    %682 = vmatpush1.msra.mxu0 0.0
    %683 = vmatprep.subr.mxu0 0.0
    %684 = vmatpush1.msra.mxu0 %v569
    %685 = vmatprep.subr.mxu0 0.0
    %686 = vmatpush1.msra.mxu0 %v568
    %687 = vmatprep.subr.mxu0 0.0
    %688 = vmatpush1.msra.mxu0 %v567
    %689 = vmatprep.subr.mxu0 0.0
    %690 = vmatpush1.msra.mxu0 %v566
    %691 = vmatprep.subr.mxu0 0.0
    %692 = vmatpush1.msra.mxu0 %v565
    %693 = vmatprep.subr.mxu0 0.0
    %694 = vmatpush1.msra.mxu0 %v564
    %695 = vmatprep.subr.mxu0 0.0
    %696 = vmatpush1.msra.mxu0 %v563
    %697 = vmatprep.subr.mxu0 0.0
    %698 = vmatpush1.msra.mxu0 %v562
    %699 = vmatprep.subr.mxu0 0.0
    %700 = vmatpush2.msra.mxu0 0.0
    %701 = vmatprep.subr.mxu0 0.0
    %702 = vmatpush2.msra.mxu0 0.0
    %703 = vmatprep.subr.mxu0 0.0
    %704 = vmatpush2.msra.mxu0 0.0
    %705 = vmatprep.subr.mxu0 0.0
    %706 = vmatpush2.msra.mxu0 0.0
    %707 = vmatprep.subr.mxu0 0.0
    %708 = vmatpush2.msra.mxu0 0.0
    %709 = vmatprep.subr.mxu0 0.0
    %710 = vmatpush2.msra.mxu0 0.0
    %711 = vmatprep.subr.mxu0 0.0
    %712 = vmatpush2.msra.mxu0 0.0
    %713 = vmatprep.subr.mxu0 0.0
    %714 = vmatpush2.msra.mxu0 0.0
    %715 = vmatprep.subr.mxu0 0.0
    %716 = vmatpush2.msra.mxu0 0.0
    %717 = vmatprep.subr.mxu0 0.0
    %718 = vmatpush2.msra.mxu0 0.0
    %719 = vmatprep.subr.mxu0 0.0
    %720 = vmatpush2.msra.mxu0 0.0
    %721 = vmatprep.subr.mxu0 0.0
    %722 = vmatpush2.msra.mxu0 0.0
    %723 = vmatprep.subr.mxu0 0.0
    %724 = vmatpush2.msra.mxu0 0.0
    %725 = vmatprep.subr.mxu0 0.0
    %726 = vmatpush2.msra.mxu0 0.0
    %727 = vmatprep.subr.mxu0 0.0
    %728 = vmatpush2.msra.mxu0 0.0
    %729 = vmatprep.subr.mxu0 0.0
    %730 = vmatpush2.msra.mxu0 0.0
    %731 = vmatprep.mubr.f32.mxu0 0.0
    %732 = vmatmul.mubr.f32.gmra.mxu0 %v662
    %v733 = vpop.f32.mrf.mxu0
    %v734 = vadd.f32 %v653, %v733
    %v735 = vpop.f32.mrf.mxu0
    %736 = vmatprep.mubr.f32.mxu0 0.0
    %737 = vmatmul.mubr.f32.gmra.mxu0 %v665
    %v738 = vpop.f32.mrf.mxu0
    %v739 = vadd.f32 %v658, %v738
    %v740 = vpop.f32.mrf.mxu0
    %741 = vdwg.mxu0
    %s742 = scalar_lea.vmem %s63, 128
    %v743 = vld [vmem:[%s742] sm:$0xff]
    %v744 = vld [vmem:[%s742 + $0x8] sm:$0xff]
    %v745 = vld [vmem:[%s742 + $0x10] sm:$0xff]
    %v746 = vld [vmem:[%s742 + $0x18] sm:$0xff]
    %v747 = vld [vmem:[%s742 + $0x20] sm:$0xff]
    %v748 = vld [vmem:[%s742 + $0x28] sm:$0xff]
    %v749 = vld [vmem:[%s742 + $0x30] sm:$0xff]
    %v750 = vld [vmem:[%s742 + $0x38] sm:$0xff]
    %v752 = vsel %vm579, %v514, 0
    %v755 = vsel %vm579, %v519, 0
    %757 = vmatprep.subr.mxu0 0.0
    %758 = vmatpush1.msra.mxu0 0.0
    %759 = vmatprep.subr.mxu0 0.0
    %760 = vmatpush1.msra.mxu0 0.0
    %761 = vmatprep.subr.mxu0 0.0
    %762 = vmatpush1.msra.mxu0 0.0
    %763 = vmatprep.subr.mxu0 0.0
    %764 = vmatpush1.msra.mxu0 0.0
    %765 = vmatprep.subr.mxu0 0.0
    %766 = vmatpush1.msra.mxu0 0.0
    %767 = vmatprep.subr.mxu0 0.0
    %768 = vmatpush1.msra.mxu0 0.0
    %769 = vmatprep.subr.mxu0 0.0
    %770 = vmatpush1.msra.mxu0 0.0
    %771 = vmatprep.subr.mxu0 0.0
    %772 = vmatpush1.msra.mxu0 0.0
    %773 = vmatprep.subr.mxu0 0.0
    %774 = vmatpush1.msra.mxu0 %v750
    %775 = vmatprep.subr.mxu0 0.0
    %776 = vmatpush1.msra.mxu0 %v749
    %777 = vmatprep.subr.mxu0 0.0
    %778 = vmatpush1.msra.mxu0 %v748
    %779 = vmatprep.subr.mxu0 0.0
    %780 = vmatpush1.msra.mxu0 %v747
    %781 = vmatprep.subr.mxu0 0.0
    %782 = vmatpush1.msra.mxu0 %v746
    %783 = vmatprep.subr.mxu0 0.0
    %784 = vmatpush1.msra.mxu0 %v745
    %785 = vmatprep.subr.mxu0 0.0
    %786 = vmatpush1.msra.mxu0 %v744
    %787 = vmatprep.subr.mxu0 0.0
    %788 = vmatpush1.msra.mxu0 %v743
    %789 = vmatprep.subr.mxu0 0.0
    %790 = vmatpush2.msra.mxu0 0.0
    %791 = vmatprep.subr.mxu0 0.0
    %792 = vmatpush2.msra.mxu0 0.0
    %793 = vmatprep.subr.mxu0 0.0
    %794 = vmatpush2.msra.mxu0 0.0
    %795 = vmatprep.subr.mxu0 0.0
    %796 = vmatpush2.msra.mxu0 0.0
    %797 = vmatprep.subr.mxu0 0.0
    %798 = vmatpush2.msra.mxu0 0.0
    %799 = vmatprep.subr.mxu0 0.0
    %800 = vmatpush2.msra.mxu0 0.0
    %801 = vmatprep.subr.mxu0 0.0
    %802 = vmatpush2.msra.mxu0 0.0
    %803 = vmatprep.subr.mxu0 0.0
    %804 = vmatpush2.msra.mxu0 0.0
    %805 = vmatprep.subr.mxu0 0.0
    %806 = vmatpush2.msra.mxu0 0.0
    %807 = vmatprep.subr.mxu0 0.0
    %808 = vmatpush2.msra.mxu0 0.0
    %809 = vmatprep.subr.mxu0 0.0
    %810 = vmatpush2.msra.mxu0 0.0
    %811 = vmatprep.subr.mxu0 0.0
    %812 = vmatpush2.msra.mxu0 0.0
    %813 = vmatprep.subr.mxu0 0.0
    %814 = vmatpush2.msra.mxu0 0.0
    %815 = vmatprep.subr.mxu0 0.0
    %816 = vmatpush2.msra.mxu0 0.0
    %817 = vmatprep.subr.mxu0 0.0
    %818 = vmatpush2.msra.mxu0 0.0
    %819 = vmatprep.subr.mxu0 0.0
    %820 = vmatpush2.msra.mxu0 0.0
    %821 = vmatprep.mubr.f32.mxu0 0.0
    %822 = vmatmul.mubr.f32.gmra.mxu0 %v752
    %v823 = vpop.f32.mrf.mxu0
    %v824 = vadd.f32 0.0, %v823
    %v825 = vpop.f32.mrf.mxu0
    %826 = vmatprep.mubr.f32.mxu0 0.0
    %827 = vmatmul.mubr.f32.gmra.mxu0 %v755
    %v828 = vpop.f32.mrf.mxu0
    %v829 = vadd.f32 0.0, %v828
    %v830 = vpop.f32.mrf.mxu0
    %831 = vdwg.mxu0
    %v832 = vadd.f32 %v734, %v824
    %v833 = vadd.f32 %v739, %v829
    %s834 = scalar_lea.vmem %s63, 192
    %v835 = vld [vmem:[%s834] sm:$0xff]
    %v836 = vld [vmem:[%s834 + $0x8] sm:$0xff]
    %v837 = vld [vmem:[%s834 + $0x10] sm:$0xff]
    %v838 = vld [vmem:[%s834 + $0x18] sm:$0xff]
    %v839 = vld [vmem:[%s834 + $0x20] sm:$0xff]
    %v840 = vld [vmem:[%s834 + $0x28] sm:$0xff]
    %v841 = vld [vmem:[%s834 + $0x30] sm:$0xff]
    %v842 = vld [vmem:[%s834 + $0x38] sm:$0xff]
    %v844 = vsel %vm579, %v524, 0
    %v847 = vsel %vm579, %v529, 0
    %849 = vmatprep.subr.mxu0 0.0
    %850 = vmatpush1.msra.mxu0 0.0
    %851 = vmatprep.subr.mxu0 0.0
    %852 = vmatpush1.msra.mxu0 0.0
    %853 = vmatprep.subr.mxu0 0.0
    %854 = vmatpush1.msra.mxu0 0.0
    %855 = vmatprep.subr.mxu0 0.0
    %856 = vmatpush1.msra.mxu0 0.0
    %857 = vmatprep.subr.mxu0 0.0
    %858 = vmatpush1.msra.mxu0 0.0
    %859 = vmatprep.subr.mxu0 0.0
    %860 = vmatpush1.msra.mxu0 0.0
    %861 = vmatprep.subr.mxu0 0.0
    %862 = vmatpush1.msra.mxu0 0.0
    %863 = vmatprep.subr.mxu0 0.0
    %864 = vmatpush1.msra.mxu0 0.0
    %865 = vmatprep.subr.mxu0 0.0
    %866 = vmatpush1.msra.mxu0 %v842
    %867 = vmatprep.subr.mxu0 0.0
    %868 = vmatpush1.msra.mxu0 %v841
    %869 = vmatprep.subr.mxu0 0.0
    %870 = vmatpush1.msra.mxu0 %v840
    %871 = vmatprep.subr.mxu0 0.0
    %872 = vmatpush1.msra.mxu0 %v839
    %873 = vmatprep.subr.mxu0 0.0
    %874 = vmatpush1.msra.mxu0 %v838
    %875 = vmatprep.subr.mxu0 0.0
    %876 = vmatpush1.msra.mxu0 %v837
    %877 = vmatprep.subr.mxu0 0.0
    %878 = vmatpush1.msra.mxu0 %v836
    %879 = vmatprep.subr.mxu0 0.0
    %880 = vmatpush1.msra.mxu0 %v835
    %881 = vmatprep.subr.mxu0 0.0
    %882 = vmatpush2.msra.mxu0 0.0
    %883 = vmatprep.subr.mxu0 0.0
    %884 = vmatpush2.msra.mxu0 0.0
    %885 = vmatprep.subr.mxu0 0.0
    %886 = vmatpush2.msra.mxu0 0.0
    %887 = vmatprep.subr.mxu0 0.0
    %888 = vmatpush2.msra.mxu0 0.0
    %889 = vmatprep.subr.mxu0 0.0
    %890 = vmatpush2.msra.mxu0 0.0
    %891 = vmatprep.subr.mxu0 0.0
    %892 = vmatpush2.msra.mxu0 0.0
    %893 = vmatprep.subr.mxu0 0.0
    %894 = vmatpush2.msra.mxu0 0.0
    %895 = vmatprep.subr.mxu0 0.0
    %896 = vmatpush2.msra.mxu0 0.0
    %897 = vmatprep.subr.mxu0 0.0
    %898 = vmatpush2.msra.mxu0 0.0
    %899 = vmatprep.subr.mxu0 0.0
    %900 = vmatpush2.msra.mxu0 0.0
    %901 = vmatprep.subr.mxu0 0.0
    %902 = vmatpush2.msra.mxu0 0.0
    %903 = vmatprep.subr.mxu0 0.0
    %904 = vmatpush2.msra.mxu0 0.0
    %905 = vmatprep.subr.mxu0 0.0
    %906 = vmatpush2.msra.mxu0 0.0
    %907 = vmatprep.subr.mxu0 0.0
    %908 = vmatpush2.msra.mxu0 0.0
    %909 = vmatprep.subr.mxu0 0.0
    %910 = vmatpush2.msra.mxu0 0.0
    %911 = vmatprep.subr.mxu0 0.0
    %912 = vmatpush2.msra.mxu0 0.0
    %913 = vmatprep.mubr.f32.mxu0 0.0
    %914 = vmatmul.mubr.f32.gmra.mxu0 %v844
    %v915 = vpop.f32.mrf.mxu0
    %v916 = vadd.f32 0.0, %v915
    %v917 = vpop.f32.mrf.mxu0
    %918 = vmatprep.mubr.f32.mxu0 0.0
    %919 = vmatmul.mubr.f32.gmra.mxu0 %v847
    %v920 = vpop.f32.mrf.mxu0
    %v921 = vadd.f32 0.0, %v920
    %v922 = vpop.f32.mrf.mxu0
    %923 = vdwg.mxu0
    %v924 = vadd.f32 %v832, %v916
    %v925 = vadd.f32 %v833, %v921
    %s926 = scalar_lea.vmem %s63, 256
    %v927 = vld [vmem:[%s926] sm:$0xff]
    %v928 = vld [vmem:[%s926 + $0x8] sm:$0xff]
    %v929 = vld [vmem:[%s926 + $0x10] sm:$0xff]
    %v930 = vld [vmem:[%s926 + $0x18] sm:$0xff]
    %v931 = vld [vmem:[%s926 + $0x20] sm:$0xff]
    %v932 = vld [vmem:[%s926 + $0x28] sm:$0xff]
    %v933 = vld [vmem:[%s926 + $0x30] sm:$0xff]
    %v934 = vld [vmem:[%s926 + $0x38] sm:$0xff]
    %v936 = vsel %vm579, %v534, 0
    %v939 = vsel %vm579, %v539, 0
    %941 = vmatprep.subr.mxu0 0.0
    %942 = vmatpush1.msra.mxu0 0.0
    %943 = vmatprep.subr.mxu0 0.0
    %944 = vmatpush1.msra.mxu0 0.0
    %945 = vmatprep.subr.mxu0 0.0
    %946 = vmatpush1.msra.mxu0 0.0
    %947 = vmatprep.subr.mxu0 0.0
    %948 = vmatpush1.msra.mxu0 0.0
    %949 = vmatprep.subr.mxu0 0.0
    %950 = vmatpush1.msra.mxu0 0.0
    %951 = vmatprep.subr.mxu0 0.0
    %952 = vmatpush1.msra.mxu0 0.0
    %953 = vmatprep.subr.mxu0 0.0
    %954 = vmatpush1.msra.mxu0 0.0
    %955 = vmatprep.subr.mxu0 0.0
    %956 = vmatpush1.msra.mxu0 0.0
    %957 = vmatprep.subr.mxu0 0.0
    %958 = vmatpush1.msra.mxu0 %v934
    %959 = vmatprep.subr.mxu0 0.0
    %960 = vmatpush1.msra.mxu0 %v933
    %961 = vmatprep.subr.mxu0 0.0
    %962 = vmatpush1.msra.mxu0 %v932
    %963 = vmatprep.subr.mxu0 0.0
    %964 = vmatpush1.msra.mxu0 %v931
    %965 = vmatprep.subr.mxu0 0.0
    %966 = vmatpush1.msra.mxu0 %v930
    %967 = vmatprep.subr.mxu0 0.0
    %968 = vmatpush1.msra.mxu0 %v929
    %969 = vmatprep.subr.mxu0 0.0
    %970 = vmatpush1.msra.mxu0 %v928
    %971 = vmatprep.subr.mxu0 0.0
    %972 = vmatpush1.msra.mxu0 %v927
    %973 = vmatprep.subr.mxu0 0.0
    %974 = vmatpush2.msra.mxu0 0.0
    %975 = vmatprep.subr.mxu0 0.0
    %976 = vmatpush2.msra.mxu0 0.0
    %977 = vmatprep.subr.mxu0 0.0
    %978 = vmatpush2.msra.mxu0 0.0
    %979 = vmatprep.subr.mxu0 0.0
    %980 = vmatpush2.msra.mxu0 0.0
    %981 = vmatprep.subr.mxu0 0.0
    %982 = vmatpush2.msra.mxu0 0.0
    %983 = vmatprep.subr.mxu0 0.0
    %984 = vmatpush2.msra.mxu0 0.0
    %985 = vmatprep.subr.mxu0 0.0
    %986 = vmatpush2.msra.mxu0 0.0
    %987 = vmatprep.subr.mxu0 0.0
    %988 = vmatpush2.msra.mxu0 0.0
    %989 = vmatprep.subr.mxu0 0.0
    %990 = vmatpush2.msra.mxu0 0.0
    %991 = vmatprep.subr.mxu0 0.0
    %992 = vmatpush2.msra.mxu0 0.0
    %993 = vmatprep.subr.mxu0 0.0
    %994 = vmatpush2.msra.mxu0 0.0
    %995 = vmatprep.subr.mxu0 0.0
    %996 = vmatpush2.msra.mxu0 0.0
    %997 = vmatprep.subr.mxu0 0.0
    %998 = vmatpush2.msra.mxu0 0.0
    %999 = vmatprep.subr.mxu0 0.0
    %1000 = vmatpush2.msra.mxu0 0.0
    %1001 = vmatprep.subr.mxu0 0.0
    %1002 = vmatpush2.msra.mxu0 0.0
    %1003 = vmatprep.subr.mxu0 0.0
    %1004 = vmatpush2.msra.mxu0 0.0
    %1005 = vmatprep.mubr.f32.mxu0 0.0
    %1006 = vmatmul.mubr.f32.gmra.mxu0 %v936
    %v1007 = vpop.f32.mrf.mxu0
    %v1008 = vadd.f32 0.0, %v1007
    %v1009 = vpop.f32.mrf.mxu0
    %1010 = vmatprep.mubr.f32.mxu0 0.0
    %1011 = vmatmul.mubr.f32.gmra.mxu0 %v939
    %v1012 = vpop.f32.mrf.mxu0
    %v1013 = vadd.f32 0.0, %v1012
    %v1014 = vpop.f32.mrf.mxu0
    %1015 = vdwg.mxu0
    %v1016 = vadd.f32 %v924, %v1008
    %v1017 = vadd.f32 %v925, %v1013
    %s1018 = scalar_lea.vmem %s63, 320
    %v1019 = vld [vmem:[%s1018] sm:$0xff]
    %v1020 = vld [vmem:[%s1018 + $0x8] sm:$0xff]
    %v1021 = vld [vmem:[%s1018 + $0x10] sm:$0xff]
    %v1022 = vld [vmem:[%s1018 + $0x18] sm:$0xff]
    %v1023 = vld [vmem:[%s1018 + $0x20] sm:$0xff]
    %v1024 = vld [vmem:[%s1018 + $0x28] sm:$0xff]
    %v1025 = vld [vmem:[%s1018 + $0x30] sm:$0xff]
    %v1026 = vld [vmem:[%s1018 + $0x38] sm:$0xff]
    %v1028 = vsel %vm579, %v544, 0
    %v1031 = vsel %vm579, %v549, 0
    %1033 = vmatprep.subr.mxu0 0.0
    %1034 = vmatpush1.msra.mxu0 0.0
    %1035 = vmatprep.subr.mxu0 0.0
    %1036 = vmatpush1.msra.mxu0 0.0
    %1037 = vmatprep.subr.mxu0 0.0
    %1038 = vmatpush1.msra.mxu0 0.0
    %1039 = vmatprep.subr.mxu0 0.0
    %1040 = vmatpush1.msra.mxu0 0.0
    %1041 = vmatprep.subr.mxu0 0.0
    %1042 = vmatpush1.msra.mxu0 0.0
    %1043 = vmatprep.subr.mxu0 0.0
    %1044 = vmatpush1.msra.mxu0 0.0
    %1045 = vmatprep.subr.mxu0 0.0
    %1046 = vmatpush1.msra.mxu0 0.0
    %1047 = vmatprep.subr.mxu0 0.0
    %1048 = vmatpush1.msra.mxu0 0.0
    %1049 = vmatprep.subr.mxu0 0.0
    %1050 = vmatpush1.msra.mxu0 %v1026
    %1051 = vmatprep.subr.mxu0 0.0
    %1052 = vmatpush1.msra.mxu0 %v1025
    %1053 = vmatprep.subr.mxu0 0.0
    %1054 = vmatpush1.msra.mxu0 %v1024
    %1055 = vmatprep.subr.mxu0 0.0
    %1056 = vmatpush1.msra.mxu0 %v1023
    %1057 = vmatprep.subr.mxu0 0.0
    %1058 = vmatpush1.msra.mxu0 %v1022
    %1059 = vmatprep.subr.mxu0 0.0
    %1060 = vmatpush1.msra.mxu0 %v1021
    %1061 = vmatprep.subr.mxu0 0.0
    %1062 = vmatpush1.msra.mxu0 %v1020
    %1063 = vmatprep.subr.mxu0 0.0
    %1064 = vmatpush1.msra.mxu0 %v1019
    %1065 = vmatprep.subr.mxu0 0.0
    %1066 = vmatpush2.msra.mxu0 0.0
    %1067 = vmatprep.subr.mxu0 0.0
    %1068 = vmatpush2.msra.mxu0 0.0
    %1069 = vmatprep.subr.mxu0 0.0
    %1070 = vmatpush2.msra.mxu0 0.0
    %1071 = vmatprep.subr.mxu0 0.0
    %1072 = vmatpush2.msra.mxu0 0.0
    %1073 = vmatprep.subr.mxu0 0.0
    %1074 = vmatpush2.msra.mxu0 0.0
    %1075 = vmatprep.subr.mxu0 0.0
    %1076 = vmatpush2.msra.mxu0 0.0
    %1077 = vmatprep.subr.mxu0 0.0
    %1078 = vmatpush2.msra.mxu0 0.0
    %1079 = vmatprep.subr.mxu0 0.0
    %1080 = vmatpush2.msra.mxu0 0.0
    %1081 = vmatprep.subr.mxu0 0.0
    %1082 = vmatpush2.msra.mxu0 0.0
    %1083 = vmatprep.subr.mxu0 0.0
    %1084 = vmatpush2.msra.mxu0 0.0
    %1085 = vmatprep.subr.mxu0 0.0
    %1086 = vmatpush2.msra.mxu0 0.0
    %1087 = vmatprep.subr.mxu0 0.0
    %1088 = vmatpush2.msra.mxu0 0.0
    %1089 = vmatprep.subr.mxu0 0.0
    %1090 = vmatpush2.msra.mxu0 0.0
    %1091 = vmatprep.subr.mxu0 0.0
    %1092 = vmatpush2.msra.mxu0 0.0
    %1093 = vmatprep.subr.mxu0 0.0
    %1094 = vmatpush2.msra.mxu0 0.0
    %1095 = vmatprep.subr.mxu0 0.0
    %1096 = vmatpush2.msra.mxu0 0.0
    %1097 = vmatprep.mubr.f32.mxu0 0.0
    %1098 = vmatmul.mubr.f32.gmra.mxu0 %v1028
    %v1099 = vpop.f32.mrf.mxu0
    %v1100 = vadd.f32 0.0, %v1099
    %v1101 = vpop.f32.mrf.mxu0
    %1102 = vmatprep.mubr.f32.mxu0 0.0
    %1103 = vmatmul.mubr.f32.gmra.mxu0 %v1031
    %v1104 = vpop.f32.mrf.mxu0
    %v1105 = vadd.f32 0.0, %v1104
    %v1106 = vpop.f32.mrf.mxu0
    %1107 = vdwg.mxu0
    %v1108 = vadd.f32 %v1016, %v1100
    %v1109 = vadd.f32 %v1017, %v1105
    %s1110 = scalar_lea.vmem %s63, 384
    %v1111 = vld [vmem:[%s1110] sm:$0xff]
    %v1112 = vld [vmem:[%s1110 + $0x8] sm:$0xff]
    %v1113 = vld [vmem:[%s1110 + $0x10] sm:$0xff]
    %v1114 = vld [vmem:[%s1110 + $0x18] sm:$0xff]
    %v1115 = vld [vmem:[%s1110 + $0x20] sm:$0xff]
    %v1116 = vld [vmem:[%s1110 + $0x28] sm:$0xff]
    %v1117 = vld [vmem:[%s1110 + $0x30] sm:$0xff]
    %v1118 = vld [vmem:[%s1110 + $0x38] sm:$0xff]
    %v1120 = vsel %vm579, %v554, 0
    %v1123 = vsel %vm579, %v559, 0
    %1125 = vmatprep.subr.mxu0 0.0
    %1126 = vmatpush1.msra.mxu0 0.0
    %1127 = vmatprep.subr.mxu0 0.0
    %1128 = vmatpush1.msra.mxu0 0.0
    %1129 = vmatprep.subr.mxu0 0.0
    %1130 = vmatpush1.msra.mxu0 0.0
    %1131 = vmatprep.subr.mxu0 0.0
    %1132 = vmatpush1.msra.mxu0 0.0
    %1133 = vmatprep.subr.mxu0 0.0
    %1134 = vmatpush1.msra.mxu0 0.0
    %1135 = vmatprep.subr.mxu0 0.0
    %1136 = vmatpush1.msra.mxu0 0.0
    %1137 = vmatprep.subr.mxu0 0.0
    %1138 = vmatpush1.msra.mxu0 0.0
    %1139 = vmatprep.subr.mxu0 0.0
    %1140 = vmatpush1.msra.mxu0 0.0
    %1141 = vmatprep.subr.mxu0 0.0
    %1142 = vmatpush1.msra.mxu0 %v1118
    %1143 = vmatprep.subr.mxu0 0.0
    %1144 = vmatpush1.msra.mxu0 %v1117
    %1145 = vmatprep.subr.mxu0 0.0
    %1146 = vmatpush1.msra.mxu0 %v1116
    %1147 = vmatprep.subr.mxu0 0.0
    %1148 = vmatpush1.msra.mxu0 %v1115
    %1149 = vmatprep.subr.mxu0 0.0
    %1150 = vmatpush1.msra.mxu0 %v1114
    %1151 = vmatprep.subr.mxu0 0.0
    %1152 = vmatpush1.msra.mxu0 %v1113
    %1153 = vmatprep.subr.mxu0 0.0
    %1154 = vmatpush1.msra.mxu0 %v1112
    %1155 = vmatprep.subr.mxu0 0.0
    %1156 = vmatpush1.msra.mxu0 %v1111
    %1157 = vmatprep.subr.mxu0 0.0
    %1158 = vmatpush2.msra.mxu0 0.0
    %1159 = vmatprep.subr.mxu0 0.0
    %1160 = vmatpush2.msra.mxu0 0.0
    %1161 = vmatprep.subr.mxu0 0.0
    %1162 = vmatpush2.msra.mxu0 0.0
    %1163 = vmatprep.subr.mxu0 0.0
    %1164 = vmatpush2.msra.mxu0 0.0
    %1165 = vmatprep.subr.mxu0 0.0
    %1166 = vmatpush2.msra.mxu0 0.0
    %1167 = vmatprep.subr.mxu0 0.0
    %1168 = vmatpush2.msra.mxu0 0.0
    %1169 = vmatprep.subr.mxu0 0.0
    %1170 = vmatpush2.msra.mxu0 0.0
    %1171 = vmatprep.subr.mxu0 0.0
    %1172 = vmatpush2.msra.mxu0 0.0
    %1173 = vmatprep.subr.mxu0 0.0
    %1174 = vmatpush2.msra.mxu0 0.0
    %1175 = vmatprep.subr.mxu0 0.0
    %1176 = vmatpush2.msra.mxu0 0.0
    %1177 = vmatprep.subr.mxu0 0.0
    %1178 = vmatpush2.msra.mxu0 0.0
    %1179 = vmatprep.subr.mxu0 0.0
    %1180 = vmatpush2.msra.mxu0 0.0
    %1181 = vmatprep.subr.mxu0 0.0
    %1182 = vmatpush2.msra.mxu0 0.0
    %1183 = vmatprep.subr.mxu0 0.0
    %1184 = vmatpush2.msra.mxu0 0.0
    %1185 = vmatprep.subr.mxu0 0.0
    %1186 = vmatpush2.msra.mxu0 0.0
    %1187 = vmatprep.subr.mxu0 0.0
    %1188 = vmatpush2.msra.mxu0 0.0
    %1189 = vmatprep.mubr.f32.mxu0 0.0
    %1190 = vmatmul.mubr.f32.gmra.mxu0 %v1120
    %v1191 = vpop.f32.mrf.mxu0
    %v1192 = vadd.f32 0.0, %v1191
    %v1193 = vpop.f32.mrf.mxu0
    %1194 = vmatprep.mubr.f32.mxu0 0.0
    %1195 = vmatmul.mubr.f32.gmra.mxu0 %v1123
    %v1196 = vpop.f32.mrf.mxu0
    %v1197 = vadd.f32 0.0, %v1196
    %v1198 = vpop.f32.mrf.mxu0
    %1199 = vdwg.mxu0
    %v1200 = vadd.f32 %v1108, %v1192
    %v1201 = vadd.f32 %v1109, %v1197
    %1203 = vset.pattern.permute.xlu0 0
    %1204 = vperm.xlu0 %1203, %v378
    %v1205 = vpop.permute.xlu0 %1204
    %1208 = vset.pattern.permute.xlu0 0
    %1209 = vperm.xlu0 %1208, %v379
    %v1210 = vpop.permute.xlu0 %1209
    %v1212 = vadd.f32 %v1200, %v1205
    %v1213 = vadd.f32 %v1201, %v1210
    %v1214 = vsel %vm579, %v1212, 0.0
    %1215 = vadd.xlane.f32.xlu0 %v1214
    %v1216 = vpop.xlane.xlu0 %1215
    %v1217 = vsel %vm579, %v1213, 0.0
    %1218 = vadd.xlane.f32.xlu0 %v1217
    %v1219 = vpop.xlane.xlu0 %1218
    %v1220 = vrcp.pop 64.0
    %v1221 = vmul.f32 %v1216, %v1220
    %v1222 = vmul.f32 %v1219, %v1220
    %v1223 = vsub.f32 %v1212, %v1221
    %v1224 = vsub.f32 %v1213, %v1222
    %v1225 = vmul.f32 %v1223, %v1223
    %v1226 = vmul.f32 %v1224, %v1224
    %v1227 = vsel %vm579, %v1225, 0.0
    %1228 = vadd.xlane.f32.xlu0 %v1227
    %v1229 = vpop.xlane.xlu0 %1228
    %v1230 = vsel %vm579, %v1226, 0.0
    %1231 = vadd.xlane.f32.xlu0 %v1230
    %v1232 = vpop.xlane.xlu0 %1231
    %v1233 = vmul.f32 %v1229, %v1220
    %v1234 = vmul.f32 %v1232, %v1220
    %v1235 = vadd.f32 %v1233, 1e-05
    %v1236 = vadd.f32 %v1234, 1e-05
    %v1237 = vrsqrt.pop %v1235
    %v1238 = vrsqrt.pop %v1236
    %v1239 = vmul.f32 %v1223, %v1237
    %v1240 = vmul.f32 %v1224, %v1238
    %v1241 = vld [vmem:[%s79] sm:$0xff]
    %v1242 = vld [vmem:[%s79 + $0x8] sm:$0xff]
    %1244 = vset.pattern.permute.xlu0 0
    %1245 = vperm.xlu0 %1244, %v1241
    %v1246 = vpop.permute.xlu0 %1245
    %1249 = vset.pattern.permute.xlu0 0
    %1250 = vperm.xlu0 %1249, %v1242
    %v1251 = vpop.permute.xlu0 %1250
    %v1253 = vmul.f32 %v1239, %v1246
    %v1254 = vmul.f32 %v1240, %v1251
    %v1255 = vld [vmem:[%s73] sm:$0xff]
    %v1256 = vld [vmem:[%s73 + $0x8] sm:$0xff]
    %1258 = vset.pattern.permute.xlu0 0
    %1259 = vperm.xlu0 %1258, %v1255
    %v1260 = vpop.permute.xlu0 %1259
    %1263 = vset.pattern.permute.xlu0 0
    %1264 = vperm.xlu0 %1263, %v1256
    %v1265 = vpop.permute.xlu0 %1264
    %v1267 = vadd.f32 %v1253, %v1260
    %v1268 = vadd.f32 %v1254, %v1265
    %v1269 = vmul.f32 %v1267, 1.702
    %v1270 = vmul.f32 %v1268, 1.702
    %v1271 = vxor.u32 %v1269, 2147483648
    %v1272 = vxor.u32 %v1270, 2147483648
    %v1273 = vmul.f32 %v1271, 1.442695
    %v1274 = vpow.pop %v1273
    %v1275 = vmul.f32 %v1272, 1.442695
    %v1276 = vpow.pop %v1275
    %v1277 = vadd.f32 %v1274, 1.0
    %v1278 = vadd.f32 %v1276, 1.0
    %v1279 = vrcp.pop %v1277
    %v1280 = vmul.f32 1.0, %v1279
    %v1281 = vrcp.pop %v1278
    %v1282 = vmul.f32 1.0, %v1281
    %v1283 = vmul.f32 %v1280, %v1267
    %v1284 = vmul.f32 %v1282, %v1268
    %v1285 = vld [vmem:[#allocation24] sm:$0xff]
    %v1286 = vld [vmem:[#allocation24 + $0x8] sm:$0xff]
    %v1287 = vld [vmem:[%s75] sm:$0xff]
    %v1288 = vld [vmem:[%s75 + $0x8] sm:$0xff]
    %1290 = vset.pattern.permute.xlu0 0
    %1291 = vperm.xlu0 %1290, %v1287
    %v1292 = vpop.permute.xlu0 %1291
    %1295 = vset.pattern.permute.xlu0 0
    %1296 = vperm.xlu0 %1295, %v1288
    %v1297 = vpop.permute.xlu0 %1296
    %vm1299 = vcmask 130048
    %v1301 = vsel %vm1299, %v1285, 0
    %v1304 = vsel %vm1299, %v1286, 0
    %1306 = vmatprep.subr.mxu0 0.0
    %1307 = vmatpush1.msra.mxu0 0.0
    %1308 = vmatprep.subr.mxu0 0.0
    %1309 = vmatpush1.msra.mxu0 0.0
    %1310 = vmatprep.subr.mxu0 0.0
    %1311 = vmatpush1.msra.mxu0 0.0
    %1312 = vmatprep.subr.mxu0 0.0
    %1313 = vmatpush1.msra.mxu0 0.0
    %1314 = vmatprep.subr.mxu0 0.0
    %1315 = vmatpush1.msra.mxu0 0.0
    %1316 = vmatprep.subr.mxu0 0.0
    %1317 = vmatpush1.msra.mxu0 0.0
    %1318 = vmatprep.subr.mxu0 0.0
    %1319 = vmatpush1.msra.mxu0 0.0
    %1320 = vmatprep.subr.mxu0 0.0
    %1321 = vmatpush1.msra.mxu0 0.0
    %1322 = vmatprep.subr.mxu0 0.0
    %1323 = vmatpush1.msra.mxu0 0.0
    %1324 = vmatprep.subr.mxu0 0.0
    %1325 = vmatpush1.msra.mxu0 0.0
    %1326 = vmatprep.subr.mxu0 0.0
    %1327 = vmatpush1.msra.mxu0 0.0
    %1328 = vmatprep.subr.mxu0 0.0
    %1329 = vmatpush1.msra.mxu0 0.0
    %1330 = vmatprep.subr.mxu0 0.0
    %1331 = vmatpush1.msra.mxu0 0.0
    %1332 = vmatprep.subr.mxu0 0.0
    %1333 = vmatpush1.msra.mxu0 0.0
    %1334 = vmatprep.subr.mxu0 0.0
    %1335 = vmatpush1.msra.mxu0 %v1284
    %1336 = vmatprep.subr.mxu0 0.0
    %1337 = vmatpush1.msra.mxu0 %v1283
    %1338 = vmatprep.subr.mxu0 0.0
    %1339 = vmatpush2.msra.mxu0 0.0
    %1340 = vmatprep.subr.mxu0 0.0
    %1341 = vmatpush2.msra.mxu0 0.0
    %1342 = vmatprep.subr.mxu0 0.0
    %1343 = vmatpush2.msra.mxu0 0.0
    %1344 = vmatprep.subr.mxu0 0.0
    %1345 = vmatpush2.msra.mxu0 0.0
    %1346 = vmatprep.subr.mxu0 0.0
    %1347 = vmatpush2.msra.mxu0 0.0
    %1348 = vmatprep.subr.mxu0 0.0
    %1349 = vmatpush2.msra.mxu0 0.0
    %1350 = vmatprep.subr.mxu0 0.0
    %1351 = vmatpush2.msra.mxu0 0.0
    %1352 = vmatprep.subr.mxu0 0.0
    %1353 = vmatpush2.msra.mxu0 0.0
    %1354 = vmatprep.subr.mxu0 0.0
    %1355 = vmatpush2.msra.mxu0 0.0
    %1356 = vmatprep.subr.mxu0 0.0
    %1357 = vmatpush2.msra.mxu0 0.0
    %1358 = vmatprep.subr.mxu0 0.0
    %1359 = vmatpush2.msra.mxu0 0.0
    %1360 = vmatprep.subr.mxu0 0.0
    %1361 = vmatpush2.msra.mxu0 0.0
    %1362 = vmatprep.subr.mxu0 0.0
    %1363 = vmatpush2.msra.mxu0 0.0
    %1364 = vmatprep.subr.mxu0 0.0
    %1365 = vmatpush2.msra.mxu0 0.0
    %1366 = vmatprep.subr.mxu0 0.0
    %1367 = vmatpush2.msra.mxu0 0.0
    %1368 = vmatprep.subr.mxu0 0.0
    %1369 = vmatpush2.msra.mxu0 0.0
    %1370 = vmatprep.mubr.f32.mxu0 0.0
    %1371 = vmatmul.mubr.f32.gmra.mxu0 %v1301
    %v1372 = vpop.f32.mrf.mxu0
    %v1373 = vadd.f32 %v1292, %v1372
    %v1374 = vpop.f32.mrf.mxu0
    %1375 = vmatprep.mubr.f32.mxu0 0.0
    %1376 = vmatmul.mubr.f32.gmra.mxu0 %v1304
    %v1377 = vpop.f32.mrf.mxu0
    %v1378 = vadd.f32 %v1297, %v1377
    %v1379 = vpop.f32.mrf.mxu0
    %1380 = vdwg.mxu0
    %v1381 = vadd.f32 %v1373, %v1212
    %v1382 = vadd.f32 %v1378, %v1213
    %v1383 = vld [vmem:[#allocation21] sm:$0xff]
    %v1384 = vld [vmem:[#allocation21 + $0x8] sm:$0xff]
    %v1385 = vld [vmem:[#allocation21 + $0x10] sm:$0xff]
    %v1386 = vld [vmem:[#allocation21 + $0x18] sm:$0xff]
    %v1387 = vld [vmem:[#allocation21 + $0x20] sm:$0xff]
    %v1388 = vld [vmem:[#allocation21 + $0x28] sm:$0xff]
    %v1389 = vld [vmem:[#allocation21 + $0x30] sm:$0xff]
    %v1390 = vld [vmem:[#allocation21 + $0x38] sm:$0xff]
    %v1392 = vsel %vm579, %v1381, 0
    %v1395 = vsel %vm579, %v1382, 0
    %1397 = vmatprep.subr.mxu0 0.0
    %1398 = vmatpush1.msra.mxu0 0.0
    %1399 = vmatprep.subr.mxu0 0.0
    %1400 = vmatpush1.msra.mxu0 0.0
    %1401 = vmatprep.subr.mxu0 0.0
    %1402 = vmatpush1.msra.mxu0 0.0
    %1403 = vmatprep.subr.mxu0 0.0
    %1404 = vmatpush1.msra.mxu0 0.0
    %1405 = vmatprep.subr.mxu0 0.0
    %1406 = vmatpush1.msra.mxu0 0.0
    %1407 = vmatprep.subr.mxu0 0.0
    %1408 = vmatpush1.msra.mxu0 0.0
    %1409 = vmatprep.subr.mxu0 0.0
    %1410 = vmatpush1.msra.mxu0 0.0
    %1411 = vmatprep.subr.mxu0 0.0
    %1412 = vmatpush1.msra.mxu0 0.0
    %1413 = vmatprep.subr.mxu0 0.0
    %1414 = vmatpush1.msra.mxu0 %v1390
    %1415 = vmatprep.subr.mxu0 0.0
    %1416 = vmatpush1.msra.mxu0 %v1389
    %1417 = vmatprep.subr.mxu0 0.0
    %1418 = vmatpush1.msra.mxu0 %v1388
    %1419 = vmatprep.subr.mxu0 0.0
    %1420 = vmatpush1.msra.mxu0 %v1387
    %1421 = vmatprep.subr.mxu0 0.0
    %1422 = vmatpush1.msra.mxu0 %v1386
    %1423 = vmatprep.subr.mxu0 0.0
    %1424 = vmatpush1.msra.mxu0 %v1385
    %1425 = vmatprep.subr.mxu0 0.0
    %1426 = vmatpush1.msra.mxu0 %v1384
    %1427 = vmatprep.subr.mxu0 0.0
    %1428 = vmatpush1.msra.mxu0 %v1383
    %1429 = vmatprep.subr.mxu0 0.0
    %1430 = vmatpush2.msra.mxu0 0.0
    %1431 = vmatprep.subr.mxu0 0.0
    %1432 = vmatpush2.msra.mxu0 0.0
    %1433 = vmatprep.subr.mxu0 0.0
    %1434 = vmatpush2.msra.mxu0 0.0
    %1435 = vmatprep.subr.mxu0 0.0
    %1436 = vmatpush2.msra.mxu0 0.0
    %1437 = vmatprep.subr.mxu0 0.0
    %1438 = vmatpush2.msra.mxu0 0.0
    %1439 = vmatprep.subr.mxu0 0.0
    %1440 = vmatpush2.msra.mxu0 0.0
    %1441 = vmatprep.subr.mxu0 0.0
    %1442 = vmatpush2.msra.mxu0 0.0
    %1443 = vmatprep.subr.mxu0 0.0
    %1444 = vmatpush2.msra.mxu0 0.0
    %1445 = vmatprep.subr.mxu0 0.0
    %1446 = vmatpush2.msra.mxu0 0.0
    %1447 = vmatprep.subr.mxu0 0.0
    %1448 = vmatpush2.msra.mxu0 0.0
    %1449 = vmatprep.subr.mxu0 0.0
    %1450 = vmatpush2.msra.mxu0 0.0
    %1451 = vmatprep.subr.mxu0 0.0
    %1452 = vmatpush2.msra.mxu0 0.0
    %1453 = vmatprep.subr.mxu0 0.0
    %1454 = vmatpush2.msra.mxu0 0.0
    %1455 = vmatprep.subr.mxu0 0.0
    %1456 = vmatpush2.msra.mxu0 0.0
    %1457 = vmatprep.subr.mxu0 0.0
    %1458 = vmatpush2.msra.mxu0 0.0
    %1459 = vmatprep.subr.mxu0 0.0
    %1460 = vmatpush2.msra.mxu0 0.0
    %1461 = vmatprep.mubr.f32.mxu0 0.0
    %1462 = vmatmul.mubr.f32.gmra.mxu0 %v1392
    %v1463 = vpop.f32.mrf.mxu0
    %v1464 = vadd.f32 0.0, %v1463
    %v1465 = vpop.f32.mrf.mxu0
    %1466 = vmatprep.mubr.f32.mxu0 0.0
    %1467 = vmatmul.mubr.f32.gmra.mxu0 %v1395
    %v1468 = vpop.f32.mrf.mxu0
    %v1469 = vadd.f32 0.0, %v1468
    %v1470 = vpop.f32.mrf.mxu0
    %1471 = vdwg.mxu0
    %v1472 = vld [vmem:[%s69] sm:$0xff]
    %v1473 = vld [vmem:[%s69 + $0x8] sm:$0xff]
    %v1474 = vld [vmem:[%s69 + $0x10] sm:$0xff]
    %v1475 = vld [vmem:[%s69 + $0x18] sm:$0xff]
    %v1476 = vld [vmem:[%s69 + $0x20] sm:$0xff]
    %v1477 = vld [vmem:[%s69 + $0x28] sm:$0xff]
    %v1478 = vld [vmem:[%s69 + $0x30] sm:$0xff]
    %v1479 = vld [vmem:[%s69 + $0x38] sm:$0xff]
    %1480 = vmatprep.subr.mxu0 0.0
    %1481 = vmatpush1.msra.mxu0 0.0
    %1482 = vmatprep.subr.mxu0 0.0
    %1483 = vmatpush1.msra.mxu0 0.0
    %1484 = vmatprep.subr.mxu0 0.0
    %1485 = vmatpush1.msra.mxu0 0.0
    %1486 = vmatprep.subr.mxu0 0.0
    %1487 = vmatpush1.msra.mxu0 0.0
    %1488 = vmatprep.subr.mxu0 0.0
    %1489 = vmatpush1.msra.mxu0 0.0
    %1490 = vmatprep.subr.mxu0 0.0
    %1491 = vmatpush1.msra.mxu0 0.0
    %1492 = vmatprep.subr.mxu0 0.0
    %1493 = vmatpush1.msra.mxu0 0.0
    %1494 = vmatprep.subr.mxu0 0.0
    %1495 = vmatpush1.msra.mxu0 0.0
    %1496 = vmatprep.subr.mxu0 0.0
    %1497 = vmatpush1.msra.mxu0 %v1479
    %1498 = vmatprep.subr.mxu0 0.0
    %1499 = vmatpush1.msra.mxu0 %v1478
    %1500 = vmatprep.subr.mxu0 0.0
    %1501 = vmatpush1.msra.mxu0 %v1477
    %1502 = vmatprep.subr.mxu0 0.0
    %1503 = vmatpush1.msra.mxu0 %v1476
    %1504 = vmatprep.subr.mxu0 0.0
    %1505 = vmatpush1.msra.mxu0 %v1475
    %1506 = vmatprep.subr.mxu0 0.0
    %1507 = vmatpush1.msra.mxu0 %v1474
    %1508 = vmatprep.subr.mxu0 0.0
    %1509 = vmatpush1.msra.mxu0 %v1473
    %1510 = vmatprep.subr.mxu0 0.0
    %1511 = vmatpush1.msra.mxu0 %v1472
    %1512 = vmatprep.subr.mxu0 0.0
    %1513 = vmatpush2.msra.mxu0 0.0
    %1514 = vmatprep.subr.mxu0 0.0
    %1515 = vmatpush2.msra.mxu0 0.0
    %1516 = vmatprep.subr.mxu0 0.0
    %1517 = vmatpush2.msra.mxu0 0.0
    %1518 = vmatprep.subr.mxu0 0.0
    %1519 = vmatpush2.msra.mxu0 0.0
    %1520 = vmatprep.subr.mxu0 0.0
    %1521 = vmatpush2.msra.mxu0 0.0
    %1522 = vmatprep.subr.mxu0 0.0
    %1523 = vmatpush2.msra.mxu0 0.0
    %1524 = vmatprep.subr.mxu0 0.0
    %1525 = vmatpush2.msra.mxu0 0.0
    %1526 = vmatprep.subr.mxu0 0.0
    %1527 = vmatpush2.msra.mxu0 0.0
    %1528 = vmatprep.subr.mxu0 0.0
    %1529 = vmatpush2.msra.mxu0 0.0
    %1530 = vmatprep.subr.mxu0 0.0
    %1531 = vmatpush2.msra.mxu0 0.0
    %1532 = vmatprep.subr.mxu0 0.0
    %1533 = vmatpush2.msra.mxu0 0.0
    %1534 = vmatprep.subr.mxu0 0.0
    %1535 = vmatpush2.msra.mxu0 0.0
    %1536 = vmatprep.subr.mxu0 0.0
    %1537 = vmatpush2.msra.mxu0 0.0
    %1538 = vmatprep.subr.mxu0 0.0
    %1539 = vmatpush2.msra.mxu0 0.0
    %1540 = vmatprep.subr.mxu0 0.0
    %1541 = vmatpush2.msra.mxu0 0.0
    %1542 = vmatprep.subr.mxu0 0.0
    %1543 = vmatpush2.msra.mxu0 0.0
    %1544 = vmatprep.mubr.f32.mxu0 0.0
    %1545 = vmatmul.mubr.f32.gmra.mxu0 %v1392
    %v1546 = vpop.f32.mrf.mxu0
    %v1547 = vadd.f32 0.0, %v1546
    %v1548 = vpop.f32.mrf.mxu0
    %1549 = vmatprep.mubr.f32.mxu0 0.0
    %1550 = vmatmul.mubr.f32.gmra.mxu0 %v1395
    %v1551 = vpop.f32.mrf.mxu0
    %v1552 = vadd.f32 0.0, %v1551
    %v1553 = vpop.f32.mrf.mxu0
    %1554 = vdwg.mxu0
    %v1555 = vsub.f32 %v1464, %v1547
    %v1556 = vsub.f32 %v1469, %v1552
    %v1557 = vld [vmem:[#allocation23] sm:$0xff]
    %v1558 = vld [vmem:[#allocation23 + $0x8] sm:$0xff]
    %v1560 = vsel %vm1299, %v1557, 0
    %v1563 = vsel %vm1299, %v1558, 0
    %1565 = vmatprep.subr.mxu0 0.0
    %1566 = vmatpush1.msra.mxu0 0.0
    %1567 = vmatprep.subr.mxu0 0.0
    %1568 = vmatpush1.msra.mxu0 0.0
    %1569 = vmatprep.subr.mxu0 0.0
    %1570 = vmatpush1.msra.mxu0 0.0
    %1571 = vmatprep.subr.mxu0 0.0
    %1572 = vmatpush1.msra.mxu0 0.0
    %1573 = vmatprep.subr.mxu0 0.0
    %1574 = vmatpush1.msra.mxu0 0.0
    %1575 = vmatprep.subr.mxu0 0.0
    %1576 = vmatpush1.msra.mxu0 0.0
    %1577 = vmatprep.subr.mxu0 0.0
    %1578 = vmatpush1.msra.mxu0 0.0
    %1579 = vmatprep.subr.mxu0 0.0
    %1580 = vmatpush1.msra.mxu0 0.0
    %1581 = vmatprep.subr.mxu0 0.0
    %1582 = vmatpush1.msra.mxu0 0.0
    %1583 = vmatprep.subr.mxu0 0.0
    %1584 = vmatpush1.msra.mxu0 0.0
    %1585 = vmatprep.subr.mxu0 0.0
    %1586 = vmatpush1.msra.mxu0 0.0
    %1587 = vmatprep.subr.mxu0 0.0
    %1588 = vmatpush1.msra.mxu0 0.0
    %1589 = vmatprep.subr.mxu0 0.0
    %1590 = vmatpush1.msra.mxu0 0.0
    %1591 = vmatprep.subr.mxu0 0.0
    %1592 = vmatpush1.msra.mxu0 0.0
    %1593 = vmatprep.subr.mxu0 0.0
    %1594 = vmatpush1.msra.mxu0 %v1556
    %1595 = vmatprep.subr.mxu0 0.0
    %1596 = vmatpush1.msra.mxu0 %v1555
    %1597 = vmatprep.subr.mxu0 0.0
    %1598 = vmatpush2.msra.mxu0 0.0
    %1599 = vmatprep.subr.mxu0 0.0
    %1600 = vmatpush2.msra.mxu0 0.0
    %1601 = vmatprep.subr.mxu0 0.0
    %1602 = vmatpush2.msra.mxu0 0.0
    %1603 = vmatprep.subr.mxu0 0.0
    %1604 = vmatpush2.msra.mxu0 0.0
    %1605 = vmatprep.subr.mxu0 0.0
    %1606 = vmatpush2.msra.mxu0 0.0
    %1607 = vmatprep.subr.mxu0 0.0
    %1608 = vmatpush2.msra.mxu0 0.0
    %1609 = vmatprep.subr.mxu0 0.0
    %1610 = vmatpush2.msra.mxu0 0.0
    %1611 = vmatprep.subr.mxu0 0.0
    %1612 = vmatpush2.msra.mxu0 0.0
    %1613 = vmatprep.subr.mxu0 0.0
    %1614 = vmatpush2.msra.mxu0 0.0
    %1615 = vmatprep.subr.mxu0 0.0
    %1616 = vmatpush2.msra.mxu0 0.0
    %1617 = vmatprep.subr.mxu0 0.0
    %1618 = vmatpush2.msra.mxu0 0.0
    %1619 = vmatprep.subr.mxu0 0.0
    %1620 = vmatpush2.msra.mxu0 0.0
    %1621 = vmatprep.subr.mxu0 0.0
    %1622 = vmatpush2.msra.mxu0 0.0
    %1623 = vmatprep.subr.mxu0 0.0
    %1624 = vmatpush2.msra.mxu0 0.0
    %1625 = vmatprep.subr.mxu0 0.0
    %1626 = vmatpush2.msra.mxu0 0.0
    %1627 = vmatprep.subr.mxu0 0.0
    %1628 = vmatpush2.msra.mxu0 0.0
    %1629 = vmatprep.mubr.f32.mxu0 0.0
    %1630 = vmatmul.mubr.f32.gmra.mxu0 %v1560
    %v1631 = vpop.f32.mrf.mxu0
    %v1632 = vadd.f32 0.0, %v1631
    %v1633 = vpop.f32.mrf.mxu0
    %1634 = vmatprep.mubr.f32.mxu0 0.0
    %1635 = vmatmul.mubr.f32.gmra.mxu0 %v1563
    %v1636 = vpop.f32.mrf.mxu0
    %v1637 = vadd.f32 0.0, %v1636
    %v1638 = vpop.f32.mrf.mxu0
    %1639 = vdwg.mxu0
    %v1640 = vxor.u32 %v1632, 2147483648
    %v1641 = vxor.u32 %v1637, 2147483648
    %v1642 = vmul.f32 %v1640, 1.442695
    %v1643 = vpow.pop %v1642
    %v1644 = vmul.f32 %v1641, 1.442695
    %v1645 = vpow.pop %v1644
    %v1646 = vadd.f32 %v1643, 1.0
    %v1647 = vadd.f32 %v1645, 1.0
    %v1648 = vrcp.pop %v1646
    %v1649 = vmul.f32 1.0, %v1648
    %v1650 = vrcp.pop %v1647
    %v1651 = vmul.f32 1.0, %v1650
    %v1652 = vmul.f32 %v1649, %v1555
    %v1653 = vmul.f32 %v1651, %v1556
    %v1654 = vadd.f32 %v1547, %v1652
    %v1655 = vadd.f32 %v1552, %v1653
    %vm1656 = vcmask 261120
    %v1657 = vsel %vm1656, %v1654, 0.0
    %1658 = vadd.xlane.f32.xlu0 %v1657
    %v1659 = vpop.xlane.xlu0 %1658
    %v1660 = vsel %vm1656, %v1655, 0.0
    %1661 = vadd.xlane.f32.xlu0 %v1660
    %v1662 = vpop.xlane.xlu0 %1661
    %v1663 = vrcp.pop 32.0
    %v1664 = vmul.f32 %v1659, %v1663
    %v1665 = vmul.f32 %v1662, %v1663
    %v1666 = vsub.f32 %v1654, %v1664
    %v1667 = vsub.f32 %v1655, %v1665
    %v1668 = vmul.f32 %v1666, %v1666
    %v1669 = vmul.f32 %v1667, %v1667
    %v1670 = vsel %vm1656, %v1668, 0.0
    %1671 = vadd.xlane.f32.xlu0 %v1670
    %v1672 = vpop.xlane.xlu0 %1671
    %v1673 = vsel %vm1656, %v1669, 0.0
    %1674 = vadd.xlane.f32.xlu0 %v1673
    %v1675 = vpop.xlane.xlu0 %1674
    %v1676 = vmul.f32 %v1672, %v1663
    %v1677 = vmul.f32 %v1675, %v1663
    %v1678 = vadd.f32 %v1676, 1e-05
    %v1679 = vadd.f32 %v1677, 1e-05
    %v1680 = vrsqrt.pop %v1678
    %v1681 = vrsqrt.pop %v1679
    %v1682 = vmul.f32 %v1666, %v1680
    %v1683 = vmul.f32 %v1667, %v1681
    %v1684 = vld [vmem:[%s9] sm:$0xff]
    %v1685 = vld [vmem:[%s9 + $0x8] sm:$0xff]
    %1687 = vset.pattern.permute.xlu0 0
    %1688 = vperm.xlu0 %1687, %v1684
    %v1689 = vpop.permute.xlu0 %1688
    %1692 = vset.pattern.permute.xlu0 0
    %1693 = vperm.xlu0 %1692, %v1685
    %v1694 = vpop.permute.xlu0 %1693
    %v1696 = vmul.f32 %v1682, %v1689
    %v1697 = vmul.f32 %v1683, %v1694
    %v1698 = vld [vmem:[%s1] sm:$0xff]
    %v1699 = vld [vmem:[%s1 + $0x8] sm:$0xff]
    %1701 = vset.pattern.permute.xlu0 0
    %1702 = vperm.xlu0 %1701, %v1698
    %v1703 = vpop.permute.xlu0 %1702
    %1706 = vset.pattern.permute.xlu0 0
    %1707 = vperm.xlu0 %1706, %v1699
    %v1708 = vpop.permute.xlu0 %1707
    %v1710 = vadd.f32 %v1696, %v1703
    %v1711 = vadd.f32 %v1697, %v1708
    %v1712 = vmul.f32 %v1710, 1.702
    %v1713 = vmul.f32 %v1711, 1.702
    %v1714 = vxor.u32 %v1712, 2147483648
    %v1715 = vxor.u32 %v1713, 2147483648
    %v1716 = vmul.f32 %v1714, 1.442695
    %v1717 = vpow.pop %v1716
    %v1718 = vmul.f32 %v1715, 1.442695
    %v1719 = vpow.pop %v1718
    %v1720 = vadd.f32 %v1717, 1.0
    %v1721 = vadd.f32 %v1719, 1.0
    %v1722 = vrcp.pop %v1720
    %v1723 = vmul.f32 1.0, %v1722
    %v1724 = vrcp.pop %v1721
    %v1725 = vmul.f32 1.0, %v1724
    %v1726 = vmul.f32 %v1723, %v1710
    %v1727 = vmul.f32 %v1725, %v1711
    %v1728 = vld [vmem:[#allocation6] sm:$0xff]
    %v1729 = vld [vmem:[#allocation6 + $0x8] sm:$0xff]
    %v1730 = vld [vmem:[#allocation6 + $0x10] sm:$0xff]
    %v1731 = vld [vmem:[#allocation6 + $0x18] sm:$0xff]
    %v1732 = vld [vmem:[#allocation6 + $0x20] sm:$0xff]
    %v1733 = vld [vmem:[#allocation6 + $0x28] sm:$0xff]
    %v1734 = vld [vmem:[#allocation6 + $0x30] sm:$0xff]
    %v1735 = vld [vmem:[#allocation6 + $0x38] sm:$0xff]
    %v1736 = vld [vmem:[#allocation6 + $0x40] sm:$0xff]
    %v1737 = vld [vmem:[#allocation6 + $0x48] sm:$0xff]
    %v1738 = vld [vmem:[#allocation6 + $0x50] sm:$0xff]
    %v1739 = vld [vmem:[#allocation6 + $0x58] sm:$0xff]
    %v1740 = vld [vmem:[#allocation6 + $0x60] sm:$0xff]
    %v1741 = vld [vmem:[#allocation6 + $0x68] sm:$0xff]
    %v1742 = vld [vmem:[%s3] sm:$0xff]
    %v1743 = vld [vmem:[%s3 + $0x8] sm:$0xff]
    %v1745 = vsel %vm1299, %v1728, 0
    %v1748 = vsel %vm1299, %v1729, 0
    %v1751 = vsel %vm1299, %v1730, 0
    %v1754 = vsel %vm1299, %v1731, 0
    %v1757 = vsel %vm1299, %v1732, 0
    %v1760 = vsel %vm1299, %v1733, 0
    %v1763 = vsel %vm1299, %v1734, 0
    %v1766 = vsel %vm1299, %v1735, 0
    %v1769 = vsel %vm1299, %v1736, 0
    %v1772 = vsel %vm1299, %v1737, 0
    %v1775 = vsel %vm1299, %v1738, 0
    %v1778 = vsel %vm1299, %v1739, 0
    %v1781 = vsel %vm1299, %v1740, 0
    %v1784 = vsel %vm1299, %v1741, 0
    %1786 = vmatprep.subr.mxu0 0.0
    %1787 = vmatpush1.msra.mxu0 0.0
    %1788 = vmatprep.subr.mxu0 0.0
    %1789 = vmatpush1.msra.mxu0 0.0
    %1790 = vmatprep.subr.mxu0 0.0
    %1791 = vmatpush1.msra.mxu0 0.0
    %1792 = vmatprep.subr.mxu0 0.0
    %1793 = vmatpush1.msra.mxu0 0.0
    %1794 = vmatprep.subr.mxu0 0.0
    %1795 = vmatpush1.msra.mxu0 0.0
    %1796 = vmatprep.subr.mxu0 0.0
    %1797 = vmatpush1.msra.mxu0 0.0
    %1798 = vmatprep.subr.mxu0 0.0
    %1799 = vmatpush1.msra.mxu0 0.0
    %1800 = vmatprep.subr.mxu0 0.0
    %1801 = vmatpush1.msra.mxu0 0.0
    %1802 = vmatprep.subr.mxu0 0.0
    %1803 = vmatpush1.msra.mxu0 0.0
    %1804 = vmatprep.subr.mxu0 0.0
    %1805 = vmatpush1.msra.mxu0 0.0
    %1806 = vmatprep.subr.mxu0 0.0
    %1807 = vmatpush1.msra.mxu0 0.0
    %1808 = vmatprep.subr.mxu0 0.0
    %1809 = vmatpush1.msra.mxu0 0.0
    %1810 = vmatprep.subr.mxu0 0.0
    %1811 = vmatpush1.msra.mxu0 0.0
    %1812 = vmatprep.subr.mxu0 0.0
    %1813 = vmatpush1.msra.mxu0 0.0
    %1814 = vmatprep.subr.mxu0 0.0
    %1815 = vmatpush1.msra.mxu0 %v1727
    %1816 = vmatprep.subr.mxu0 0.0
    %1817 = vmatpush1.msra.mxu0 %v1726
    %1818 = vmatprep.subr.mxu0 0.0
    %1819 = vmatpush2.msra.mxu0 0.0
    %1820 = vmatprep.subr.mxu0 0.0
    %1821 = vmatpush2.msra.mxu0 0.0
    %1822 = vmatprep.subr.mxu0 0.0
    %1823 = vmatpush2.msra.mxu0 0.0
    %1824 = vmatprep.subr.mxu0 0.0
    %1825 = vmatpush2.msra.mxu0 0.0
    %1826 = vmatprep.subr.mxu0 0.0
    %1827 = vmatpush2.msra.mxu0 0.0
    %1828 = vmatprep.subr.mxu0 0.0
    %1829 = vmatpush2.msra.mxu0 0.0
    %1830 = vmatprep.subr.mxu0 0.0
    %1831 = vmatpush2.msra.mxu0 0.0
    %1832 = vmatprep.subr.mxu0 0.0
    %1833 = vmatpush2.msra.mxu0 0.0
    %1834 = vmatprep.subr.mxu0 0.0
    %1835 = vmatpush2.msra.mxu0 0.0
    %1836 = vmatprep.subr.mxu0 0.0
    %1837 = vmatpush2.msra.mxu0 0.0
    %1838 = vmatprep.subr.mxu0 0.0
    %1839 = vmatpush2.msra.mxu0 0.0
    %1840 = vmatprep.subr.mxu0 0.0
    %1841 = vmatpush2.msra.mxu0 0.0
    %1842 = vmatprep.subr.mxu0 0.0
    %1843 = vmatpush2.msra.mxu0 0.0
    %1844 = vmatprep.subr.mxu0 0.0
    %1845 = vmatpush2.msra.mxu0 0.0
    %1846 = vmatprep.subr.mxu0 0.0
    %1847 = vmatpush2.msra.mxu0 0.0
    %1848 = vmatprep.subr.mxu0 0.0
    %1849 = vmatpush2.msra.mxu0 0.0
    %1850 = vmatprep.mubr.f32.mxu0 0.0
    %1851 = vmatmul.mubr.f32.gmra.mxu0 %v1745
    %v1852 = vpop.f32.mrf.mxu0
    %v1853 = vadd.f32 0.0, %v1852
    %v1854 = vpop.f32.mrf.mxu0
    %1855 = vmatprep.mubr.f32.mxu0 0.0
    %1856 = vmatmul.mubr.f32.gmra.mxu0 %v1748
    %v1857 = vpop.f32.mrf.mxu0
    %v1858 = vadd.f32 0.0, %v1857
    %v1859 = vpop.f32.mrf.mxu0
    %1860 = vmatprep.mubr.f32.mxu0 0.0
    %1861 = vmatmul.mubr.f32.gmra.mxu0 %v1751
    %v1862 = vpop.f32.mrf.mxu0
    %v1863 = vadd.f32 0.0, %v1862
    %v1864 = vpop.f32.mrf.mxu0
    %1865 = vmatprep.mubr.f32.mxu0 0.0
    %1866 = vmatmul.mubr.f32.gmra.mxu0 %v1754
    %v1867 = vpop.f32.mrf.mxu0
    %v1868 = vadd.f32 0.0, %v1867
    %v1869 = vpop.f32.mrf.mxu0
    %1870 = vmatprep.mubr.f32.mxu0 0.0
    %1871 = vmatmul.mubr.f32.gmra.mxu0 %v1757
    %v1872 = vpop.f32.mrf.mxu0
    %v1873 = vadd.f32 0.0, %v1872
    %v1874 = vpop.f32.mrf.mxu0
    %1875 = vmatprep.mubr.f32.mxu0 0.0
    %1876 = vmatmul.mubr.f32.gmra.mxu0 %v1760
    %v1877 = vpop.f32.mrf.mxu0
    %v1878 = vadd.f32 0.0, %v1877
    %v1879 = vpop.f32.mrf.mxu0
    %1880 = vmatprep.mubr.f32.mxu0 0.0
    %1881 = vmatmul.mubr.f32.gmra.mxu0 %v1763
    %v1882 = vpop.f32.mrf.mxu0
    %v1883 = vadd.f32 0.0, %v1882
    %v1884 = vpop.f32.mrf.mxu0
    %1885 = vmatprep.mubr.f32.mxu0 0.0
    %1886 = vmatmul.mubr.f32.gmra.mxu0 %v1766
    %v1887 = vpop.f32.mrf.mxu0
    %v1888 = vadd.f32 0.0, %v1887
    %v1889 = vpop.f32.mrf.mxu0
    %1890 = vmatprep.mubr.f32.mxu0 0.0
    %1891 = vmatmul.mubr.f32.gmra.mxu0 %v1769
    %v1892 = vpop.f32.mrf.mxu0
    %v1893 = vadd.f32 0.0, %v1892
    %v1894 = vpop.f32.mrf.mxu0
    %1895 = vmatprep.mubr.f32.mxu0 0.0
    %1896 = vmatmul.mubr.f32.gmra.mxu0 %v1772
    %v1897 = vpop.f32.mrf.mxu0
    %v1898 = vadd.f32 0.0, %v1897
    %v1899 = vpop.f32.mrf.mxu0
    %1900 = vmatprep.mubr.f32.mxu0 0.0
    %1901 = vmatmul.mubr.f32.gmra.mxu0 %v1775
    %v1902 = vpop.f32.mrf.mxu0
    %v1903 = vadd.f32 0.0, %v1902
    %v1904 = vpop.f32.mrf.mxu0
    %1905 = vmatprep.mubr.f32.mxu0 0.0
    %1906 = vmatmul.mubr.f32.gmra.mxu0 %v1778
    %v1907 = vpop.f32.mrf.mxu0
    %v1908 = vadd.f32 0.0, %v1907
    %v1909 = vpop.f32.mrf.mxu0
    %1910 = vmatprep.mubr.f32.mxu0 0.0
    %1911 = vmatmul.mubr.f32.gmra.mxu0 %v1781
    %v1912 = vpop.f32.mrf.mxu0
    %v1913 = vadd.f32 0.0, %v1912
    %v1914 = vpop.f32.mrf.mxu0
    %1915 = vmatprep.mubr.f32.mxu0 0.0
    %1916 = vmatmul.mubr.f32.gmra.mxu0 %v1784
    %v1917 = vpop.f32.mrf.mxu0
    %v1918 = vadd.f32 0.0, %v1917
    %v1919 = vpop.f32.mrf.mxu0
    %1920 = vdwg.mxu0
    %v1921 = vld [vmem:[#allocation3] sm:$0xff]
    %v1922 = vld [vmem:[#allocation3 + $0x8] sm:$0xff]
    %v1923 = vld [vmem:[#allocation3 + $0x10] sm:$0xff]
    %v1924 = vld [vmem:[#allocation3 + $0x18] sm:$0xff]
    %s1925 = scalar_lea.vmem [#allocation3], 32
    %v1926 = vld [vmem:[%s1925] sm:$0xff]
    %v1927 = vld [vmem:[%s1925 + $0x8] sm:$0xff]
    %v1928 = vld [vmem:[%s1925 + $0x10] sm:$0xff]
    %v1929 = vld [vmem:[%s1925 + $0x18] sm:$0xff]
    %v1931 = vsel %vm1656, %v1863, 0
    %v1934 = vsel %vm1656, %v1868, 0
    %1936 = vmatprep.subr.mxu0 0.0
    %1937 = vmatpush1.msra.mxu0 0.0
    %1938 = vmatprep.subr.mxu0 0.0
    %1939 = vmatpush1.msra.mxu0 0.0
    %1940 = vmatprep.subr.mxu0 0.0
    %1941 = vmatpush1.msra.mxu0 0.0
    %1942 = vmatprep.subr.mxu0 0.0
    %1943 = vmatpush1.msra.mxu0 0.0
    %1944 = vmatprep.subr.mxu0 0.0
    %1945 = vmatpush1.msra.mxu0 0.0
    %1946 = vmatprep.subr.mxu0 0.0
    %1947 = vmatpush1.msra.mxu0 0.0
    %1948 = vmatprep.subr.mxu0 0.0
    %1949 = vmatpush1.msra.mxu0 0.0
    %1950 = vmatprep.subr.mxu0 0.0
    %1951 = vmatpush1.msra.mxu0 0.0
    %1952 = vmatprep.subr.mxu0 0.0
    %1953 = vmatpush1.msra.mxu0 0.0
    %1954 = vmatprep.subr.mxu0 0.0
    %1955 = vmatpush1.msra.mxu0 0.0
    %1956 = vmatprep.subr.mxu0 0.0
    %1957 = vmatpush1.msra.mxu0 0.0
    %1958 = vmatprep.subr.mxu0 0.0
    %1959 = vmatpush1.msra.mxu0 0.0
    %1960 = vmatprep.subr.mxu0 0.0
    %1961 = vmatpush1.msra.mxu0 %v1929
    %1962 = vmatprep.subr.mxu0 0.0
    %1963 = vmatpush1.msra.mxu0 %v1928
    %1964 = vmatprep.subr.mxu0 0.0
    %1965 = vmatpush1.msra.mxu0 %v1927
    %1966 = vmatprep.subr.mxu0 0.0
    %1967 = vmatpush1.msra.mxu0 %v1926
    %1968 = vmatprep.subr.mxu0 0.0
    %1969 = vmatpush2.msra.mxu0 0.0
    %1970 = vmatprep.subr.mxu0 0.0
    %1971 = vmatpush2.msra.mxu0 0.0
    %1972 = vmatprep.subr.mxu0 0.0
    %1973 = vmatpush2.msra.mxu0 0.0
    %1974 = vmatprep.subr.mxu0 0.0
    %1975 = vmatpush2.msra.mxu0 0.0
    %1976 = vmatprep.subr.mxu0 0.0
    %1977 = vmatpush2.msra.mxu0 0.0
    %1978 = vmatprep.subr.mxu0 0.0
    %1979 = vmatpush2.msra.mxu0 0.0
    %1980 = vmatprep.subr.mxu0 0.0
    %1981 = vmatpush2.msra.mxu0 0.0
    %1982 = vmatprep.subr.mxu0 0.0
    %1983 = vmatpush2.msra.mxu0 0.0
    %1984 = vmatprep.subr.mxu0 0.0
    %1985 = vmatpush2.msra.mxu0 0.0
    %1986 = vmatprep.subr.mxu0 0.0
    %1987 = vmatpush2.msra.mxu0 0.0
    %1988 = vmatprep.subr.mxu0 0.0
    %1989 = vmatpush2.msra.mxu0 0.0
    %1990 = vmatprep.subr.mxu0 0.0
    %1991 = vmatpush2.msra.mxu0 0.0
    %1992 = vmatprep.subr.mxu0 0.0
    %1993 = vmatpush2.msra.mxu0 0.0
    %1994 = vmatprep.subr.mxu0 0.0
    %1995 = vmatpush2.msra.mxu0 0.0
    %1996 = vmatprep.subr.mxu0 0.0
    %1997 = vmatpush2.msra.mxu0 0.0
    %1998 = vmatprep.subr.mxu0 0.0
    %1999 = vmatpush2.msra.mxu0 0.0
    %2000 = vmatprep.mubr.f32.mxu0 0.0
    %2001 = vmatmul.mubr.f32.gmra.mxu0 %v1931
    %v2002 = vpop.f32.mrf.mxu0
    %v2003 = vadd.f32 0.0, %v2002
    %v2004 = vpop.f32.mrf.mxu0
    %2005 = vmatprep.mubr.f32.mxu0 0.0
    %2006 = vmatmul.mubr.f32.gmra.mxu0 %v1934
    %v2007 = vpop.f32.mrf.mxu0
    %v2008 = vadd.f32 0.0, %v2007
    %v2009 = vpop.f32.mrf.mxu0
    %2010 = vdwg.mxu0
    %v2012 = vsel %vm1656, %v1853, 0
    %v2015 = vsel %vm1656, %v1858, 0
    %2017 = vmatprep.subr.mxu0 0.0
    %2018 = vmatpush1.msra.mxu0 0.0
    %2019 = vmatprep.subr.mxu0 0.0
    %2020 = vmatpush1.msra.mxu0 0.0
    %2021 = vmatprep.subr.mxu0 0.0
    %2022 = vmatpush1.msra.mxu0 0.0
    %2023 = vmatprep.subr.mxu0 0.0
    %2024 = vmatpush1.msra.mxu0 0.0
    %2025 = vmatprep.subr.mxu0 0.0
    %2026 = vmatpush1.msra.mxu0 0.0
    %2027 = vmatprep.subr.mxu0 0.0
    %2028 = vmatpush1.msra.mxu0 0.0
    %2029 = vmatprep.subr.mxu0 0.0
    %2030 = vmatpush1.msra.mxu0 0.0
    %2031 = vmatprep.subr.mxu0 0.0
    %2032 = vmatpush1.msra.mxu0 0.0
    %2033 = vmatprep.subr.mxu0 0.0
    %2034 = vmatpush1.msra.mxu0 0.0
    %2035 = vmatprep.subr.mxu0 0.0
    %2036 = vmatpush1.msra.mxu0 0.0
    %2037 = vmatprep.subr.mxu0 0.0
    %2038 = vmatpush1.msra.mxu0 0.0
    %2039 = vmatprep.subr.mxu0 0.0
    %2040 = vmatpush1.msra.mxu0 0.0
    %2041 = vmatprep.subr.mxu0 0.0
    %2042 = vmatpush1.msra.mxu0 %v1924
    %2043 = vmatprep.subr.mxu0 0.0
    %2044 = vmatpush1.msra.mxu0 %v1923
    %2045 = vmatprep.subr.mxu0 0.0
    %2046 = vmatpush1.msra.mxu0 %v1922
    %2047 = vmatprep.subr.mxu0 0.0
    %2048 = vmatpush1.msra.mxu0 %v1921
    %2049 = vmatprep.subr.mxu0 0.0
    %2050 = vmatpush2.msra.mxu0 0.0
    %2051 = vmatprep.subr.mxu0 0.0
    %2052 = vmatpush2.msra.mxu0 0.0
    %2053 = vmatprep.subr.mxu0 0.0
    %2054 = vmatpush2.msra.mxu0 0.0
    %2055 = vmatprep.subr.mxu0 0.0
    %2056 = vmatpush2.msra.mxu0 0.0
    %2057 = vmatprep.subr.mxu0 0.0
    %2058 = vmatpush2.msra.mxu0 0.0
    %2059 = vmatprep.subr.mxu0 0.0
    %2060 = vmatpush2.msra.mxu0 0.0
    %2061 = vmatprep.subr.mxu0 0.0
    %2062 = vmatpush2.msra.mxu0 0.0
    %2063 = vmatprep.subr.mxu0 0.0
    %2064 = vmatpush2.msra.mxu0 0.0
    %2065 = vmatprep.subr.mxu0 0.0
    %2066 = vmatpush2.msra.mxu0 0.0
    %2067 = vmatprep.subr.mxu0 0.0
    %2068 = vmatpush2.msra.mxu0 0.0
    %2069 = vmatprep.subr.mxu0 0.0
    %2070 = vmatpush2.msra.mxu0 0.0
    %2071 = vmatprep.subr.mxu0 0.0
    %2072 = vmatpush2.msra.mxu0 0.0
    %2073 = vmatprep.subr.mxu0 0.0
    %2074 = vmatpush2.msra.mxu0 0.0
    %2075 = vmatprep.subr.mxu0 0.0
    %2076 = vmatpush2.msra.mxu0 0.0
    %2077 = vmatprep.subr.mxu0 0.0
    %2078 = vmatpush2.msra.mxu0 0.0
    %2079 = vmatprep.subr.mxu0 0.0
    %2080 = vmatpush2.msra.mxu0 0.0
    %2081 = vmatprep.mubr.f32.mxu0 0.0
    %2082 = vmatmul.mubr.f32.gmra.mxu0 %v2012
    %v2083 = vpop.f32.mrf.mxu0
    %v2084 = vadd.f32 %v2003, %v2083
    %v2085 = vpop.f32.mrf.mxu0
    %2086 = vmatprep.mubr.f32.mxu0 0.0
    %2087 = vmatmul.mubr.f32.gmra.mxu0 %v2015
    %v2088 = vpop.f32.mrf.mxu0
    %v2089 = vadd.f32 %v2008, %v2088
    %v2090 = vpop.f32.mrf.mxu0
    %2091 = vdwg.mxu0
    %s2092 = scalar_lea.vmem [#allocation3], 64
    %v2093 = vld [vmem:[%s2092] sm:$0xff]
    %v2094 = vld [vmem:[%s2092 + $0x8] sm:$0xff]
    %v2095 = vld [vmem:[%s2092 + $0x10] sm:$0xff]
    %v2096 = vld [vmem:[%s2092 + $0x18] sm:$0xff]
    %v2098 = vsel %vm1656, %v1873, 0
    %v2101 = vsel %vm1656, %v1878, 0
    %2103 = vmatprep.subr.mxu0 0.0
    %2104 = vmatpush1.msra.mxu0 0.0
    %2105 = vmatprep.subr.mxu0 0.0
    %2106 = vmatpush1.msra.mxu0 0.0
    %2107 = vmatprep.subr.mxu0 0.0
    %2108 = vmatpush1.msra.mxu0 0.0
    %2109 = vmatprep.subr.mxu0 0.0
    %2110 = vmatpush1.msra.mxu0 0.0
    %2111 = vmatprep.subr.mxu0 0.0
    %2112 = vmatpush1.msra.mxu0 0.0
    %2113 = vmatprep.subr.mxu0 0.0
    %2114 = vmatpush1.msra.mxu0 0.0
    %2115 = vmatprep.subr.mxu0 0.0
    %2116 = vmatpush1.msra.mxu0 0.0
    %2117 = vmatprep.subr.mxu0 0.0
    %2118 = vmatpush1.msra.mxu0 0.0
    %2119 = vmatprep.subr.mxu0 0.0
    %2120 = vmatpush1.msra.mxu0 0.0
    %2121 = vmatprep.subr.mxu0 0.0
    %2122 = vmatpush1.msra.mxu0 0.0
    %2123 = vmatprep.subr.mxu0 0.0
    %2124 = vmatpush1.msra.mxu0 0.0
    %2125 = vmatprep.subr.mxu0 0.0
    %2126 = vmatpush1.msra.mxu0 0.0
    %2127 = vmatprep.subr.mxu0 0.0
    %2128 = vmatpush1.msra.mxu0 %v2096
    %2129 = vmatprep.subr.mxu0 0.0
    %2130 = vmatpush1.msra.mxu0 %v2095
    %2131 = vmatprep.subr.mxu0 0.0
    %2132 = vmatpush1.msra.mxu0 %v2094
    %2133 = vmatprep.subr.mxu0 0.0
    %2134 = vmatpush1.msra.mxu0 %v2093
    %2135 = vmatprep.subr.mxu0 0.0
    %2136 = vmatpush2.msra.mxu0 0.0
    %2137 = vmatprep.subr.mxu0 0.0
    %2138 = vmatpush2.msra.mxu0 0.0
    %2139 = vmatprep.subr.mxu0 0.0
    %2140 = vmatpush2.msra.mxu0 0.0
    %2141 = vmatprep.subr.mxu0 0.0
    %2142 = vmatpush2.msra.mxu0 0.0
    %2143 = vmatprep.subr.mxu0 0.0
    %2144 = vmatpush2.msra.mxu0 0.0
    %2145 = vmatprep.subr.mxu0 0.0
    %2146 = vmatpush2.msra.mxu0 0.0
    %2147 = vmatprep.subr.mxu0 0.0
    %2148 = vmatpush2.msra.mxu0 0.0
    %2149 = vmatprep.subr.mxu0 0.0
    %2150 = vmatpush2.msra.mxu0 0.0
    %2151 = vmatprep.subr.mxu0 0.0
    %2152 = vmatpush2.msra.mxu0 0.0
    %2153 = vmatprep.subr.mxu0 0.0
    %2154 = vmatpush2.msra.mxu0 0.0
    %2155 = vmatprep.subr.mxu0 0.0
    %2156 = vmatpush2.msra.mxu0 0.0
    %2157 = vmatprep.subr.mxu0 0.0
    %2158 = vmatpush2.msra.mxu0 0.0
    %2159 = vmatprep.subr.mxu0 0.0
    %2160 = vmatpush2.msra.mxu0 0.0
    %2161 = vmatprep.subr.mxu0 0.0
    %2162 = vmatpush2.msra.mxu0 0.0
    %2163 = vmatprep.subr.mxu0 0.0
    %2164 = vmatpush2.msra.mxu0 0.0
    %2165 = vmatprep.subr.mxu0 0.0
    %2166 = vmatpush2.msra.mxu0 0.0
    %2167 = vmatprep.mubr.f32.mxu0 0.0
    %2168 = vmatmul.mubr.f32.gmra.mxu0 %v2098
    %v2169 = vpop.f32.mrf.mxu0
    %v2170 = vadd.f32 0.0, %v2169
    %v2171 = vpop.f32.mrf.mxu0
    %2172 = vmatprep.mubr.f32.mxu0 0.0
    %2173 = vmatmul.mubr.f32.gmra.mxu0 %v2101
    %v2174 = vpop.f32.mrf.mxu0
    %v2175 = vadd.f32 0.0, %v2174
    %v2176 = vpop.f32.mrf.mxu0
    %2177 = vdwg.mxu0
    %v2178 = vadd.f32 %v2084, %v2170
    %v2179 = vadd.f32 %v2089, %v2175
    %s2180 = scalar_lea.vmem [#allocation3], 96
    %v2181 = vld [vmem:[%s2180] sm:$0xff]
    %v2182 = vld [vmem:[%s2180 + $0x8] sm:$0xff]
    %v2183 = vld [vmem:[%s2180 + $0x10] sm:$0xff]
    %v2184 = vld [vmem:[%s2180 + $0x18] sm:$0xff]
    %v2186 = vsel %vm1656, %v1883, 0
    %v2189 = vsel %vm1656, %v1888, 0
    %2191 = vmatprep.subr.mxu0 0.0
    %2192 = vmatpush1.msra.mxu0 0.0
    %2193 = vmatprep.subr.mxu0 0.0
    %2194 = vmatpush1.msra.mxu0 0.0
    %2195 = vmatprep.subr.mxu0 0.0
    %2196 = vmatpush1.msra.mxu0 0.0
    %2197 = vmatprep.subr.mxu0 0.0
    %2198 = vmatpush1.msra.mxu0 0.0
    %2199 = vmatprep.subr.mxu0 0.0
    %2200 = vmatpush1.msra.mxu0 0.0
    %2201 = vmatprep.subr.mxu0 0.0
    %2202 = vmatpush1.msra.mxu0 0.0
    %2203 = vmatprep.subr.mxu0 0.0
    %2204 = vmatpush1.msra.mxu0 0.0
    %2205 = vmatprep.subr.mxu0 0.0
    %2206 = vmatpush1.msra.mxu0 0.0
    %2207 = vmatprep.subr.mxu0 0.0
    %2208 = vmatpush1.msra.mxu0 0.0
    %2209 = vmatprep.subr.mxu0 0.0
    %2210 = vmatpush1.msra.mxu0 0.0
    %2211 = vmatprep.subr.mxu0 0.0
    %2212 = vmatpush1.msra.mxu0 0.0
    %2213 = vmatprep.subr.mxu0 0.0
    %2214 = vmatpush1.msra.mxu0 0.0
    %2215 = vmatprep.subr.mxu0 0.0
    %2216 = vmatpush1.msra.mxu0 %v2184
    %2217 = vmatprep.subr.mxu0 0.0
    %2218 = vmatpush1.msra.mxu0 %v2183
    %2219 = vmatprep.subr.mxu0 0.0
    %2220 = vmatpush1.msra.mxu0 %v2182
    %2221 = vmatprep.subr.mxu0 0.0
    %2222 = vmatpush1.msra.mxu0 %v2181
    %2223 = vmatprep.subr.mxu0 0.0
    %2224 = vmatpush2.msra.mxu0 0.0
    %2225 = vmatprep.subr.mxu0 0.0
    %2226 = vmatpush2.msra.mxu0 0.0
    %2227 = vmatprep.subr.mxu0 0.0
    %2228 = vmatpush2.msra.mxu0 0.0
    %2229 = vmatprep.subr.mxu0 0.0
    %2230 = vmatpush2.msra.mxu0 0.0
    %2231 = vmatprep.subr.mxu0 0.0
    %2232 = vmatpush2.msra.mxu0 0.0
    %2233 = vmatprep.subr.mxu0 0.0
    %2234 = vmatpush2.msra.mxu0 0.0
    %2235 = vmatprep.subr.mxu0 0.0
    %2236 = vmatpush2.msra.mxu0 0.0
    %2237 = vmatprep.subr.mxu0 0.0
    %2238 = vmatpush2.msra.mxu0 0.0
    %2239 = vmatprep.subr.mxu0 0.0
    %2240 = vmatpush2.msra.mxu0 0.0
    %2241 = vmatprep.subr.mxu0 0.0
    %2242 = vmatpush2.msra.mxu0 0.0
    %2243 = vmatprep.subr.mxu0 0.0
    %2244 = vmatpush2.msra.mxu0 0.0
    %2245 = vmatprep.subr.mxu0 0.0
    %2246 = vmatpush2.msra.mxu0 0.0
    %2247 = vmatprep.subr.mxu0 0.0
    %2248 = vmatpush2.msra.mxu0 0.0
    %2249 = vmatprep.subr.mxu0 0.0
    %2250 = vmatpush2.msra.mxu0 0.0
    %2251 = vmatprep.subr.mxu0 0.0
    %2252 = vmatpush2.msra.mxu0 0.0
    %2253 = vmatprep.subr.mxu0 0.0
    %2254 = vmatpush2.msra.mxu0 0.0
    %2255 = vmatprep.mubr.f32.mxu0 0.0
    %2256 = vmatmul.mubr.f32.gmra.mxu0 %v2186
    %v2257 = vpop.f32.mrf.mxu0
    %v2258 = vadd.f32 0.0, %v2257
    %v2259 = vpop.f32.mrf.mxu0
    %2260 = vmatprep.mubr.f32.mxu0 0.0
    %2261 = vmatmul.mubr.f32.gmra.mxu0 %v2189
    %v2262 = vpop.f32.mrf.mxu0
    %v2263 = vadd.f32 0.0, %v2262
    %v2264 = vpop.f32.mrf.mxu0
    %2265 = vdwg.mxu0
    %v2266 = vadd.f32 %v2178, %v2258
    %v2267 = vadd.f32 %v2179, %v2263
    %s2268 = scalar_lea.vmem [#allocation3], 128
    %v2269 = vld [vmem:[%s2268] sm:$0xff]
    %v2270 = vld [vmem:[%s2268 + $0x8] sm:$0xff]
    %v2271 = vld [vmem:[%s2268 + $0x10] sm:$0xff]
    %v2272 = vld [vmem:[%s2268 + $0x18] sm:$0xff]
    %v2274 = vsel %vm1656, %v1893, 0
    %v2277 = vsel %vm1656, %v1898, 0
    %2279 = vmatprep.subr.mxu0 0.0
    %2280 = vmatpush1.msra.mxu0 0.0
    %2281 = vmatprep.subr.mxu0 0.0
    %2282 = vmatpush1.msra.mxu0 0.0
    %2283 = vmatprep.subr.mxu0 0.0
    %2284 = vmatpush1.msra.mxu0 0.0
    %2285 = vmatprep.subr.mxu0 0.0
    %2286 = vmatpush1.msra.mxu0 0.0
    %2287 = vmatprep.subr.mxu0 0.0
    %2288 = vmatpush1.msra.mxu0 0.0
    %2289 = vmatprep.subr.mxu0 0.0
    %2290 = vmatpush1.msra.mxu0 0.0
    %2291 = vmatprep.subr.mxu0 0.0
    %2292 = vmatpush1.msra.mxu0 0.0
    %2293 = vmatprep.subr.mxu0 0.0
    %2294 = vmatpush1.msra.mxu0 0.0
    %2295 = vmatprep.subr.mxu0 0.0
    %2296 = vmatpush1.msra.mxu0 0.0
    %2297 = vmatprep.subr.mxu0 0.0
    %2298 = vmatpush1.msra.mxu0 0.0
    %2299 = vmatprep.subr.mxu0 0.0
    %2300 = vmatpush1.msra.mxu0 0.0
    %2301 = vmatprep.subr.mxu0 0.0
    %2302 = vmatpush1.msra.mxu0 0.0
    %2303 = vmatprep.subr.mxu0 0.0
    %2304 = vmatpush1.msra.mxu0 %v2272
    %2305 = vmatprep.subr.mxu0 0.0
    %2306 = vmatpush1.msra.mxu0 %v2271
    %2307 = vmatprep.subr.mxu0 0.0
    %2308 = vmatpush1.msra.mxu0 %v2270
    %2309 = vmatprep.subr.mxu0 0.0
    %2310 = vmatpush1.msra.mxu0 %v2269
    %2311 = vmatprep.subr.mxu0 0.0
    %2312 = vmatpush2.msra.mxu0 0.0
    %2313 = vmatprep.subr.mxu0 0.0
    %2314 = vmatpush2.msra.mxu0 0.0
    %2315 = vmatprep.subr.mxu0 0.0
    %2316 = vmatpush2.msra.mxu0 0.0
    %2317 = vmatprep.subr.mxu0 0.0
    %2318 = vmatpush2.msra.mxu0 0.0
    %2319 = vmatprep.subr.mxu0 0.0
    %2320 = vmatpush2.msra.mxu0 0.0
    %2321 = vmatprep.subr.mxu0 0.0
    %2322 = vmatpush2.msra.mxu0 0.0
    %2323 = vmatprep.subr.mxu0 0.0
    %2324 = vmatpush2.msra.mxu0 0.0
    %2325 = vmatprep.subr.mxu0 0.0
    %2326 = vmatpush2.msra.mxu0 0.0
    %2327 = vmatprep.subr.mxu0 0.0
    %2328 = vmatpush2.msra.mxu0 0.0
    %2329 = vmatprep.subr.mxu0 0.0
    %2330 = vmatpush2.msra.mxu0 0.0
    %2331 = vmatprep.subr.mxu0 0.0
    %2332 = vmatpush2.msra.mxu0 0.0
    %2333 = vmatprep.subr.mxu0 0.0
    %2334 = vmatpush2.msra.mxu0 0.0
    %2335 = vmatprep.subr.mxu0 0.0
    %2336 = vmatpush2.msra.mxu0 0.0
    %2337 = vmatprep.subr.mxu0 0.0
    %2338 = vmatpush2.msra.mxu0 0.0
    %2339 = vmatprep.subr.mxu0 0.0
    %2340 = vmatpush2.msra.mxu0 0.0
    %2341 = vmatprep.subr.mxu0 0.0
    %2342 = vmatpush2.msra.mxu0 0.0
    %2343 = vmatprep.mubr.f32.mxu0 0.0
    %2344 = vmatmul.mubr.f32.gmra.mxu0 %v2274
    %v2345 = vpop.f32.mrf.mxu0
    %v2346 = vadd.f32 0.0, %v2345
    %v2347 = vpop.f32.mrf.mxu0
    %2348 = vmatprep.mubr.f32.mxu0 0.0
    %2349 = vmatmul.mubr.f32.gmra.mxu0 %v2277
    %v2350 = vpop.f32.mrf.mxu0
    %v2351 = vadd.f32 0.0, %v2350
    %v2352 = vpop.f32.mrf.mxu0
    %2353 = vdwg.mxu0
    %v2354 = vadd.f32 %v2266, %v2346
    %v2355 = vadd.f32 %v2267, %v2351
    %s2356 = scalar_lea.vmem [#allocation3], 160
    %v2357 = vld [vmem:[%s2356] sm:$0xff]
    %v2358 = vld [vmem:[%s2356 + $0x8] sm:$0xff]
    %v2359 = vld [vmem:[%s2356 + $0x10] sm:$0xff]
    %v2360 = vld [vmem:[%s2356 + $0x18] sm:$0xff]
    %v2362 = vsel %vm1656, %v1903, 0
    %v2365 = vsel %vm1656, %v1908, 0
    %2367 = vmatprep.subr.mxu0 0.0
    %2368 = vmatpush1.msra.mxu0 0.0
    %2369 = vmatprep.subr.mxu0 0.0
    %2370 = vmatpush1.msra.mxu0 0.0
    %2371 = vmatprep.subr.mxu0 0.0
    %2372 = vmatpush1.msra.mxu0 0.0
    %2373 = vmatprep.subr.mxu0 0.0
    %2374 = vmatpush1.msra.mxu0 0.0
    %2375 = vmatprep.subr.mxu0 0.0
    %2376 = vmatpush1.msra.mxu0 0.0
    %2377 = vmatprep.subr.mxu0 0.0
    %2378 = vmatpush1.msra.mxu0 0.0
    %2379 = vmatprep.subr.mxu0 0.0
    %2380 = vmatpush1.msra.mxu0 0.0
    %2381 = vmatprep.subr.mxu0 0.0
    %2382 = vmatpush1.msra.mxu0 0.0
    %2383 = vmatprep.subr.mxu0 0.0
    %2384 = vmatpush1.msra.mxu0 0.0
    %2385 = vmatprep.subr.mxu0 0.0
    %2386 = vmatpush1.msra.mxu0 0.0
    %2387 = vmatprep.subr.mxu0 0.0
    %2388 = vmatpush1.msra.mxu0 0.0
    %2389 = vmatprep.subr.mxu0 0.0
    %2390 = vmatpush1.msra.mxu0 0.0
    %2391 = vmatprep.subr.mxu0 0.0
    %2392 = vmatpush1.msra.mxu0 %v2360
    %2393 = vmatprep.subr.mxu0 0.0
    %2394 = vmatpush1.msra.mxu0 %v2359
    %2395 = vmatprep.subr.mxu0 0.0
    %2396 = vmatpush1.msra.mxu0 %v2358
    %2397 = vmatprep.subr.mxu0 0.0
    %2398 = vmatpush1.msra.mxu0 %v2357
    %2399 = vmatprep.subr.mxu0 0.0
    %2400 = vmatpush2.msra.mxu0 0.0
    %2401 = vmatprep.subr.mxu0 0.0
    %2402 = vmatpush2.msra.mxu0 0.0
    %2403 = vmatprep.subr.mxu0 0.0
    %2404 = vmatpush2.msra.mxu0 0.0
    %2405 = vmatprep.subr.mxu0 0.0
    %2406 = vmatpush2.msra.mxu0 0.0
    %2407 = vmatprep.subr.mxu0 0.0
    %2408 = vmatpush2.msra.mxu0 0.0
    %2409 = vmatprep.subr.mxu0 0.0
    %2410 = vmatpush2.msra.mxu0 0.0
    %2411 = vmatprep.subr.mxu0 0.0
    %2412 = vmatpush2.msra.mxu0 0.0
    %2413 = vmatprep.subr.mxu0 0.0
    %2414 = vmatpush2.msra.mxu0 0.0
    %2415 = vmatprep.subr.mxu0 0.0
    %2416 = vmatpush2.msra.mxu0 0.0
    %2417 = vmatprep.subr.mxu0 0.0
    %2418 = vmatpush2.msra.mxu0 0.0
    %2419 = vmatprep.subr.mxu0 0.0
    %2420 = vmatpush2.msra.mxu0 0.0
    %2421 = vmatprep.subr.mxu0 0.0
    %2422 = vmatpush2.msra.mxu0 0.0
    %2423 = vmatprep.subr.mxu0 0.0
    %2424 = vmatpush2.msra.mxu0 0.0
    %2425 = vmatprep.subr.mxu0 0.0
    %2426 = vmatpush2.msra.mxu0 0.0
    %2427 = vmatprep.subr.mxu0 0.0
    %2428 = vmatpush2.msra.mxu0 0.0
    %2429 = vmatprep.subr.mxu0 0.0
    %2430 = vmatpush2.msra.mxu0 0.0
    %2431 = vmatprep.mubr.f32.mxu0 0.0
    %2432 = vmatmul.mubr.f32.gmra.mxu0 %v2362
    %v2433 = vpop.f32.mrf.mxu0
    %v2434 = vadd.f32 0.0, %v2433
    %v2435 = vpop.f32.mrf.mxu0
    %2436 = vmatprep.mubr.f32.mxu0 0.0
    %2437 = vmatmul.mubr.f32.gmra.mxu0 %v2365
    %v2438 = vpop.f32.mrf.mxu0
    %v2439 = vadd.f32 0.0, %v2438
    %v2440 = vpop.f32.mrf.mxu0
    %2441 = vdwg.mxu0
    %v2442 = vadd.f32 %v2354, %v2434
    %v2443 = vadd.f32 %v2355, %v2439
    %s2444 = scalar_lea.vmem [#allocation3], 192
    %v2445 = vld [vmem:[%s2444] sm:$0xff]
    %v2446 = vld [vmem:[%s2444 + $0x8] sm:$0xff]
    %v2447 = vld [vmem:[%s2444 + $0x10] sm:$0xff]
    %v2448 = vld [vmem:[%s2444 + $0x18] sm:$0xff]
    %v2450 = vsel %vm1656, %v1913, 0
    %v2453 = vsel %vm1656, %v1918, 0
    %2455 = vmatprep.subr.mxu0 0.0
    %2456 = vmatpush1.msra.mxu0 0.0
    %2457 = vmatprep.subr.mxu0 0.0
    %2458 = vmatpush1.msra.mxu0 0.0
    %2459 = vmatprep.subr.mxu0 0.0
    %2460 = vmatpush1.msra.mxu0 0.0
    %2461 = vmatprep.subr.mxu0 0.0
    %2462 = vmatpush1.msra.mxu0 0.0
    %2463 = vmatprep.subr.mxu0 0.0
    %2464 = vmatpush1.msra.mxu0 0.0
    %2465 = vmatprep.subr.mxu0 0.0
    %2466 = vmatpush1.msra.mxu0 0.0
    %2467 = vmatprep.subr.mxu0 0.0
    %2468 = vmatpush1.msra.mxu0 0.0
    %2469 = vmatprep.subr.mxu0 0.0
    %2470 = vmatpush1.msra.mxu0 0.0
    %2471 = vmatprep.subr.mxu0 0.0
    %2472 = vmatpush1.msra.mxu0 0.0
    %2473 = vmatprep.subr.mxu0 0.0
    %2474 = vmatpush1.msra.mxu0 0.0
    %2475 = vmatprep.subr.mxu0 0.0
    %2476 = vmatpush1.msra.mxu0 0.0
    %2477 = vmatprep.subr.mxu0 0.0
    %2478 = vmatpush1.msra.mxu0 0.0
    %2479 = vmatprep.subr.mxu0 0.0
    %2480 = vmatpush1.msra.mxu0 %v2448
    %2481 = vmatprep.subr.mxu0 0.0
    %2482 = vmatpush1.msra.mxu0 %v2447
    %2483 = vmatprep.subr.mxu0 0.0
    %2484 = vmatpush1.msra.mxu0 %v2446
    %2485 = vmatprep.subr.mxu0 0.0
    %2486 = vmatpush1.msra.mxu0 %v2445
    %2487 = vmatprep.subr.mxu0 0.0
    %2488 = vmatpush2.msra.mxu0 0.0
    %2489 = vmatprep.subr.mxu0 0.0
    %2490 = vmatpush2.msra.mxu0 0.0
    %2491 = vmatprep.subr.mxu0 0.0
    %2492 = vmatpush2.msra.mxu0 0.0
    %2493 = vmatprep.subr.mxu0 0.0
    %2494 = vmatpush2.msra.mxu0 0.0
    %2495 = vmatprep.subr.mxu0 0.0
    %2496 = vmatpush2.msra.mxu0 0.0
    %2497 = vmatprep.subr.mxu0 0.0
    %2498 = vmatpush2.msra.mxu0 0.0
    %2499 = vmatprep.subr.mxu0 0.0
    %2500 = vmatpush2.msra.mxu0 0.0
    %2501 = vmatprep.subr.mxu0 0.0
    %2502 = vmatpush2.msra.mxu0 0.0
    %2503 = vmatprep.subr.mxu0 0.0
    %2504 = vmatpush2.msra.mxu0 0.0
    %2505 = vmatprep.subr.mxu0 0.0
    %2506 = vmatpush2.msra.mxu0 0.0
    %2507 = vmatprep.subr.mxu0 0.0
    %2508 = vmatpush2.msra.mxu0 0.0
    %2509 = vmatprep.subr.mxu0 0.0
    %2510 = vmatpush2.msra.mxu0 0.0
    %2511 = vmatprep.subr.mxu0 0.0
    %2512 = vmatpush2.msra.mxu0 0.0
    %2513 = vmatprep.subr.mxu0 0.0
    %2514 = vmatpush2.msra.mxu0 0.0
    %2515 = vmatprep.subr.mxu0 0.0
    %2516 = vmatpush2.msra.mxu0 0.0
    %2517 = vmatprep.subr.mxu0 0.0
    %2518 = vmatpush2.msra.mxu0 0.0
    %2519 = vmatprep.mubr.f32.mxu0 0.0
    %2520 = vmatmul.mubr.f32.gmra.mxu0 %v2450
    %v2521 = vpop.f32.mrf.mxu0
    %v2522 = vadd.f32 0.0, %v2521
    %v2523 = vpop.f32.mrf.mxu0
    %2524 = vmatprep.mubr.f32.mxu0 0.0
    %2525 = vmatmul.mubr.f32.gmra.mxu0 %v2453
    %v2526 = vpop.f32.mrf.mxu0
    %v2527 = vadd.f32 0.0, %v2526
    %v2528 = vpop.f32.mrf.mxu0
    %2529 = vdwg.mxu0
    %v2530 = vadd.f32 %v2442, %v2522
    %v2531 = vadd.f32 %v2443, %v2527
    %2533 = vset.pattern.permute.xlu0 0
    %2534 = vperm.xlu0 %2533, %v1742
    %v2535 = vpop.permute.xlu0 %2534
    %2538 = vset.pattern.permute.xlu0 0
    %2539 = vperm.xlu0 %2538, %v1743
    %v2540 = vpop.permute.xlu0 %2539
    %v2542 = vadd.f32 %v2530, %v2535
    %v2543 = vadd.f32 %v2531, %v2540
    %v2544 = vsel %vm1656, %v2542, 0.0
    %2545 = vadd.xlane.f32.xlu0 %v2544
    %v2546 = vpop.xlane.xlu0 %2545
    %v2547 = vsel %vm1656, %v2543, 0.0
    %2548 = vadd.xlane.f32.xlu0 %v2547
    %v2549 = vpop.xlane.xlu0 %2548
    %v2550 = vmul.f32 %v2546, %v1663
    %v2551 = vmul.f32 %v2549, %v1663
    %v2552 = vsub.f32 %v2542, %v2550
    %v2553 = vsub.f32 %v2543, %v2551
    %v2554 = vmul.f32 %v2552, %v2552
    %v2555 = vmul.f32 %v2553, %v2553
    %v2556 = vsel %vm1656, %v2554, 0.0
    %2557 = vadd.xlane.f32.xlu0 %v2556
    %v2558 = vpop.xlane.xlu0 %2557
    %v2559 = vsel %vm1656, %v2555, 0.0
    %2560 = vadd.xlane.f32.xlu0 %v2559
    %v2561 = vpop.xlane.xlu0 %2560
    %v2562 = vmul.f32 %v2558, %v1663
    %v2563 = vmul.f32 %v2561, %v1663
    %v2564 = vadd.f32 %v2562, 1e-05
    %v2565 = vadd.f32 %v2563, 1e-05
    %v2566 = vrsqrt.pop %v2564
    %v2567 = vrsqrt.pop %v2565
    %v2568 = vmul.f32 %v2552, %v2566
    %v2569 = vmul.f32 %v2553, %v2567
    %v2570 = vld [vmem:[%s17] sm:$0xff]
    %v2571 = vld [vmem:[%s17 + $0x8] sm:$0xff]
    %2573 = vset.pattern.permute.xlu0 0
    %2574 = vperm.xlu0 %2573, %v2570
    %v2575 = vpop.permute.xlu0 %2574
    %2578 = vset.pattern.permute.xlu0 0
    %2579 = vperm.xlu0 %2578, %v2571
    %v2580 = vpop.permute.xlu0 %2579
    %v2582 = vmul.f32 %v2568, %v2575
    %v2583 = vmul.f32 %v2569, %v2580
    %v2584 = vld [vmem:[%s11] sm:$0xff]
    %v2585 = vld [vmem:[%s11 + $0x8] sm:$0xff]
    %2587 = vset.pattern.permute.xlu0 0
    %2588 = vperm.xlu0 %2587, %v2584
    %v2589 = vpop.permute.xlu0 %2588
    %2592 = vset.pattern.permute.xlu0 0
    %2593 = vperm.xlu0 %2592, %v2585
    %v2594 = vpop.permute.xlu0 %2593
    %v2596 = vadd.f32 %v2582, %v2589
    %v2597 = vadd.f32 %v2583, %v2594
    %v2598 = vmul.f32 %v2596, 1.702
    %v2599 = vmul.f32 %v2597, 1.702
    %v2600 = vxor.u32 %v2598, 2147483648
    %v2601 = vxor.u32 %v2599, 2147483648
    %v2602 = vmul.f32 %v2600, 1.442695
    %v2603 = vpow.pop %v2602
    %v2604 = vmul.f32 %v2601, 1.442695
    %v2605 = vpow.pop %v2604
    %v2606 = vadd.f32 %v2603, 1.0
    %v2607 = vadd.f32 %v2605, 1.0
    %v2608 = vrcp.pop %v2606
    %v2609 = vmul.f32 1.0, %v2608
    %v2610 = vrcp.pop %v2607
    %v2611 = vmul.f32 1.0, %v2610
    %v2612 = vmul.f32 %v2609, %v2596
    %v2613 = vmul.f32 %v2611, %v2597
    %v2614 = vld [vmem:[#allocation8] sm:$0xff]
    %v2615 = vld [vmem:[#allocation8 + $0x8] sm:$0xff]
    %v2616 = vld [vmem:[%s13] sm:$0xff]
    %v2617 = vld [vmem:[%s13 + $0x8] sm:$0xff]
    %2619 = vset.pattern.permute.xlu0 0
    %2620 = vperm.xlu0 %2619, %v2616
    %v2621 = vpop.permute.xlu0 %2620
    %2624 = vset.pattern.permute.xlu0 0
    %2625 = vperm.xlu0 %2624, %v2617
    %v2626 = vpop.permute.xlu0 %2625
    %v2629 = vsel %vm1299, %v2614, 0
    %v2632 = vsel %vm1299, %v2615, 0
    %2634 = vmatprep.subr.mxu0 0.0
    %2635 = vmatpush1.msra.mxu0 0.0
    %2636 = vmatprep.subr.mxu0 0.0
    %2637 = vmatpush1.msra.mxu0 0.0
    %2638 = vmatprep.subr.mxu0 0.0
    %2639 = vmatpush1.msra.mxu0 0.0
    %2640 = vmatprep.subr.mxu0 0.0
    %2641 = vmatpush1.msra.mxu0 0.0
    %2642 = vmatprep.subr.mxu0 0.0
    %2643 = vmatpush1.msra.mxu0 0.0
    %2644 = vmatprep.subr.mxu0 0.0
    %2645 = vmatpush1.msra.mxu0 0.0
    %2646 = vmatprep.subr.mxu0 0.0
    %2647 = vmatpush1.msra.mxu0 0.0
    %2648 = vmatprep.subr.mxu0 0.0
    %2649 = vmatpush1.msra.mxu0 0.0
    %2650 = vmatprep.subr.mxu0 0.0
    %2651 = vmatpush1.msra.mxu0 0.0
    %2652 = vmatprep.subr.mxu0 0.0
    %2653 = vmatpush1.msra.mxu0 0.0
    %2654 = vmatprep.subr.mxu0 0.0
    %2655 = vmatpush1.msra.mxu0 0.0
    %2656 = vmatprep.subr.mxu0 0.0
    %2657 = vmatpush1.msra.mxu0 0.0
    %2658 = vmatprep.subr.mxu0 0.0
    %2659 = vmatpush1.msra.mxu0 0.0
    %2660 = vmatprep.subr.mxu0 0.0
    %2661 = vmatpush1.msra.mxu0 0.0
    %2662 = vmatprep.subr.mxu0 0.0
    %2663 = vmatpush1.msra.mxu0 %v2613
    %2664 = vmatprep.subr.mxu0 0.0
    %2665 = vmatpush1.msra.mxu0 %v2612
    %2666 = vmatprep.subr.mxu0 0.0
    %2667 = vmatpush2.msra.mxu0 0.0
    %2668 = vmatprep.subr.mxu0 0.0
    %2669 = vmatpush2.msra.mxu0 0.0
    %2670 = vmatprep.subr.mxu0 0.0
    %2671 = vmatpush2.msra.mxu0 0.0
    %2672 = vmatprep.subr.mxu0 0.0
    %2673 = vmatpush2.msra.mxu0 0.0
    %2674 = vmatprep.subr.mxu0 0.0
    %2675 = vmatpush2.msra.mxu0 0.0
    %2676 = vmatprep.subr.mxu0 0.0
    %2677 = vmatpush2.msra.mxu0 0.0
    %2678 = vmatprep.subr.mxu0 0.0
    %2679 = vmatpush2.msra.mxu0 0.0
    %2680 = vmatprep.subr.mxu0 0.0
    %2681 = vmatpush2.msra.mxu0 0.0
    %2682 = vmatprep.subr.mxu0 0.0
    %2683 = vmatpush2.msra.mxu0 0.0
    %2684 = vmatprep.subr.mxu0 0.0
    %2685 = vmatpush2.msra.mxu0 0.0
    %2686 = vmatprep.subr.mxu0 0.0
    %2687 = vmatpush2.msra.mxu0 0.0
    %2688 = vmatprep.subr.mxu0 0.0
    %2689 = vmatpush2.msra.mxu0 0.0
    %2690 = vmatprep.subr.mxu0 0.0
    %2691 = vmatpush2.msra.mxu0 0.0
    %2692 = vmatprep.subr.mxu0 0.0
    %2693 = vmatpush2.msra.mxu0 0.0
    %2694 = vmatprep.subr.mxu0 0.0
    %2695 = vmatpush2.msra.mxu0 0.0
    %2696 = vmatprep.subr.mxu0 0.0
    %2697 = vmatpush2.msra.mxu0 0.0
    %2698 = vmatprep.mubr.f32.mxu0 0.0
    %2699 = vmatmul.mubr.f32.gmra.mxu0 %v2629
    %v2700 = vpop.f32.mrf.mxu0
    %v2701 = vadd.f32 %v2621, %v2700
    %v2702 = vpop.f32.mrf.mxu0
    %2703 = vmatprep.mubr.f32.mxu0 0.0
    %2704 = vmatmul.mubr.f32.gmra.mxu0 %v2632
    %v2705 = vpop.f32.mrf.mxu0
    %v2706 = vadd.f32 %v2626, %v2705
    %v2707 = vpop.f32.mrf.mxu0
    %2708 = vdwg.mxu0
    %v2709 = vadd.f32 %v2701, %v2542
    %v2710 = vadd.f32 %v2706, %v2543
    %v2711 = vld [vmem:[#allocation9] sm:$0xff]
    %v2712 = vld [vmem:[#allocation9 + $0x8] sm:$0xff]
    %v2713 = vld [vmem:[#allocation9 + $0x10] sm:$0xff]
    %v2714 = vld [vmem:[#allocation9 + $0x18] sm:$0xff]
    %v2716 = vsel %vm1656, %v2709, 0
    %v2719 = vsel %vm1656, %v2710, 0
    %2721 = vmatprep.subr.mxu0 0.0
    %2722 = vmatpush1.msra.mxu0 0.0
    %2723 = vmatprep.subr.mxu0 0.0
    %2724 = vmatpush1.msra.mxu0 0.0
    %2725 = vmatprep.subr.mxu0 0.0
    %2726 = vmatpush1.msra.mxu0 0.0
    %2727 = vmatprep.subr.mxu0 0.0
    %2728 = vmatpush1.msra.mxu0 0.0
    %2729 = vmatprep.subr.mxu0 0.0
    %2730 = vmatpush1.msra.mxu0 0.0
    %2731 = vmatprep.subr.mxu0 0.0
    %2732 = vmatpush1.msra.mxu0 0.0
    %2733 = vmatprep.subr.mxu0 0.0
    %2734 = vmatpush1.msra.mxu0 0.0
    %2735 = vmatprep.subr.mxu0 0.0
    %2736 = vmatpush1.msra.mxu0 0.0
    %2737 = vmatprep.subr.mxu0 0.0
    %2738 = vmatpush1.msra.mxu0 0.0
    %2739 = vmatprep.subr.mxu0 0.0
    %2740 = vmatpush1.msra.mxu0 0.0
    %2741 = vmatprep.subr.mxu0 0.0
    %2742 = vmatpush1.msra.mxu0 0.0
    %2743 = vmatprep.subr.mxu0 0.0
    %2744 = vmatpush1.msra.mxu0 0.0
    %2745 = vmatprep.subr.mxu0 0.0
    %2746 = vmatpush1.msra.mxu0 %v2714
    %2747 = vmatprep.subr.mxu0 0.0
    %2748 = vmatpush1.msra.mxu0 %v2713
    %2749 = vmatprep.subr.mxu0 0.0
    %2750 = vmatpush1.msra.mxu0 %v2712
    %2751 = vmatprep.subr.mxu0 0.0
    %2752 = vmatpush1.msra.mxu0 %v2711
    %2753 = vmatprep.subr.mxu0 0.0
    %2754 = vmatpush2.msra.mxu0 0.0
    %2755 = vmatprep.subr.mxu0 0.0
    %2756 = vmatpush2.msra.mxu0 0.0
    %2757 = vmatprep.subr.mxu0 0.0
    %2758 = vmatpush2.msra.mxu0 0.0
    %2759 = vmatprep.subr.mxu0 0.0
    %2760 = vmatpush2.msra.mxu0 0.0
    %2761 = vmatprep.subr.mxu0 0.0
    %2762 = vmatpush2.msra.mxu0 0.0
    %2763 = vmatprep.subr.mxu0 0.0
    %2764 = vmatpush2.msra.mxu0 0.0
    %2765 = vmatprep.subr.mxu0 0.0
    %2766 = vmatpush2.msra.mxu0 0.0
    %2767 = vmatprep.subr.mxu0 0.0
    %2768 = vmatpush2.msra.mxu0 0.0
    %2769 = vmatprep.subr.mxu0 0.0
    %2770 = vmatpush2.msra.mxu0 0.0
    %2771 = vmatprep.subr.mxu0 0.0
    %2772 = vmatpush2.msra.mxu0 0.0
    %2773 = vmatprep.subr.mxu0 0.0
    %2774 = vmatpush2.msra.mxu0 0.0
    %2775 = vmatprep.subr.mxu0 0.0
    %2776 = vmatpush2.msra.mxu0 0.0
    %2777 = vmatprep.subr.mxu0 0.0
    %2778 = vmatpush2.msra.mxu0 0.0
    %2779 = vmatprep.subr.mxu0 0.0
    %2780 = vmatpush2.msra.mxu0 0.0
    %2781 = vmatprep.subr.mxu0 0.0
    %2782 = vmatpush2.msra.mxu0 0.0
    %2783 = vmatprep.subr.mxu0 0.0
    %2784 = vmatpush2.msra.mxu0 0.0
    %2785 = vmatprep.mubr.f32.mxu0 0.0
    %2786 = vmatmul.mubr.f32.gmra.mxu0 %v2716
    %v2787 = vpop.f32.mrf.mxu0
    %v2788 = vadd.f32 0.0, %v2787
    %v2789 = vpop.f32.mrf.mxu0
    %2790 = vmatprep.mubr.f32.mxu0 0.0
    %2791 = vmatmul.mubr.f32.gmra.mxu0 %v2719
    %v2792 = vpop.f32.mrf.mxu0
    %v2793 = vadd.f32 0.0, %v2792
    %v2794 = vpop.f32.mrf.mxu0
    %2795 = vdwg.mxu0
    %v2796 = vld [vmem:[%s21] sm:$0xff]
    %v2797 = vld [vmem:[%s21 + $0x8] sm:$0xff]
    %v2798 = vld [vmem:[%s21 + $0x10] sm:$0xff]
    %v2799 = vld [vmem:[%s21 + $0x18] sm:$0xff]
    %2800 = vmatprep.subr.mxu0 0.0
    %2801 = vmatpush1.msra.mxu0 0.0
    %2802 = vmatprep.subr.mxu0 0.0
    %2803 = vmatpush1.msra.mxu0 0.0
    %2804 = vmatprep.subr.mxu0 0.0
    %2805 = vmatpush1.msra.mxu0 0.0
    %2806 = vmatprep.subr.mxu0 0.0
    %2807 = vmatpush1.msra.mxu0 0.0
    %2808 = vmatprep.subr.mxu0 0.0
    %2809 = vmatpush1.msra.mxu0 0.0
    %2810 = vmatprep.subr.mxu0 0.0
    %2811 = vmatpush1.msra.mxu0 0.0
    %2812 = vmatprep.subr.mxu0 0.0
    %2813 = vmatpush1.msra.mxu0 0.0
    %2814 = vmatprep.subr.mxu0 0.0
    %2815 = vmatpush1.msra.mxu0 0.0
    %2816 = vmatprep.subr.mxu0 0.0
    %2817 = vmatpush1.msra.mxu0 0.0
    %2818 = vmatprep.subr.mxu0 0.0
    %2819 = vmatpush1.msra.mxu0 0.0
    %2820 = vmatprep.subr.mxu0 0.0
    %2821 = vmatpush1.msra.mxu0 0.0
    %2822 = vmatprep.subr.mxu0 0.0
    %2823 = vmatpush1.msra.mxu0 0.0
    %2824 = vmatprep.subr.mxu0 0.0
    %2825 = vmatpush1.msra.mxu0 %v2799
    %2826 = vmatprep.subr.mxu0 0.0
    %2827 = vmatpush1.msra.mxu0 %v2798
    %2828 = vmatprep.subr.mxu0 0.0
    %2829 = vmatpush1.msra.mxu0 %v2797
    %2830 = vmatprep.subr.mxu0 0.0
    %2831 = vmatpush1.msra.mxu0 %v2796
    %2832 = vmatprep.subr.mxu0 0.0
    %2833 = vmatpush2.msra.mxu0 0.0
    %2834 = vmatprep.subr.mxu0 0.0
    %2835 = vmatpush2.msra.mxu0 0.0
    %2836 = vmatprep.subr.mxu0 0.0
    %2837 = vmatpush2.msra.mxu0 0.0
    %2838 = vmatprep.subr.mxu0 0.0
    %2839 = vmatpush2.msra.mxu0 0.0
    %2840 = vmatprep.subr.mxu0 0.0
    %2841 = vmatpush2.msra.mxu0 0.0
    %2842 = vmatprep.subr.mxu0 0.0
    %2843 = vmatpush2.msra.mxu0 0.0
    %2844 = vmatprep.subr.mxu0 0.0
    %2845 = vmatpush2.msra.mxu0 0.0
    %2846 = vmatprep.subr.mxu0 0.0
    %2847 = vmatpush2.msra.mxu0 0.0
    %2848 = vmatprep.subr.mxu0 0.0
    %2849 = vmatpush2.msra.mxu0 0.0
    %2850 = vmatprep.subr.mxu0 0.0
    %2851 = vmatpush2.msra.mxu0 0.0
    %2852 = vmatprep.subr.mxu0 0.0
    %2853 = vmatpush2.msra.mxu0 0.0
    %2854 = vmatprep.subr.mxu0 0.0
    %2855 = vmatpush2.msra.mxu0 0.0
    %2856 = vmatprep.subr.mxu0 0.0
    %2857 = vmatpush2.msra.mxu0 0.0
    %2858 = vmatprep.subr.mxu0 0.0
    %2859 = vmatpush2.msra.mxu0 0.0
    %2860 = vmatprep.subr.mxu0 0.0
    %2861 = vmatpush2.msra.mxu0 0.0
    %2862 = vmatprep.subr.mxu0 0.0
    %2863 = vmatpush2.msra.mxu0 0.0
    %2864 = vmatprep.mubr.f32.mxu0 0.0
    %2865 = vmatmul.mubr.f32.gmra.mxu0 %v2716
    %v2866 = vpop.f32.mrf.mxu0
    %v2867 = vadd.f32 0.0, %v2866
    %v2868 = vpop.f32.mrf.mxu0
    %2869 = vmatprep.mubr.f32.mxu0 0.0
    %2870 = vmatmul.mubr.f32.gmra.mxu0 %v2719
    %v2871 = vpop.f32.mrf.mxu0
    %v2872 = vadd.f32 0.0, %v2871
    %v2873 = vpop.f32.mrf.mxu0
    %2874 = vdwg.mxu0
    %v2875 = vsub.f32 %v2788, %v2867
    %v2876 = vsub.f32 %v2793, %v2872
    %v2877 = vld [vmem:[#allocation11] sm:$0xff]
    %v2878 = vld [vmem:[#allocation11 + $0x8] sm:$0xff]
    %v2880 = vsel %vm1299, %v2877, 0
    %v2883 = vsel %vm1299, %v2878, 0
    %2885 = vmatprep.subr.mxu0 0.0
    %2886 = vmatpush1.msra.mxu0 0.0
    %2887 = vmatprep.subr.mxu0 0.0
    %2888 = vmatpush1.msra.mxu0 0.0
    %2889 = vmatprep.subr.mxu0 0.0
    %2890 = vmatpush1.msra.mxu0 0.0
    %2891 = vmatprep.subr.mxu0 0.0
    %2892 = vmatpush1.msra.mxu0 0.0
    %2893 = vmatprep.subr.mxu0 0.0
    %2894 = vmatpush1.msra.mxu0 0.0
    %2895 = vmatprep.subr.mxu0 0.0
    %2896 = vmatpush1.msra.mxu0 0.0
    %2897 = vmatprep.subr.mxu0 0.0
    %2898 = vmatpush1.msra.mxu0 0.0
    %2899 = vmatprep.subr.mxu0 0.0
    %2900 = vmatpush1.msra.mxu0 0.0
    %2901 = vmatprep.subr.mxu0 0.0
    %2902 = vmatpush1.msra.mxu0 0.0
    %2903 = vmatprep.subr.mxu0 0.0
    %2904 = vmatpush1.msra.mxu0 0.0
    %2905 = vmatprep.subr.mxu0 0.0
    %2906 = vmatpush1.msra.mxu0 0.0
    %2907 = vmatprep.subr.mxu0 0.0
    %2908 = vmatpush1.msra.mxu0 0.0
    %2909 = vmatprep.subr.mxu0 0.0
    %2910 = vmatpush1.msra.mxu0 0.0
    %2911 = vmatprep.subr.mxu0 0.0
    %2912 = vmatpush1.msra.mxu0 0.0
    %2913 = vmatprep.subr.mxu0 0.0
    %2914 = vmatpush1.msra.mxu0 %v2876
    %2915 = vmatprep.subr.mxu0 0.0
    %2916 = vmatpush1.msra.mxu0 %v2875
    %2917 = vmatprep.subr.mxu0 0.0
    %2918 = vmatpush2.msra.mxu0 0.0
    %2919 = vmatprep.subr.mxu0 0.0
    %2920 = vmatpush2.msra.mxu0 0.0
    %2921 = vmatprep.subr.mxu0 0.0
    %2922 = vmatpush2.msra.mxu0 0.0
    %2923 = vmatprep.subr.mxu0 0.0
    %2924 = vmatpush2.msra.mxu0 0.0
    %2925 = vmatprep.subr.mxu0 0.0
    %2926 = vmatpush2.msra.mxu0 0.0
    %2927 = vmatprep.subr.mxu0 0.0
    %2928 = vmatpush2.msra.mxu0 0.0
    %2929 = vmatprep.subr.mxu0 0.0
    %2930 = vmatpush2.msra.mxu0 0.0
    %2931 = vmatprep.subr.mxu0 0.0
    %2932 = vmatpush2.msra.mxu0 0.0
    %2933 = vmatprep.subr.mxu0 0.0
    %2934 = vmatpush2.msra.mxu0 0.0
    %2935 = vmatprep.subr.mxu0 0.0
    %2936 = vmatpush2.msra.mxu0 0.0
    %2937 = vmatprep.subr.mxu0 0.0
    %2938 = vmatpush2.msra.mxu0 0.0
    %2939 = vmatprep.subr.mxu0 0.0
    %2940 = vmatpush2.msra.mxu0 0.0
    %2941 = vmatprep.subr.mxu0 0.0
    %2942 = vmatpush2.msra.mxu0 0.0
    %2943 = vmatprep.subr.mxu0 0.0
    %2944 = vmatpush2.msra.mxu0 0.0
    %2945 = vmatprep.subr.mxu0 0.0
    %2946 = vmatpush2.msra.mxu0 0.0
    %2947 = vmatprep.subr.mxu0 0.0
    %2948 = vmatpush2.msra.mxu0 0.0
    %2949 = vmatprep.mubr.f32.mxu0 0.0
    %2950 = vmatmul.mubr.f32.gmra.mxu0 %v2880
    %v2951 = vpop.f32.mrf.mxu0
    %v2952 = vadd.f32 0.0, %v2951
    %v2953 = vpop.f32.mrf.mxu0
    %2954 = vmatprep.mubr.f32.mxu0 0.0
    %2955 = vmatmul.mubr.f32.gmra.mxu0 %v2883
    %v2956 = vpop.f32.mrf.mxu0
    %v2957 = vadd.f32 0.0, %v2956
    %v2958 = vpop.f32.mrf.mxu0
    %2959 = vdwg.mxu0
    %v2960 = vxor.u32 %v2952, 2147483648
    %v2961 = vxor.u32 %v2957, 2147483648
    %v2962 = vmul.f32 %v2960, 1.442695
    %v2963 = vpow.pop %v2962
    %v2964 = vmul.f32 %v2961, 1.442695
    %v2965 = vpow.pop %v2964
    %v2966 = vadd.f32 %v2963, 1.0
    %v2967 = vadd.f32 %v2965, 1.0
    %v2968 = vrcp.pop %v2966
    %v2969 = vmul.f32 1.0, %v2968
    %v2970 = vrcp.pop %v2967
    %v2971 = vmul.f32 1.0, %v2970
    %v2972 = vmul.f32 %v2969, %v2875
    %v2973 = vmul.f32 %v2971, %v2876
    %v2974 = vadd.f32 %v2867, %v2972
    %v2975 = vadd.f32 %v2872, %v2973
    %v2976 = vsel %vm1299, %v2974, 0.0
    %2977 = vadd.xlane.f32.xlu0 %v2976
    %v2978 = vpop.xlane.xlu0 %2977
    %v2979 = vsel %vm1299, %v2975, 0.0
    %2980 = vadd.xlane.f32.xlu0 %v2979
    %v2981 = vpop.xlane.xlu0 %2980
    %v2982 = vrcp.pop 16.0
    %v2983 = vmul.f32 %v2978, %v2982
    %v2984 = vmul.f32 %v2981, %v2982
    %v2985 = vsub.f32 %v2974, %v2983
    %v2986 = vsub.f32 %v2975, %v2984
    %v2987 = vmul.f32 %v2985, %v2985
    %v2988 = vmul.f32 %v2986, %v2986
    %v2989 = vsel %vm1299, %v2987, 0.0
    %2990 = vadd.xlane.f32.xlu0 %v2989
    %v2991 = vpop.xlane.xlu0 %2990
    %v2992 = vsel %vm1299, %v2988, 0.0
    %2993 = vadd.xlane.f32.xlu0 %v2992
    %v2994 = vpop.xlane.xlu0 %2993
    %v2995 = vmul.f32 %v2991, %v2982
    %v2996 = vmul.f32 %v2994, %v2982
    %v2997 = vadd.f32 %v2995, 1e-05
    %v2998 = vadd.f32 %v2996, 1e-05
    %v2999 = vrsqrt.pop %v2997
    %v3000 = vrsqrt.pop %v2998
    %v3001 = vmul.f32 %v2985, %v2999
    %v3002 = vmul.f32 %v2986, %v3000
    %v3003 = vld [vmem:[%s33] sm:$0xff]
    %v3004 = vld [vmem:[%s33 + $0x8] sm:$0xff]
    %3006 = vset.pattern.permute.xlu0 0
    %3007 = vperm.xlu0 %3006, %v3003
    %v3008 = vpop.permute.xlu0 %3007
    %3011 = vset.pattern.permute.xlu0 0
    %3012 = vperm.xlu0 %3011, %v3004
    %v3013 = vpop.permute.xlu0 %3012
    %v3015 = vmul.f32 %v3001, %v3008
    %v3016 = vmul.f32 %v3002, %v3013
    %v3017 = vld [vmem:[%s25] sm:$0xff]
    %v3018 = vld [vmem:[%s25 + $0x8] sm:$0xff]
    %3020 = vset.pattern.permute.xlu0 0
    %3021 = vperm.xlu0 %3020, %v3017
    %v3022 = vpop.permute.xlu0 %3021
    %3025 = vset.pattern.permute.xlu0 0
    %3026 = vperm.xlu0 %3025, %v3018
    %v3027 = vpop.permute.xlu0 %3026
    %v3029 = vadd.f32 %v3015, %v3022
    %v3030 = vadd.f32 %v3016, %v3027
    %v3031 = vmul.f32 %v3029, 1.702
    %v3032 = vmul.f32 %v3030, 1.702
    %v3033 = vxor.u32 %v3031, 2147483648
    %v3034 = vxor.u32 %v3032, 2147483648
    %v3035 = vmul.f32 %v3033, 1.442695
    %v3036 = vpow.pop %v3035
    %v3037 = vmul.f32 %v3034, 1.442695
    %v3038 = vpow.pop %v3037
    %v3039 = vadd.f32 %v3036, 1.0
    %v3040 = vadd.f32 %v3038, 1.0
    %v3041 = vrcp.pop %v3039
    %v3042 = vmul.f32 1.0, %v3041
    %v3043 = vrcp.pop %v3040
    %v3044 = vmul.f32 1.0, %v3043
    %v3045 = vmul.f32 %v3042, %v3029
    %v3046 = vmul.f32 %v3044, %v3030
    %v3047 = vld [vmem:[#allocation14] sm:$0xff]
    %v3048 = vld [vmem:[#allocation14 + $0x8] sm:$0xff]
    %v3049 = vld [vmem:[#allocation14 + $0x10] sm:$0xff]
    %v3050 = vld [vmem:[#allocation14 + $0x18] sm:$0xff]
    %v3051 = vld [vmem:[#allocation14 + $0x20] sm:$0xff]
    %v3052 = vld [vmem:[#allocation14 + $0x28] sm:$0xff]
    %v3053 = vld [vmem:[#allocation14 + $0x30] sm:$0xff]
    %v3054 = vld [vmem:[#allocation14 + $0x38] sm:$0xff]
    %v3055 = vld [vmem:[#allocation14 + $0x40] sm:$0xff]
    %v3056 = vld [vmem:[#allocation14 + $0x48] sm:$0xff]
    %v3057 = vld [vmem:[#allocation14 + $0x50] sm:$0xff]
    %v3058 = vld [vmem:[#allocation14 + $0x58] sm:$0xff]
    %v3059 = vld [vmem:[#allocation14 + $0x60] sm:$0xff]
    %v3060 = vld [vmem:[#allocation14 + $0x68] sm:$0xff]
    %v3061 = vld [vmem:[%s27] sm:$0xff]
    %v3062 = vld [vmem:[%s27 + $0x8] sm:$0xff]
    %v3064 = vsel %vm1299, %v3047, 0
    %v3067 = vsel %vm1299, %v3048, 0
    %v3070 = vsel %vm1299, %v3049, 0
    %v3073 = vsel %vm1299, %v3050, 0
    %v3076 = vsel %vm1299, %v3051, 0
    %v3079 = vsel %vm1299, %v3052, 0
    %v3082 = vsel %vm1299, %v3053, 0
    %v3085 = vsel %vm1299, %v3054, 0
    %v3088 = vsel %vm1299, %v3055, 0
    %v3091 = vsel %vm1299, %v3056, 0
    %v3094 = vsel %vm1299, %v3057, 0
    %v3097 = vsel %vm1299, %v3058, 0
    %v3100 = vsel %vm1299, %v3059, 0
    %v3103 = vsel %vm1299, %v3060, 0
    %3105 = vmatprep.subr.mxu0 0.0
    %3106 = vmatpush1.msra.mxu0 0.0
    %3107 = vmatprep.subr.mxu0 0.0
    %3108 = vmatpush1.msra.mxu0 0.0
    %3109 = vmatprep.subr.mxu0 0.0
    %3110 = vmatpush1.msra.mxu0 0.0
    %3111 = vmatprep.subr.mxu0 0.0
    %3112 = vmatpush1.msra.mxu0 0.0
    %3113 = vmatprep.subr.mxu0 0.0
    %3114 = vmatpush1.msra.mxu0 0.0
    %3115 = vmatprep.subr.mxu0 0.0
    %3116 = vmatpush1.msra.mxu0 0.0
    %3117 = vmatprep.subr.mxu0 0.0
    %3118 = vmatpush1.msra.mxu0 0.0
    %3119 = vmatprep.subr.mxu0 0.0
    %3120 = vmatpush1.msra.mxu0 0.0
    %3121 = vmatprep.subr.mxu0 0.0
    %3122 = vmatpush1.msra.mxu0 0.0
    %3123 = vmatprep.subr.mxu0 0.0
    %3124 = vmatpush1.msra.mxu0 0.0
    %3125 = vmatprep.subr.mxu0 0.0
    %3126 = vmatpush1.msra.mxu0 0.0
    %3127 = vmatprep.subr.mxu0 0.0
    %3128 = vmatpush1.msra.mxu0 0.0
    %3129 = vmatprep.subr.mxu0 0.0
    %3130 = vmatpush1.msra.mxu0 0.0
    %3131 = vmatprep.subr.mxu0 0.0
    %3132 = vmatpush1.msra.mxu0 0.0
    %3133 = vmatprep.subr.mxu0 0.0
    %3134 = vmatpush1.msra.mxu0 %v3046
    %3135 = vmatprep.subr.mxu0 0.0
    %3136 = vmatpush1.msra.mxu0 %v3045
    %3137 = vmatprep.subr.mxu0 0.0
    %3138 = vmatpush2.msra.mxu0 0.0
    %3139 = vmatprep.subr.mxu0 0.0
    %3140 = vmatpush2.msra.mxu0 0.0
    %3141 = vmatprep.subr.mxu0 0.0
    %3142 = vmatpush2.msra.mxu0 0.0
    %3143 = vmatprep.subr.mxu0 0.0
    %3144 = vmatpush2.msra.mxu0 0.0
    %3145 = vmatprep.subr.mxu0 0.0
    %3146 = vmatpush2.msra.mxu0 0.0
    %3147 = vmatprep.subr.mxu0 0.0
    %3148 = vmatpush2.msra.mxu0 0.0
    %3149 = vmatprep.subr.mxu0 0.0
    %3150 = vmatpush2.msra.mxu0 0.0
    %3151 = vmatprep.subr.mxu0 0.0
    %3152 = vmatpush2.msra.mxu0 0.0
    %3153 = vmatprep.subr.mxu0 0.0
    %3154 = vmatpush2.msra.mxu0 0.0
    %3155 = vmatprep.subr.mxu0 0.0
    %3156 = vmatpush2.msra.mxu0 0.0
    %3157 = vmatprep.subr.mxu0 0.0
    %3158 = vmatpush2.msra.mxu0 0.0
    %3159 = vmatprep.subr.mxu0 0.0
    %3160 = vmatpush2.msra.mxu0 0.0
    %3161 = vmatprep.subr.mxu0 0.0
    %3162 = vmatpush2.msra.mxu0 0.0
    %3163 = vmatprep.subr.mxu0 0.0
    %3164 = vmatpush2.msra.mxu0 0.0
    %3165 = vmatprep.subr.mxu0 0.0
    %3166 = vmatpush2.msra.mxu0 0.0
    %3167 = vmatprep.subr.mxu0 0.0
    %3168 = vmatpush2.msra.mxu0 0.0
    %3169 = vmatprep.mubr.f32.mxu0 0.0
    %3170 = vmatmul.mubr.f32.gmra.mxu0 %v3064
    %v3171 = vpop.f32.mrf.mxu0
    %v3172 = vadd.f32 0.0, %v3171
    %v3173 = vpop.f32.mrf.mxu0
    %3174 = vmatprep.mubr.f32.mxu0 0.0
    %3175 = vmatmul.mubr.f32.gmra.mxu0 %v3067
    %v3176 = vpop.f32.mrf.mxu0
    %v3177 = vadd.f32 0.0, %v3176
    %v3178 = vpop.f32.mrf.mxu0
    %3179 = vmatprep.mubr.f32.mxu0 0.0
    %3180 = vmatmul.mubr.f32.gmra.mxu0 %v3070
    %v3181 = vpop.f32.mrf.mxu0
    %v3182 = vadd.f32 0.0, %v3181
    %v3183 = vpop.f32.mrf.mxu0
    %3184 = vmatprep.mubr.f32.mxu0 0.0
    %3185 = vmatmul.mubr.f32.gmra.mxu0 %v3073
    %v3186 = vpop.f32.mrf.mxu0
    %v3187 = vadd.f32 0.0, %v3186
    %v3188 = vpop.f32.mrf.mxu0
    %3189 = vmatprep.mubr.f32.mxu0 0.0
    %3190 = vmatmul.mubr.f32.gmra.mxu0 %v3076
    %v3191 = vpop.f32.mrf.mxu0
    %v3192 = vadd.f32 0.0, %v3191
    %v3193 = vpop.f32.mrf.mxu0
    %3194 = vmatprep.mubr.f32.mxu0 0.0
    %3195 = vmatmul.mubr.f32.gmra.mxu0 %v3079
    %v3196 = vpop.f32.mrf.mxu0
    %v3197 = vadd.f32 0.0, %v3196
    %v3198 = vpop.f32.mrf.mxu0
    %3199 = vmatprep.mubr.f32.mxu0 0.0
    %3200 = vmatmul.mubr.f32.gmra.mxu0 %v3082
    %v3201 = vpop.f32.mrf.mxu0
    %v3202 = vadd.f32 0.0, %v3201
    %v3203 = vpop.f32.mrf.mxu0
    %3204 = vmatprep.mubr.f32.mxu0 0.0
    %3205 = vmatmul.mubr.f32.gmra.mxu0 %v3085
    %v3206 = vpop.f32.mrf.mxu0
    %v3207 = vadd.f32 0.0, %v3206
    %v3208 = vpop.f32.mrf.mxu0
    %3209 = vmatprep.mubr.f32.mxu0 0.0
    %3210 = vmatmul.mubr.f32.gmra.mxu0 %v3088
    %v3211 = vpop.f32.mrf.mxu0
    %v3212 = vadd.f32 0.0, %v3211
    %v3213 = vpop.f32.mrf.mxu0
    %3214 = vmatprep.mubr.f32.mxu0 0.0
    %3215 = vmatmul.mubr.f32.gmra.mxu0 %v3091
    %v3216 = vpop.f32.mrf.mxu0
    %v3217 = vadd.f32 0.0, %v3216
    %v3218 = vpop.f32.mrf.mxu0
    %3219 = vmatprep.mubr.f32.mxu0 0.0
    %3220 = vmatmul.mubr.f32.gmra.mxu0 %v3094
    %v3221 = vpop.f32.mrf.mxu0
    %v3222 = vadd.f32 0.0, %v3221
    %v3223 = vpop.f32.mrf.mxu0
    %3224 = vmatprep.mubr.f32.mxu0 0.0
    %3225 = vmatmul.mubr.f32.gmra.mxu0 %v3097
    %v3226 = vpop.f32.mrf.mxu0
    %v3227 = vadd.f32 0.0, %v3226
    %v3228 = vpop.f32.mrf.mxu0
    %3229 = vmatprep.mubr.f32.mxu0 0.0
    %3230 = vmatmul.mubr.f32.gmra.mxu0 %v3100
    %v3231 = vpop.f32.mrf.mxu0
    %v3232 = vadd.f32 0.0, %v3231
    %v3233 = vpop.f32.mrf.mxu0
    %3234 = vmatprep.mubr.f32.mxu0 0.0
    %3235 = vmatmul.mubr.f32.gmra.mxu0 %v3103
    %v3236 = vpop.f32.mrf.mxu0
    %v3237 = vadd.f32 0.0, %v3236
    %v3238 = vpop.f32.mrf.mxu0
    %3239 = vdwg.mxu0
    %v3240 = vld [vmem:[#allocation12] sm:$0xff]
    %v3241 = vld [vmem:[#allocation12 + $0x8] sm:$0xff]
    %s3242 = scalar_lea.vmem [#allocation12], 16
    %v3243 = vld [vmem:[%s3242] sm:$0xff]
    %v3244 = vld [vmem:[%s3242 + $0x8] sm:$0xff]
    %v3246 = vsel %vm1299, %v3182, 0
    %v3249 = vsel %vm1299, %v3187, 0
    %3251 = vmatprep.subr.mxu0 0.0
    %3252 = vmatpush1.msra.mxu0 0.0
    %3253 = vmatprep.subr.mxu0 0.0
    %3254 = vmatpush1.msra.mxu0 0.0
    %3255 = vmatprep.subr.mxu0 0.0
    %3256 = vmatpush1.msra.mxu0 0.0
    %3257 = vmatprep.subr.mxu0 0.0
    %3258 = vmatpush1.msra.mxu0 0.0
    %3259 = vmatprep.subr.mxu0 0.0
    %3260 = vmatpush1.msra.mxu0 0.0
    %3261 = vmatprep.subr.mxu0 0.0
    %3262 = vmatpush1.msra.mxu0 0.0
    %3263 = vmatprep.subr.mxu0 0.0
    %3264 = vmatpush1.msra.mxu0 0.0
    %3265 = vmatprep.subr.mxu0 0.0
    %3266 = vmatpush1.msra.mxu0 0.0
    %3267 = vmatprep.subr.mxu0 0.0
    %3268 = vmatpush1.msra.mxu0 0.0
    %3269 = vmatprep.subr.mxu0 0.0
    %3270 = vmatpush1.msra.mxu0 0.0
    %3271 = vmatprep.subr.mxu0 0.0
    %3272 = vmatpush1.msra.mxu0 0.0
    %3273 = vmatprep.subr.mxu0 0.0
    %3274 = vmatpush1.msra.mxu0 0.0
    %3275 = vmatprep.subr.mxu0 0.0
    %3276 = vmatpush1.msra.mxu0 0.0
    %3277 = vmatprep.subr.mxu0 0.0
    %3278 = vmatpush1.msra.mxu0 0.0
    %3279 = vmatprep.subr.mxu0 0.0
    %3280 = vmatpush1.msra.mxu0 %v3244
    %3281 = vmatprep.subr.mxu0 0.0
    %3282 = vmatpush1.msra.mxu0 %v3243
    %3283 = vmatprep.subr.mxu0 0.0
    %3284 = vmatpush2.msra.mxu0 0.0
    %3285 = vmatprep.subr.mxu0 0.0
    %3286 = vmatpush2.msra.mxu0 0.0
    %3287 = vmatprep.subr.mxu0 0.0
    %3288 = vmatpush2.msra.mxu0 0.0
    %3289 = vmatprep.subr.mxu0 0.0
    %3290 = vmatpush2.msra.mxu0 0.0
    %3291 = vmatprep.subr.mxu0 0.0
    %3292 = vmatpush2.msra.mxu0 0.0
    %3293 = vmatprep.subr.mxu0 0.0
    %3294 = vmatpush2.msra.mxu0 0.0
    %3295 = vmatprep.subr.mxu0 0.0
    %3296 = vmatpush2.msra.mxu0 0.0
    %3297 = vmatprep.subr.mxu0 0.0
    %3298 = vmatpush2.msra.mxu0 0.0
    %3299 = vmatprep.subr.mxu0 0.0
    %3300 = vmatpush2.msra.mxu0 0.0
    %3301 = vmatprep.subr.mxu0 0.0
    %3302 = vmatpush2.msra.mxu0 0.0
    %3303 = vmatprep.subr.mxu0 0.0
    %3304 = vmatpush2.msra.mxu0 0.0
    %3305 = vmatprep.subr.mxu0 0.0
    %3306 = vmatpush2.msra.mxu0 0.0
    %3307 = vmatprep.subr.mxu0 0.0
    %3308 = vmatpush2.msra.mxu0 0.0
    %3309 = vmatprep.subr.mxu0 0.0
    %3310 = vmatpush2.msra.mxu0 0.0
    %3311 = vmatprep.subr.mxu0 0.0
    %3312 = vmatpush2.msra.mxu0 0.0
    %3313 = vmatprep.subr.mxu0 0.0
    %3314 = vmatpush2.msra.mxu0 0.0
    %3315 = vmatprep.mubr.f32.mxu0 0.0
    %3316 = vmatmul.mubr.f32.gmra.mxu0 %v3246
    %v3317 = vpop.f32.mrf.mxu0
    %v3318 = vadd.f32 0.0, %v3317
    %v3319 = vpop.f32.mrf.mxu0
    %3320 = vmatprep.mubr.f32.mxu0 0.0
    %3321 = vmatmul.mubr.f32.gmra.mxu0 %v3249
    %v3322 = vpop.f32.mrf.mxu0
    %v3323 = vadd.f32 0.0, %v3322
    %v3324 = vpop.f32.mrf.mxu0
    %3325 = vdwg.mxu0
    %v3327 = vsel %vm1299, %v3172, 0
    %v3330 = vsel %vm1299, %v3177, 0
    %3332 = vmatprep.subr.mxu0 0.0
    %3333 = vmatpush1.msra.mxu0 0.0
    %3334 = vmatprep.subr.mxu0 0.0
    %3335 = vmatpush1.msra.mxu0 0.0
    %3336 = vmatprep.subr.mxu0 0.0
    %3337 = vmatpush1.msra.mxu0 0.0
    %3338 = vmatprep.subr.mxu0 0.0
    %3339 = vmatpush1.msra.mxu0 0.0
    %3340 = vmatprep.subr.mxu0 0.0
    %3341 = vmatpush1.msra.mxu0 0.0
    %3342 = vmatprep.subr.mxu0 0.0
    %3343 = vmatpush1.msra.mxu0 0.0
    %3344 = vmatprep.subr.mxu0 0.0
    %3345 = vmatpush1.msra.mxu0 0.0
    %3346 = vmatprep.subr.mxu0 0.0
    %3347 = vmatpush1.msra.mxu0 0.0
    %3348 = vmatprep.subr.mxu0 0.0
    %3349 = vmatpush1.msra.mxu0 0.0
    %3350 = vmatprep.subr.mxu0 0.0
    %3351 = vmatpush1.msra.mxu0 0.0
    %3352 = vmatprep.subr.mxu0 0.0
    %3353 = vmatpush1.msra.mxu0 0.0
    %3354 = vmatprep.subr.mxu0 0.0
    %3355 = vmatpush1.msra.mxu0 0.0
    %3356 = vmatprep.subr.mxu0 0.0
    %3357 = vmatpush1.msra.mxu0 0.0
    %3358 = vmatprep.subr.mxu0 0.0
    %3359 = vmatpush1.msra.mxu0 0.0
    %3360 = vmatprep.subr.mxu0 0.0
    %3361 = vmatpush1.msra.mxu0 %v3241
    %3362 = vmatprep.subr.mxu0 0.0
    %3363 = vmatpush1.msra.mxu0 %v3240
    %3364 = vmatprep.subr.mxu0 0.0
    %3365 = vmatpush2.msra.mxu0 0.0
    %3366 = vmatprep.subr.mxu0 0.0
    %3367 = vmatpush2.msra.mxu0 0.0
    %3368 = vmatprep.subr.mxu0 0.0
    %3369 = vmatpush2.msra.mxu0 0.0
    %3370 = vmatprep.subr.mxu0 0.0
    %3371 = vmatpush2.msra.mxu0 0.0
    %3372 = vmatprep.subr.mxu0 0.0
    %3373 = vmatpush2.msra.mxu0 0.0
    %3374 = vmatprep.subr.mxu0 0.0
    %3375 = vmatpush2.msra.mxu0 0.0
    %3376 = vmatprep.subr.mxu0 0.0
    %3377 = vmatpush2.msra.mxu0 0.0
    %3378 = vmatprep.subr.mxu0 0.0
    %3379 = vmatpush2.msra.mxu0 0.0
    %3380 = vmatprep.subr.mxu0 0.0
    %3381 = vmatpush2.msra.mxu0 0.0
    %3382 = vmatprep.subr.mxu0 0.0
    %3383 = vmatpush2.msra.mxu0 0.0
    %3384 = vmatprep.subr.mxu0 0.0
    %3385 = vmatpush2.msra.mxu0 0.0
    %3386 = vmatprep.subr.mxu0 0.0
    %3387 = vmatpush2.msra.mxu0 0.0
    %3388 = vmatprep.subr.mxu0 0.0
    %3389 = vmatpush2.msra.mxu0 0.0
    %3390 = vmatprep.subr.mxu0 0.0
    %3391 = vmatpush2.msra.mxu0 0.0
    %3392 = vmatprep.subr.mxu0 0.0
    %3393 = vmatpush2.msra.mxu0 0.0
    %3394 = vmatprep.subr.mxu0 0.0
    %3395 = vmatpush2.msra.mxu0 0.0
    %3396 = vmatprep.mubr.f32.mxu0 0.0
    %3397 = vmatmul.mubr.f32.gmra.mxu0 %v3327
    %v3398 = vpop.f32.mrf.mxu0
    %v3399 = vadd.f32 %v3318, %v3398
    %v3400 = vpop.f32.mrf.mxu0
    %3401 = vmatprep.mubr.f32.mxu0 0.0
    %3402 = vmatmul.mubr.f32.gmra.mxu0 %v3330
    %v3403 = vpop.f32.mrf.mxu0
    %v3404 = vadd.f32 %v3323, %v3403
    %v3405 = vpop.f32.mrf.mxu0
    %3406 = vdwg.mxu0
    %s3407 = scalar_lea.vmem [#allocation12], 32
    %v3408 = vld [vmem:[%s3407] sm:$0xff]
    %v3409 = vld [vmem:[%s3407 + $0x8] sm:$0xff]
    %v3411 = vsel %vm1299, %v3192, 0
    %v3414 = vsel %vm1299, %v3197, 0
    %3416 = vmatprep.subr.mxu0 0.0
    %3417 = vmatpush1.msra.mxu0 0.0
    %3418 = vmatprep.subr.mxu0 0.0
    %3419 = vmatpush1.msra.mxu0 0.0
    %3420 = vmatprep.subr.mxu0 0.0
    %3421 = vmatpush1.msra.mxu0 0.0
    %3422 = vmatprep.subr.mxu0 0.0
    %3423 = vmatpush1.msra.mxu0 0.0
    %3424 = vmatprep.subr.mxu0 0.0
    %3425 = vmatpush1.msra.mxu0 0.0
    %3426 = vmatprep.subr.mxu0 0.0
    %3427 = vmatpush1.msra.mxu0 0.0
    %3428 = vmatprep.subr.mxu0 0.0
    %3429 = vmatpush1.msra.mxu0 0.0
    %3430 = vmatprep.subr.mxu0 0.0
    %3431 = vmatpush1.msra.mxu0 0.0
    %3432 = vmatprep.subr.mxu0 0.0
    %3433 = vmatpush1.msra.mxu0 0.0
    %3434 = vmatprep.subr.mxu0 0.0
    %3435 = vmatpush1.msra.mxu0 0.0
    %3436 = vmatprep.subr.mxu0 0.0
    %3437 = vmatpush1.msra.mxu0 0.0
    %3438 = vmatprep.subr.mxu0 0.0
    %3439 = vmatpush1.msra.mxu0 0.0
    %3440 = vmatprep.subr.mxu0 0.0
    %3441 = vmatpush1.msra.mxu0 0.0
    %3442 = vmatprep.subr.mxu0 0.0
    %3443 = vmatpush1.msra.mxu0 0.0
    %3444 = vmatprep.subr.mxu0 0.0
    %3445 = vmatpush1.msra.mxu0 %v3409
    %3446 = vmatprep.subr.mxu0 0.0
    %3447 = vmatpush1.msra.mxu0 %v3408
    %3448 = vmatprep.subr.mxu0 0.0
    %3449 = vmatpush2.msra.mxu0 0.0
    %3450 = vmatprep.subr.mxu0 0.0
    %3451 = vmatpush2.msra.mxu0 0.0
    %3452 = vmatprep.subr.mxu0 0.0
    %3453 = vmatpush2.msra.mxu0 0.0
    %3454 = vmatprep.subr.mxu0 0.0
    %3455 = vmatpush2.msra.mxu0 0.0
    %3456 = vmatprep.subr.mxu0 0.0
    %3457 = vmatpush2.msra.mxu0 0.0
    %3458 = vmatprep.subr.mxu0 0.0
    %3459 = vmatpush2.msra.mxu0 0.0
    %3460 = vmatprep.subr.mxu0 0.0
    %3461 = vmatpush2.msra.mxu0 0.0
    %3462 = vmatprep.subr.mxu0 0.0
    %3463 = vmatpush2.msra.mxu0 0.0
    %3464 = vmatprep.subr.mxu0 0.0
    %3465 = vmatpush2.msra.mxu0 0.0
    %3466 = vmatprep.subr.mxu0 0.0
    %3467 = vmatpush2.msra.mxu0 0.0
    %3468 = vmatprep.subr.mxu0 0.0
    %3469 = vmatpush2.msra.mxu0 0.0
    %3470 = vmatprep.subr.mxu0 0.0
    %3471 = vmatpush2.msra.mxu0 0.0
    %3472 = vmatprep.subr.mxu0 0.0
    %3473 = vmatpush2.msra.mxu0 0.0
    %3474 = vmatprep.subr.mxu0 0.0
    %3475 = vmatpush2.msra.mxu0 0.0
    %3476 = vmatprep.subr.mxu0 0.0
    %3477 = vmatpush2.msra.mxu0 0.0
    %3478 = vmatprep.subr.mxu0 0.0
    %3479 = vmatpush2.msra.mxu0 0.0
    %3480 = vmatprep.mubr.f32.mxu0 0.0
    %3481 = vmatmul.mubr.f32.gmra.mxu0 %v3411
    %v3482 = vpop.f32.mrf.mxu0
    %v3483 = vadd.f32 0.0, %v3482
    %v3484 = vpop.f32.mrf.mxu0
    %3485 = vmatprep.mubr.f32.mxu0 0.0
    %3486 = vmatmul.mubr.f32.gmra.mxu0 %v3414
    %v3487 = vpop.f32.mrf.mxu0
    %v3488 = vadd.f32 0.0, %v3487
    %v3489 = vpop.f32.mrf.mxu0
    %3490 = vdwg.mxu0
    %v3491 = vadd.f32 %v3399, %v3483
    %v3492 = vadd.f32 %v3404, %v3488
    %s3493 = scalar_lea.vmem [#allocation12], 48
    %v3494 = vld [vmem:[%s3493] sm:$0xff]
    %v3495 = vld [vmem:[%s3493 + $0x8] sm:$0xff]
    %v3497 = vsel %vm1299, %v3202, 0
    %v3500 = vsel %vm1299, %v3207, 0
    %3502 = vmatprep.subr.mxu0 0.0
    %3503 = vmatpush1.msra.mxu0 0.0
    %3504 = vmatprep.subr.mxu0 0.0
    %3505 = vmatpush1.msra.mxu0 0.0
    %3506 = vmatprep.subr.mxu0 0.0
    %3507 = vmatpush1.msra.mxu0 0.0
    %3508 = vmatprep.subr.mxu0 0.0
    %3509 = vmatpush1.msra.mxu0 0.0
    %3510 = vmatprep.subr.mxu0 0.0
    %3511 = vmatpush1.msra.mxu0 0.0
    %3512 = vmatprep.subr.mxu0 0.0
    %3513 = vmatpush1.msra.mxu0 0.0
    %3514 = vmatprep.subr.mxu0 0.0
    %3515 = vmatpush1.msra.mxu0 0.0
    %3516 = vmatprep.subr.mxu0 0.0
    %3517 = vmatpush1.msra.mxu0 0.0
    %3518 = vmatprep.subr.mxu0 0.0
    %3519 = vmatpush1.msra.mxu0 0.0
    %3520 = vmatprep.subr.mxu0 0.0
    %3521 = vmatpush1.msra.mxu0 0.0
    %3522 = vmatprep.subr.mxu0 0.0
    %3523 = vmatpush1.msra.mxu0 0.0
    %3524 = vmatprep.subr.mxu0 0.0
    %3525 = vmatpush1.msra.mxu0 0.0
    %3526 = vmatprep.subr.mxu0 0.0
    %3527 = vmatpush1.msra.mxu0 0.0
    %3528 = vmatprep.subr.mxu0 0.0
    %3529 = vmatpush1.msra.mxu0 0.0
    %3530 = vmatprep.subr.mxu0 0.0
    %3531 = vmatpush1.msra.mxu0 %v3495
    %3532 = vmatprep.subr.mxu0 0.0
    %3533 = vmatpush1.msra.mxu0 %v3494
    %3534 = vmatprep.subr.mxu0 0.0
    %3535 = vmatpush2.msra.mxu0 0.0
    %3536 = vmatprep.subr.mxu0 0.0
    %3537 = vmatpush2.msra.mxu0 0.0
    %3538 = vmatprep.subr.mxu0 0.0
    %3539 = vmatpush2.msra.mxu0 0.0
    %3540 = vmatprep.subr.mxu0 0.0
    %3541 = vmatpush2.msra.mxu0 0.0
    %3542 = vmatprep.subr.mxu0 0.0
    %3543 = vmatpush2.msra.mxu0 0.0
    %3544 = vmatprep.subr.mxu0 0.0
    %3545 = vmatpush2.msra.mxu0 0.0
    %3546 = vmatprep.subr.mxu0 0.0
    %3547 = vmatpush2.msra.mxu0 0.0
    %3548 = vmatprep.subr.mxu0 0.0
    %3549 = vmatpush2.msra.mxu0 0.0
    %3550 = vmatprep.subr.mxu0 0.0
    %3551 = vmatpush2.msra.mxu0 0.0
    %3552 = vmatprep.subr.mxu0 0.0
    %3553 = vmatpush2.msra.mxu0 0.0
    %3554 = vmatprep.subr.mxu0 0.0
    %3555 = vmatpush2.msra.mxu0 0.0
    %3556 = vmatprep.subr.mxu0 0.0
    %3557 = vmatpush2.msra.mxu0 0.0
    %3558 = vmatprep.subr.mxu0 0.0
    %3559 = vmatpush2.msra.mxu0 0.0
    %3560 = vmatprep.subr.mxu0 0.0
    %3561 = vmatpush2.msra.mxu0 0.0
    %3562 = vmatprep.subr.mxu0 0.0
    %3563 = vmatpush2.msra.mxu0 0.0
    %3564 = vmatprep.subr.mxu0 0.0
    %3565 = vmatpush2.msra.mxu0 0.0
    %3566 = vmatprep.mubr.f32.mxu0 0.0
    %3567 = vmatmul.mubr.f32.gmra.mxu0 %v3497
    %v3568 = vpop.f32.mrf.mxu0
    %v3569 = vadd.f32 0.0, %v3568
    %v3570 = vpop.f32.mrf.mxu0
    %3571 = vmatprep.mubr.f32.mxu0 0.0
    %3572 = vmatmul.mubr.f32.gmra.mxu0 %v3500
    %v3573 = vpop.f32.mrf.mxu0
    %v3574 = vadd.f32 0.0, %v3573
    %v3575 = vpop.f32.mrf.mxu0
    %3576 = vdwg.mxu0
    %v3577 = vadd.f32 %v3491, %v3569
    %v3578 = vadd.f32 %v3492, %v3574
    %s3579 = scalar_lea.vmem [#allocation12], 64
    %v3580 = vld [vmem:[%s3579] sm:$0xff]
    %v3581 = vld [vmem:[%s3579 + $0x8] sm:$0xff]
    %v3583 = vsel %vm1299, %v3212, 0
    %v3586 = vsel %vm1299, %v3217, 0
    %3588 = vmatprep.subr.mxu0 0.0
    %3589 = vmatpush1.msra.mxu0 0.0
    %3590 = vmatprep.subr.mxu0 0.0
    %3591 = vmatpush1.msra.mxu0 0.0
    %3592 = vmatprep.subr.mxu0 0.0
    %3593 = vmatpush1.msra.mxu0 0.0
    %3594 = vmatprep.subr.mxu0 0.0
    %3595 = vmatpush1.msra.mxu0 0.0
    %3596 = vmatprep.subr.mxu0 0.0
    %3597 = vmatpush1.msra.mxu0 0.0
    %3598 = vmatprep.subr.mxu0 0.0
    %3599 = vmatpush1.msra.mxu0 0.0
    %3600 = vmatprep.subr.mxu0 0.0
    %3601 = vmatpush1.msra.mxu0 0.0
    %3602 = vmatprep.subr.mxu0 0.0
    %3603 = vmatpush1.msra.mxu0 0.0
    %3604 = vmatprep.subr.mxu0 0.0
    %3605 = vmatpush1.msra.mxu0 0.0
    %3606 = vmatprep.subr.mxu0 0.0
    %3607 = vmatpush1.msra.mxu0 0.0
    %3608 = vmatprep.subr.mxu0 0.0
    %3609 = vmatpush1.msra.mxu0 0.0
    %3610 = vmatprep.subr.mxu0 0.0
    %3611 = vmatpush1.msra.mxu0 0.0
    %3612 = vmatprep.subr.mxu0 0.0
    %3613 = vmatpush1.msra.mxu0 0.0
    %3614 = vmatprep.subr.mxu0 0.0
    %3615 = vmatpush1.msra.mxu0 0.0
    %3616 = vmatprep.subr.mxu0 0.0
    %3617 = vmatpush1.msra.mxu0 %v3581
    %3618 = vmatprep.subr.mxu0 0.0
    %3619 = vmatpush1.msra.mxu0 %v3580
    %3620 = vmatprep.subr.mxu0 0.0
    %3621 = vmatpush2.msra.mxu0 0.0
    %3622 = vmatprep.subr.mxu0 0.0
    %3623 = vmatpush2.msra.mxu0 0.0
    %3624 = vmatprep.subr.mxu0 0.0
    %3625 = vmatpush2.msra.mxu0 0.0
    %3626 = vmatprep.subr.mxu0 0.0
    %3627 = vmatpush2.msra.mxu0 0.0
    %3628 = vmatprep.subr.mxu0 0.0
    %3629 = vmatpush2.msra.mxu0 0.0
    %3630 = vmatprep.subr.mxu0 0.0
    %3631 = vmatpush2.msra.mxu0 0.0
    %3632 = vmatprep.subr.mxu0 0.0
    %3633 = vmatpush2.msra.mxu0 0.0
    %3634 = vmatprep.subr.mxu0 0.0
    %3635 = vmatpush2.msra.mxu0 0.0
    %3636 = vmatprep.subr.mxu0 0.0
    %3637 = vmatpush2.msra.mxu0 0.0
    %3638 = vmatprep.subr.mxu0 0.0
    %3639 = vmatpush2.msra.mxu0 0.0
    %3640 = vmatprep.subr.mxu0 0.0
    %3641 = vmatpush2.msra.mxu0 0.0
    %3642 = vmatprep.subr.mxu0 0.0
    %3643 = vmatpush2.msra.mxu0 0.0
    %3644 = vmatprep.subr.mxu0 0.0
    %3645 = vmatpush2.msra.mxu0 0.0
    %3646 = vmatprep.subr.mxu0 0.0
    %3647 = vmatpush2.msra.mxu0 0.0
    %3648 = vmatprep.subr.mxu0 0.0
    %3649 = vmatpush2.msra.mxu0 0.0
    %3650 = vmatprep.subr.mxu0 0.0
    %3651 = vmatpush2.msra.mxu0 0.0
    %3652 = vmatprep.mubr.f32.mxu0 0.0
    %3653 = vmatmul.mubr.f32.gmra.mxu0 %v3583
    %v3654 = vpop.f32.mrf.mxu0
    %v3655 = vadd.f32 0.0, %v3654
    %v3656 = vpop.f32.mrf.mxu0
    %3657 = vmatprep.mubr.f32.mxu0 0.0
    %3658 = vmatmul.mubr.f32.gmra.mxu0 %v3586
    %v3659 = vpop.f32.mrf.mxu0
    %v3660 = vadd.f32 0.0, %v3659
    %v3661 = vpop.f32.mrf.mxu0
    %3662 = vdwg.mxu0
    %v3663 = vadd.f32 %v3577, %v3655
    %v3664 = vadd.f32 %v3578, %v3660
    %s3665 = scalar_lea.vmem [#allocation12], 80
    %v3666 = vld [vmem:[%s3665] sm:$0xff]
    %v3667 = vld [vmem:[%s3665 + $0x8] sm:$0xff]
    %v3669 = vsel %vm1299, %v3222, 0
    %v3672 = vsel %vm1299, %v3227, 0
    %3674 = vmatprep.subr.mxu0 0.0
    %3675 = vmatpush1.msra.mxu0 0.0
    %3676 = vmatprep.subr.mxu0 0.0
    %3677 = vmatpush1.msra.mxu0 0.0
    %3678 = vmatprep.subr.mxu0 0.0
    %3679 = vmatpush1.msra.mxu0 0.0
    %3680 = vmatprep.subr.mxu0 0.0
    %3681 = vmatpush1.msra.mxu0 0.0
    %3682 = vmatprep.subr.mxu0 0.0
    %3683 = vmatpush1.msra.mxu0 0.0
    %3684 = vmatprep.subr.mxu0 0.0
    %3685 = vmatpush1.msra.mxu0 0.0
    %3686 = vmatprep.subr.mxu0 0.0
    %3687 = vmatpush1.msra.mxu0 0.0
    %3688 = vmatprep.subr.mxu0 0.0
    %3689 = vmatpush1.msra.mxu0 0.0
    %3690 = vmatprep.subr.mxu0 0.0
    %3691 = vmatpush1.msra.mxu0 0.0
    %3692 = vmatprep.subr.mxu0 0.0
    %3693 = vmatpush1.msra.mxu0 0.0
    %3694 = vmatprep.subr.mxu0 0.0
    %3695 = vmatpush1.msra.mxu0 0.0
    %3696 = vmatprep.subr.mxu0 0.0
    %3697 = vmatpush1.msra.mxu0 0.0
    %3698 = vmatprep.subr.mxu0 0.0
    %3699 = vmatpush1.msra.mxu0 0.0
    %3700 = vmatprep.subr.mxu0 0.0
    %3701 = vmatpush1.msra.mxu0 0.0
    %3702 = vmatprep.subr.mxu0 0.0
    %3703 = vmatpush1.msra.mxu0 %v3667
    %3704 = vmatprep.subr.mxu0 0.0
    %3705 = vmatpush1.msra.mxu0 %v3666
    %3706 = vmatprep.subr.mxu0 0.0
    %3707 = vmatpush2.msra.mxu0 0.0
    %3708 = vmatprep.subr.mxu0 0.0
    %3709 = vmatpush2.msra.mxu0 0.0
    %3710 = vmatprep.subr.mxu0 0.0
    %3711 = vmatpush2.msra.mxu0 0.0
    %3712 = vmatprep.subr.mxu0 0.0
    %3713 = vmatpush2.msra.mxu0 0.0
    %3714 = vmatprep.subr.mxu0 0.0
    %3715 = vmatpush2.msra.mxu0 0.0
    %3716 = vmatprep.subr.mxu0 0.0
    %3717 = vmatpush2.msra.mxu0 0.0
    %3718 = vmatprep.subr.mxu0 0.0
    %3719 = vmatpush2.msra.mxu0 0.0
    %3720 = vmatprep.subr.mxu0 0.0
    %3721 = vmatpush2.msra.mxu0 0.0
    %3722 = vmatprep.subr.mxu0 0.0
    %3723 = vmatpush2.msra.mxu0 0.0
    %3724 = vmatprep.subr.mxu0 0.0
    %3725 = vmatpush2.msra.mxu0 0.0
    %3726 = vmatprep.subr.mxu0 0.0
    %3727 = vmatpush2.msra.mxu0 0.0
    %3728 = vmatprep.subr.mxu0 0.0
    %3729 = vmatpush2.msra.mxu0 0.0
    %3730 = vmatprep.subr.mxu0 0.0
    %3731 = vmatpush2.msra.mxu0 0.0
    %3732 = vmatprep.subr.mxu0 0.0
    %3733 = vmatpush2.msra.mxu0 0.0
    %3734 = vmatprep.subr.mxu0 0.0
    %3735 = vmatpush2.msra.mxu0 0.0
    %3736 = vmatprep.subr.mxu0 0.0
    %3737 = vmatpush2.msra.mxu0 0.0
    %3738 = vmatprep.mubr.f32.mxu0 0.0
    %3739 = vmatmul.mubr.f32.gmra.mxu0 %v3669
    %v3740 = vpop.f32.mrf.mxu0
    %v3741 = vadd.f32 0.0, %v3740
    %v3742 = vpop.f32.mrf.mxu0
    %3743 = vmatprep.mubr.f32.mxu0 0.0
    %3744 = vmatmul.mubr.f32.gmra.mxu0 %v3672
    %v3745 = vpop.f32.mrf.mxu0
    %v3746 = vadd.f32 0.0, %v3745
    %v3747 = vpop.f32.mrf.mxu0
    %3748 = vdwg.mxu0
    %v3749 = vadd.f32 %v3663, %v3741
    %v3750 = vadd.f32 %v3664, %v3746
    %s3751 = scalar_lea.vmem [#allocation12], 96
    %v3752 = vld [vmem:[%s3751] sm:$0xff]
    %v3753 = vld [vmem:[%s3751 + $0x8] sm:$0xff]
    %v3755 = vsel %vm1299, %v3232, 0
    %v3758 = vsel %vm1299, %v3237, 0
    %3760 = vmatprep.subr.mxu0 0.0
    %3761 = vmatpush1.msra.mxu0 0.0
    %3762 = vmatprep.subr.mxu0 0.0
    %3763 = vmatpush1.msra.mxu0 0.0
    %3764 = vmatprep.subr.mxu0 0.0
    %3765 = vmatpush1.msra.mxu0 0.0
    %3766 = vmatprep.subr.mxu0 0.0
    %3767 = vmatpush1.msra.mxu0 0.0
    %3768 = vmatprep.subr.mxu0 0.0
    %3769 = vmatpush1.msra.mxu0 0.0
    %3770 = vmatprep.subr.mxu0 0.0
    %3771 = vmatpush1.msra.mxu0 0.0
    %3772 = vmatprep.subr.mxu0 0.0
    %3773 = vmatpush1.msra.mxu0 0.0
    %3774 = vmatprep.subr.mxu0 0.0
    %3775 = vmatpush1.msra.mxu0 0.0
    %3776 = vmatprep.subr.mxu0 0.0
    %3777 = vmatpush1.msra.mxu0 0.0
    %3778 = vmatprep.subr.mxu0 0.0
    %3779 = vmatpush1.msra.mxu0 0.0
    %3780 = vmatprep.subr.mxu0 0.0
    %3781 = vmatpush1.msra.mxu0 0.0
    %3782 = vmatprep.subr.mxu0 0.0
    %3783 = vmatpush1.msra.mxu0 0.0
    %3784 = vmatprep.subr.mxu0 0.0
    %3785 = vmatpush1.msra.mxu0 0.0
    %3786 = vmatprep.subr.mxu0 0.0
    %3787 = vmatpush1.msra.mxu0 0.0
    %3788 = vmatprep.subr.mxu0 0.0
    %3789 = vmatpush1.msra.mxu0 %v3753
    %3790 = vmatprep.subr.mxu0 0.0
    %3791 = vmatpush1.msra.mxu0 %v3752
    %3792 = vmatprep.subr.mxu0 0.0
    %3793 = vmatpush2.msra.mxu0 0.0
    %3794 = vmatprep.subr.mxu0 0.0
    %3795 = vmatpush2.msra.mxu0 0.0
    %3796 = vmatprep.subr.mxu0 0.0
    %3797 = vmatpush2.msra.mxu0 0.0
    %3798 = vmatprep.subr.mxu0 0.0
    %3799 = vmatpush2.msra.mxu0 0.0
    %3800 = vmatprep.subr.mxu0 0.0
    %3801 = vmatpush2.msra.mxu0 0.0
    %3802 = vmatprep.subr.mxu0 0.0
    %3803 = vmatpush2.msra.mxu0 0.0
    %3804 = vmatprep.subr.mxu0 0.0
    %3805 = vmatpush2.msra.mxu0 0.0
    %3806 = vmatprep.subr.mxu0 0.0
    %3807 = vmatpush2.msra.mxu0 0.0
    %3808 = vmatprep.subr.mxu0 0.0
    %3809 = vmatpush2.msra.mxu0 0.0
    %3810 = vmatprep.subr.mxu0 0.0
    %3811 = vmatpush2.msra.mxu0 0.0
    %3812 = vmatprep.subr.mxu0 0.0
    %3813 = vmatpush2.msra.mxu0 0.0
    %3814 = vmatprep.subr.mxu0 0.0
    %3815 = vmatpush2.msra.mxu0 0.0
    %3816 = vmatprep.subr.mxu0 0.0
    %3817 = vmatpush2.msra.mxu0 0.0
    %3818 = vmatprep.subr.mxu0 0.0
    %3819 = vmatpush2.msra.mxu0 0.0
    %3820 = vmatprep.subr.mxu0 0.0
    %3821 = vmatpush2.msra.mxu0 0.0
    %3822 = vmatprep.subr.mxu0 0.0
    %3823 = vmatpush2.msra.mxu0 0.0
    %3824 = vmatprep.mubr.f32.mxu0 0.0
    %3825 = vmatmul.mubr.f32.gmra.mxu0 %v3755
    %v3826 = vpop.f32.mrf.mxu0
    %v3827 = vadd.f32 0.0, %v3826
    %v3828 = vpop.f32.mrf.mxu0
    %3829 = vmatprep.mubr.f32.mxu0 0.0
    %3830 = vmatmul.mubr.f32.gmra.mxu0 %v3758
    %v3831 = vpop.f32.mrf.mxu0
    %v3832 = vadd.f32 0.0, %v3831
    %v3833 = vpop.f32.mrf.mxu0
    %3834 = vdwg.mxu0
    %v3835 = vadd.f32 %v3749, %v3827
    %v3836 = vadd.f32 %v3750, %v3832
    %3838 = vset.pattern.permute.xlu0 0
    %3839 = vperm.xlu0 %3838, %v3061
    %v3840 = vpop.permute.xlu0 %3839
    %3843 = vset.pattern.permute.xlu0 0
    %3844 = vperm.xlu0 %3843, %v3062
    %v3845 = vpop.permute.xlu0 %3844
    %v3847 = vadd.f32 %v3835, %v3840
    %v3848 = vadd.f32 %v3836, %v3845
    %v3849 = vsel %vm1299, %v3847, 0.0
    %3850 = vadd.xlane.f32.xlu0 %v3849
    %v3851 = vpop.xlane.xlu0 %3850
    %v3852 = vsel %vm1299, %v3848, 0.0
    %3853 = vadd.xlane.f32.xlu0 %v3852
    %v3854 = vpop.xlane.xlu0 %3853
    %v3855 = vmul.f32 %v3851, %v2982
    %v3856 = vmul.f32 %v3854, %v2982
    %v3857 = vsub.f32 %v3847, %v3855
    %v3858 = vsub.f32 %v3848, %v3856
    %v3859 = vmul.f32 %v3857, %v3857
    %v3860 = vmul.f32 %v3858, %v3858
    %v3861 = vsel %vm1299, %v3859, 0.0
    %3862 = vadd.xlane.f32.xlu0 %v3861
    %v3863 = vpop.xlane.xlu0 %3862
    %v3864 = vsel %vm1299, %v3860, 0.0
    %3865 = vadd.xlane.f32.xlu0 %v3864
    %v3866 = vpop.xlane.xlu0 %3865
    %v3867 = vmul.f32 %v3863, %v2982
    %v3868 = vmul.f32 %v3866, %v2982
    %v3869 = vadd.f32 %v3867, 1e-05
    %v3870 = vadd.f32 %v3868, 1e-05
    %v3871 = vrsqrt.pop %v3869
    %v3872 = vrsqrt.pop %v3870
    %v3873 = vmul.f32 %v3857, %v3871
    %v3874 = vmul.f32 %v3858, %v3872
    %v3875 = vld [vmem:[%s41] sm:$0xff]
    %v3876 = vld [vmem:[%s41 + $0x8] sm:$0xff]
    %3878 = vset.pattern.permute.xlu0 0
    %3879 = vperm.xlu0 %3878, %v3875
    %v3880 = vpop.permute.xlu0 %3879
    %3883 = vset.pattern.permute.xlu0 0
    %3884 = vperm.xlu0 %3883, %v3876
    %v3885 = vpop.permute.xlu0 %3884
    %v3887 = vmul.f32 %v3873, %v3880
    %v3888 = vmul.f32 %v3874, %v3885
    %v3889 = vld [vmem:[%s35] sm:$0xff]
    %v3890 = vld [vmem:[%s35 + $0x8] sm:$0xff]
    %3892 = vset.pattern.permute.xlu0 0
    %3893 = vperm.xlu0 %3892, %v3889
    %v3894 = vpop.permute.xlu0 %3893
    %3897 = vset.pattern.permute.xlu0 0
    %3898 = vperm.xlu0 %3897, %v3890
    %v3899 = vpop.permute.xlu0 %3898
    %v3901 = vadd.f32 %v3887, %v3894
    %v3902 = vadd.f32 %v3888, %v3899
    %v3903 = vmul.f32 %v3901, 1.702
    %v3904 = vmul.f32 %v3902, 1.702
    %v3905 = vxor.u32 %v3903, 2147483648
    %v3906 = vxor.u32 %v3904, 2147483648
    %v3907 = vmul.f32 %v3905, 1.442695
    %v3908 = vpow.pop %v3907
    %v3909 = vmul.f32 %v3906, 1.442695
    %v3910 = vpow.pop %v3909
    %v3911 = vadd.f32 %v3908, 1.0
    %v3912 = vadd.f32 %v3910, 1.0
    %v3913 = vrcp.pop %v3911
    %v3914 = vmul.f32 1.0, %v3913
    %v3915 = vrcp.pop %v3912
    %v3916 = vmul.f32 1.0, %v3915
    %v3917 = vmul.f32 %v3914, %v3901
    %v3918 = vmul.f32 %v3916, %v3902
    %v3919 = vld [vmem:[#allocation15] sm:$0xff]
    %v3920 = vld [vmem:[#allocation15 + $0x8] sm:$0xff]
    %v3921 = vld [vmem:[%s37] sm:$0xff]
    %v3922 = vld [vmem:[%s37 + $0x8] sm:$0xff]
    %3924 = vset.pattern.permute.xlu0 0
    %3925 = vperm.xlu0 %3924, %v3921
    %v3926 = vpop.permute.xlu0 %3925
    %3929 = vset.pattern.permute.xlu0 0
    %3930 = vperm.xlu0 %3929, %v3922
    %v3931 = vpop.permute.xlu0 %3930
    %v3934 = vsel %vm1299, %v3919, 0
    %v3937 = vsel %vm1299, %v3920, 0
    %3939 = vmatprep.subr.mxu0 0.0
    %3940 = vmatpush1.msra.mxu0 0.0
    %3941 = vmatprep.subr.mxu0 0.0
    %3942 = vmatpush1.msra.mxu0 0.0
    %3943 = vmatprep.subr.mxu0 0.0
    %3944 = vmatpush1.msra.mxu0 0.0
    %3945 = vmatprep.subr.mxu0 0.0
    %3946 = vmatpush1.msra.mxu0 0.0
    %3947 = vmatprep.subr.mxu0 0.0
    %3948 = vmatpush1.msra.mxu0 0.0
    %3949 = vmatprep.subr.mxu0 0.0
    %3950 = vmatpush1.msra.mxu0 0.0
    %3951 = vmatprep.subr.mxu0 0.0
    %3952 = vmatpush1.msra.mxu0 0.0
    %3953 = vmatprep.subr.mxu0 0.0
    %3954 = vmatpush1.msra.mxu0 0.0
    %3955 = vmatprep.subr.mxu0 0.0
    %3956 = vmatpush1.msra.mxu0 0.0
    %3957 = vmatprep.subr.mxu0 0.0
    %3958 = vmatpush1.msra.mxu0 0.0
    %3959 = vmatprep.subr.mxu0 0.0
    %3960 = vmatpush1.msra.mxu0 0.0
    %3961 = vmatprep.subr.mxu0 0.0
    %3962 = vmatpush1.msra.mxu0 0.0
    %3963 = vmatprep.subr.mxu0 0.0
    %3964 = vmatpush1.msra.mxu0 0.0
    %3965 = vmatprep.subr.mxu0 0.0
    %3966 = vmatpush1.msra.mxu0 0.0
    %3967 = vmatprep.subr.mxu0 0.0
    %3968 = vmatpush1.msra.mxu0 %v3918
    %3969 = vmatprep.subr.mxu0 0.0
    %3970 = vmatpush1.msra.mxu0 %v3917
    %3971 = vmatprep.subr.mxu0 0.0
    %3972 = vmatpush2.msra.mxu0 0.0
    %3973 = vmatprep.subr.mxu0 0.0
    %3974 = vmatpush2.msra.mxu0 0.0
    %3975 = vmatprep.subr.mxu0 0.0
    %3976 = vmatpush2.msra.mxu0 0.0
    %3977 = vmatprep.subr.mxu0 0.0
    %3978 = vmatpush2.msra.mxu0 0.0
    %3979 = vmatprep.subr.mxu0 0.0
    %3980 = vmatpush2.msra.mxu0 0.0
    %3981 = vmatprep.subr.mxu0 0.0
    %3982 = vmatpush2.msra.mxu0 0.0
    %3983 = vmatprep.subr.mxu0 0.0
    %3984 = vmatpush2.msra.mxu0 0.0
    %3985 = vmatprep.subr.mxu0 0.0
    %3986 = vmatpush2.msra.mxu0 0.0
    %3987 = vmatprep.subr.mxu0 0.0
    %3988 = vmatpush2.msra.mxu0 0.0
    %3989 = vmatprep.subr.mxu0 0.0
    %3990 = vmatpush2.msra.mxu0 0.0
    %3991 = vmatprep.subr.mxu0 0.0
    %3992 = vmatpush2.msra.mxu0 0.0
    %3993 = vmatprep.subr.mxu0 0.0
    %3994 = vmatpush2.msra.mxu0 0.0
    %3995 = vmatprep.subr.mxu0 0.0
    %3996 = vmatpush2.msra.mxu0 0.0
    %3997 = vmatprep.subr.mxu0 0.0
    %3998 = vmatpush2.msra.mxu0 0.0
    %3999 = vmatprep.subr.mxu0 0.0
    %4000 = vmatpush2.msra.mxu0 0.0
    %4001 = vmatprep.subr.mxu0 0.0
    %4002 = vmatpush2.msra.mxu0 0.0
    %4003 = vmatprep.mubr.f32.mxu0 0.0
    %4004 = vmatmul.mubr.f32.gmra.mxu0 %v3934
    %v4005 = vpop.f32.mrf.mxu0
    %v4006 = vadd.f32 %v3926, %v4005
    %v4007 = vpop.f32.mrf.mxu0
    %4008 = vmatprep.mubr.f32.mxu0 0.0
    %4009 = vmatmul.mubr.f32.gmra.mxu0 %v3937
    %v4010 = vpop.f32.mrf.mxu0
    %v4011 = vadd.f32 %v3931, %v4010
    %v4012 = vpop.f32.mrf.mxu0
    %4013 = vdwg.mxu0
    %v4014 = vadd.f32 %v4006, %v3847
    %v4015 = vadd.f32 %v4011, %v3848
    %v4016 = vld [vmem:[#allocation17] sm:$0xff]
    %v4017 = vld [vmem:[#allocation17 + $0x8] sm:$0xff]
    %v4019 = vsel %vm1299, %v4014, 0
    %v4022 = vsel %vm1299, %v4015, 0
    %4024 = vmatprep.subr.mxu0 0.0
    %4025 = vmatpush1.msra.mxu0 0.0
    %4026 = vmatprep.subr.mxu0 0.0
    %4027 = vmatpush1.msra.mxu0 0.0
    %4028 = vmatprep.subr.mxu0 0.0
    %4029 = vmatpush1.msra.mxu0 0.0
    %4030 = vmatprep.subr.mxu0 0.0
    %4031 = vmatpush1.msra.mxu0 0.0
    %4032 = vmatprep.subr.mxu0 0.0
    %4033 = vmatpush1.msra.mxu0 0.0
    %4034 = vmatprep.subr.mxu0 0.0
    %4035 = vmatpush1.msra.mxu0 0.0
    %4036 = vmatprep.subr.mxu0 0.0
    %4037 = vmatpush1.msra.mxu0 0.0
    %4038 = vmatprep.subr.mxu0 0.0
    %4039 = vmatpush1.msra.mxu0 0.0
    %4040 = vmatprep.subr.mxu0 0.0
    %4041 = vmatpush1.msra.mxu0 0.0
    %4042 = vmatprep.subr.mxu0 0.0
    %4043 = vmatpush1.msra.mxu0 0.0
    %4044 = vmatprep.subr.mxu0 0.0
    %4045 = vmatpush1.msra.mxu0 0.0
    %4046 = vmatprep.subr.mxu0 0.0
    %4047 = vmatpush1.msra.mxu0 0.0
    %4048 = vmatprep.subr.mxu0 0.0
    %4049 = vmatpush1.msra.mxu0 0.0
    %4050 = vmatprep.subr.mxu0 0.0
    %4051 = vmatpush1.msra.mxu0 0.0
    %4052 = vmatprep.subr.mxu0 0.0
    %4053 = vmatpush1.msra.mxu0 %v4017
    %4054 = vmatprep.subr.mxu0 0.0
    %4055 = vmatpush1.msra.mxu0 %v4016
    %4056 = vmatprep.subr.mxu0 0.0
    %4057 = vmatpush2.msra.mxu0 0.0
    %4058 = vmatprep.subr.mxu0 0.0
    %4059 = vmatpush2.msra.mxu0 0.0
    %4060 = vmatprep.subr.mxu0 0.0
    %4061 = vmatpush2.msra.mxu0 0.0
    %4062 = vmatprep.subr.mxu0 0.0
    %4063 = vmatpush2.msra.mxu0 0.0
    %4064 = vmatprep.subr.mxu0 0.0
    %4065 = vmatpush2.msra.mxu0 0.0
    %4066 = vmatprep.subr.mxu0 0.0
    %4067 = vmatpush2.msra.mxu0 0.0
    %4068 = vmatprep.subr.mxu0 0.0
    %4069 = vmatpush2.msra.mxu0 0.0
    %4070 = vmatprep.subr.mxu0 0.0
    %4071 = vmatpush2.msra.mxu0 0.0
    %4072 = vmatprep.subr.mxu0 0.0
    %4073 = vmatpush2.msra.mxu0 0.0
    %4074 = vmatprep.subr.mxu0 0.0
    %4075 = vmatpush2.msra.mxu0 0.0
    %4076 = vmatprep.subr.mxu0 0.0
    %4077 = vmatpush2.msra.mxu0 0.0
    %4078 = vmatprep.subr.mxu0 0.0
    %4079 = vmatpush2.msra.mxu0 0.0
    %4080 = vmatprep.subr.mxu0 0.0
    %4081 = vmatpush2.msra.mxu0 0.0
    %4082 = vmatprep.subr.mxu0 0.0
    %4083 = vmatpush2.msra.mxu0 0.0
    %4084 = vmatprep.subr.mxu0 0.0
    %4085 = vmatpush2.msra.mxu0 0.0
    %4086 = vmatprep.subr.mxu0 0.0
    %4087 = vmatpush2.msra.mxu0 0.0
    %4088 = vmatprep.mubr.f32.mxu0 0.0
    %4089 = vmatmul.mubr.f32.gmra.mxu0 %v4019
    %v4090 = vpop.f32.mrf.mxu0
    %v4091 = vadd.f32 0.0, %v4090
    %v4092 = vpop.f32.mrf.mxu0
    %4093 = vmatprep.mubr.f32.mxu0 0.0
    %4094 = vmatmul.mubr.f32.gmra.mxu0 %v4022
    %v4095 = vpop.f32.mrf.mxu0
    %v4096 = vadd.f32 0.0, %v4095
    %v4097 = vpop.f32.mrf.mxu0
    %4098 = vdwg.mxu0
    %v4099 = vld [vmem:[#allocation18] sm:$0xff]
    %v4100 = vld [vmem:[#allocation18 + $0x8] sm:$0xff]
    %4101 = vmatprep.subr.mxu0 0.0
    %4102 = vmatpush1.msra.mxu0 0.0
    %4103 = vmatprep.subr.mxu0 0.0
    %4104 = vmatpush1.msra.mxu0 0.0
    %4105 = vmatprep.subr.mxu0 0.0
    %4106 = vmatpush1.msra.mxu0 0.0
    %4107 = vmatprep.subr.mxu0 0.0
    %4108 = vmatpush1.msra.mxu0 0.0
    %4109 = vmatprep.subr.mxu0 0.0
    %4110 = vmatpush1.msra.mxu0 0.0
    %4111 = vmatprep.subr.mxu0 0.0
    %4112 = vmatpush1.msra.mxu0 0.0
    %4113 = vmatprep.subr.mxu0 0.0
    %4114 = vmatpush1.msra.mxu0 0.0
    %4115 = vmatprep.subr.mxu0 0.0
    %4116 = vmatpush1.msra.mxu0 0.0
    %4117 = vmatprep.subr.mxu0 0.0
    %4118 = vmatpush1.msra.mxu0 0.0
    %4119 = vmatprep.subr.mxu0 0.0
    %4120 = vmatpush1.msra.mxu0 0.0
    %4121 = vmatprep.subr.mxu0 0.0
    %4122 = vmatpush1.msra.mxu0 0.0
    %4123 = vmatprep.subr.mxu0 0.0
    %4124 = vmatpush1.msra.mxu0 0.0
    %4125 = vmatprep.subr.mxu0 0.0
    %4126 = vmatpush1.msra.mxu0 0.0
    %4127 = vmatprep.subr.mxu0 0.0
    %4128 = vmatpush1.msra.mxu0 0.0
    %4129 = vmatprep.subr.mxu0 0.0
    %4130 = vmatpush1.msra.mxu0 %v4100
    %4131 = vmatprep.subr.mxu0 0.0
    %4132 = vmatpush1.msra.mxu0 %v4099
    %4133 = vmatprep.subr.mxu0 0.0
    %4134 = vmatpush2.msra.mxu0 0.0
    %4135 = vmatprep.subr.mxu0 0.0
    %4136 = vmatpush2.msra.mxu0 0.0
    %4137 = vmatprep.subr.mxu0 0.0
    %4138 = vmatpush2.msra.mxu0 0.0
    %4139 = vmatprep.subr.mxu0 0.0
    %4140 = vmatpush2.msra.mxu0 0.0
    %4141 = vmatprep.subr.mxu0 0.0
    %4142 = vmatpush2.msra.mxu0 0.0
    %4143 = vmatprep.subr.mxu0 0.0
    %4144 = vmatpush2.msra.mxu0 0.0
    %4145 = vmatprep.subr.mxu0 0.0
    %4146 = vmatpush2.msra.mxu0 0.0
    %4147 = vmatprep.subr.mxu0 0.0
    %4148 = vmatpush2.msra.mxu0 0.0
    %4149 = vmatprep.subr.mxu0 0.0
    %4150 = vmatpush2.msra.mxu0 0.0
    %4151 = vmatprep.subr.mxu0 0.0
    %4152 = vmatpush2.msra.mxu0 0.0
    %4153 = vmatprep.subr.mxu0 0.0
    %4154 = vmatpush2.msra.mxu0 0.0
    %4155 = vmatprep.subr.mxu0 0.0
    %4156 = vmatpush2.msra.mxu0 0.0
    %4157 = vmatprep.subr.mxu0 0.0
    %4158 = vmatpush2.msra.mxu0 0.0
    %4159 = vmatprep.subr.mxu0 0.0
    %4160 = vmatpush2.msra.mxu0 0.0
    %4161 = vmatprep.subr.mxu0 0.0
    %4162 = vmatpush2.msra.mxu0 0.0
    %4163 = vmatprep.subr.mxu0 0.0
    %4164 = vmatpush2.msra.mxu0 0.0
    %4165 = vmatprep.mubr.f32.mxu0 0.0
    %4166 = vmatmul.mubr.f32.gmra.mxu0 %v4019
    %v4167 = vpop.f32.mrf.mxu0
    %v4168 = vadd.f32 0.0, %v4167
    %v4169 = vpop.f32.mrf.mxu0
    %4170 = vmatprep.mubr.f32.mxu0 0.0
    %4171 = vmatmul.mubr.f32.gmra.mxu0 %v4022
    %v4172 = vpop.f32.mrf.mxu0
    %v4173 = vadd.f32 0.0, %v4172
    %v4174 = vpop.f32.mrf.mxu0
    %4175 = vdwg.mxu0
    %v4176 = vsub.f32 %v4091, %v4168
    %v4177 = vsub.f32 %v4096, %v4173
    %v4178 = vld [vmem:[#allocation20] sm:$0xff]
    %v4179 = vld [vmem:[#allocation20 + $0x8] sm:$0xff]
    %v4181 = vsel %vm1299, %v4178, 0
    %v4184 = vsel %vm1299, %v4179, 0
    %4186 = vmatprep.subr.mxu0 0.0
    %4187 = vmatpush1.msra.mxu0 0.0
    %4188 = vmatprep.subr.mxu0 0.0
    %4189 = vmatpush1.msra.mxu0 0.0
    %4190 = vmatprep.subr.mxu0 0.0
    %4191 = vmatpush1.msra.mxu0 0.0
    %4192 = vmatprep.subr.mxu0 0.0
    %4193 = vmatpush1.msra.mxu0 0.0
    %4194 = vmatprep.subr.mxu0 0.0
    %4195 = vmatpush1.msra.mxu0 0.0
    %4196 = vmatprep.subr.mxu0 0.0
    %4197 = vmatpush1.msra.mxu0 0.0
    %4198 = vmatprep.subr.mxu0 0.0
    %4199 = vmatpush1.msra.mxu0 0.0
    %4200 = vmatprep.subr.mxu0 0.0
    %4201 = vmatpush1.msra.mxu0 0.0
    %4202 = vmatprep.subr.mxu0 0.0
    %4203 = vmatpush1.msra.mxu0 0.0
    %4204 = vmatprep.subr.mxu0 0.0
    %4205 = vmatpush1.msra.mxu0 0.0
    %4206 = vmatprep.subr.mxu0 0.0
    %4207 = vmatpush1.msra.mxu0 0.0
    %4208 = vmatprep.subr.mxu0 0.0
    %4209 = vmatpush1.msra.mxu0 0.0
    %4210 = vmatprep.subr.mxu0 0.0
    %4211 = vmatpush1.msra.mxu0 0.0
    %4212 = vmatprep.subr.mxu0 0.0
    %4213 = vmatpush1.msra.mxu0 0.0
    %4214 = vmatprep.subr.mxu0 0.0
    %4215 = vmatpush1.msra.mxu0 %v4177
    %4216 = vmatprep.subr.mxu0 0.0
    %4217 = vmatpush1.msra.mxu0 %v4176
    %4218 = vmatprep.subr.mxu0 0.0
    %4219 = vmatpush2.msra.mxu0 0.0
    %4220 = vmatprep.subr.mxu0 0.0
    %4221 = vmatpush2.msra.mxu0 0.0
    %4222 = vmatprep.subr.mxu0 0.0
    %4223 = vmatpush2.msra.mxu0 0.0
    %4224 = vmatprep.subr.mxu0 0.0
    %4225 = vmatpush2.msra.mxu0 0.0
    %4226 = vmatprep.subr.mxu0 0.0
    %4227 = vmatpush2.msra.mxu0 0.0
    %4228 = vmatprep.subr.mxu0 0.0
    %4229 = vmatpush2.msra.mxu0 0.0
    %4230 = vmatprep.subr.mxu0 0.0
    %4231 = vmatpush2.msra.mxu0 0.0
    %4232 = vmatprep.subr.mxu0 0.0
    %4233 = vmatpush2.msra.mxu0 0.0
    %4234 = vmatprep.subr.mxu0 0.0
    %4235 = vmatpush2.msra.mxu0 0.0
    %4236 = vmatprep.subr.mxu0 0.0
    %4237 = vmatpush2.msra.mxu0 0.0
    %4238 = vmatprep.subr.mxu0 0.0
    %4239 = vmatpush2.msra.mxu0 0.0
    %4240 = vmatprep.subr.mxu0 0.0
    %4241 = vmatpush2.msra.mxu0 0.0
    %4242 = vmatprep.subr.mxu0 0.0
    %4243 = vmatpush2.msra.mxu0 0.0
    %4244 = vmatprep.subr.mxu0 0.0
    %4245 = vmatpush2.msra.mxu0 0.0
    %4246 = vmatprep.subr.mxu0 0.0
    %4247 = vmatpush2.msra.mxu0 0.0
    %4248 = vmatprep.subr.mxu0 0.0
    %4249 = vmatpush2.msra.mxu0 0.0
    %4250 = vmatprep.mubr.f32.mxu0 0.0
    %4251 = vmatmul.mubr.f32.gmra.mxu0 %v4181
    %v4252 = vpop.f32.mrf.mxu0
    %v4253 = vadd.f32 0.0, %v4252
    %v4254 = vpop.f32.mrf.mxu0
    %4255 = vmatprep.mubr.f32.mxu0 0.0
    %4256 = vmatmul.mubr.f32.gmra.mxu0 %v4184
    %v4257 = vpop.f32.mrf.mxu0
    %v4258 = vadd.f32 0.0, %v4257
    %v4259 = vpop.f32.mrf.mxu0
    %4260 = vdwg.mxu0
    %v4261 = vxor.u32 %v4253, 2147483648
    %v4262 = vxor.u32 %v4258, 2147483648
    %v4263 = vmul.f32 %v4261, 1.442695
    %v4264 = vpow.pop %v4263
    %v4265 = vmul.f32 %v4262, 1.442695
    %v4266 = vpow.pop %v4265
    %v4267 = vadd.f32 %v4264, 1.0
    %v4268 = vadd.f32 %v4266, 1.0
    %v4269 = vrcp.pop %v4267
    %v4270 = vmul.f32 1.0, %v4269
    %v4271 = vrcp.pop %v4268
    %v4272 = vmul.f32 1.0, %v4271
    %v4273 = vmul.f32 %v4270, %v4176
    %v4274 = vmul.f32 %v4272, %v4177
    %v4275 = vadd.f32 %v4168, %v4273
    %v4276 = vadd.f32 %v4173, %v4274
    %v4277 = vld [vmem:[%s59] sm:$0x1]
    %v4278 = vld [vmem:[#allocation2] sm:$0x1]
    %v4279 = vld [vmem:[%s49] sm:$0x1]
    %v4281 = vlaneseq
    %v4282 = vshrl.u32 %v4281, 7
    %v4283 = vsub.s32 0, %v4282
    %v4284 = vrot.slane %v4279, %v4283
    %v4286 = vadd.f32 %v4275, %v4284
    %v4287 = vadd.f32 %v4276, %v4284
    %vm4288 = vcmask 64512
    %v4289 = vsel %vm4288, %v4286, -inf
    %4290 = vmax.xlane.f32.xlu0 %v4289
    %v4291 = vpop.xlane.xlu0 %4290
    %v4292 = vsel %vm4288, %v4287, -inf
    %4293 = vmax.xlane.f32.xlu0 %v4292
    %v4294 = vpop.xlane.xlu0 %4293
    %v4295 = vld [vmem:[%s55] sm:$0x1]
    %v4297 = vlaneseq
    %v4298 = vshrl.u32 %v4297, 7
    %v4299 = vsub.s32 0, %v4298
    %v4300 = vrot.slane %v4295, %v4299
    %v4302 = vmul.f32 %v4291, %v4300
    %v4303 = vmul.f32 %v4294, %v4300
    %v4304 = vadd.f32 %v4302, 0.0
    %v4305 = vadd.f32 %v4303, 0.0
    %v4306 = vld [vmem:[%s51] sm:$0x1]
    %v4308 = vlaneseq
    %v4309 = vshrl.u32 %v4308, 7
    %v4310 = vsub.s32 0, %v4309
    %v4311 = vrot.slane %v4306, %v4310
    %v4313 = vadd.f32 %v4275, %v4311
    %v4314 = vadd.f32 %v4276, %v4311
    %v4315 = vsel %vm4288, %v4313, -inf
    %4316 = vmax.xlane.f32.xlu0 %v4315
    %v4317 = vpop.xlane.xlu0 %4316
    %v4318 = vsel %vm4288, %v4314, -inf
    %4319 = vmax.xlane.f32.xlu0 %v4318
    %v4320 = vpop.xlane.xlu0 %4319
    %v4321 = vld [vmem:[%s57] sm:$0x1]
    %v4323 = vlaneseq
    %v4324 = vshrl.u32 %v4323, 7
    %v4325 = vsub.s32 0, %v4324
    %v4326 = vrot.slane %v4321, %v4325
    %v4328 = vmul.f32 %v4317, %v4326
    %v4329 = vmul.f32 %v4320, %v4326
    %v4330 = vadd.f32 %v4304, %v4328
    %v4331 = vadd.f32 %v4305, %v4329
    %4333 = vset.pattern.permute.xlu0 0
    %4334 = vperm.xlu0 %4333, %v4278
    %v4335 = vpop.permute.xlu0 %4334
    %v4337 = vlaneseq
    %v4338 = vshrl.u32 %v4337, 7
    %v4339 = vsub.s32 0, %v4338
    %v4340 = vrot.slane %v4335, %v4339
    %v4342 = vsel %vm1299, %v4277, 0
    %4344 = vmatprep.subr.mxu0 0.0
    %4345 = vmatpush1.msra.mxu0 0.0
    %4346 = vmatprep.subr.mxu0 0.0
    %4347 = vmatpush1.msra.mxu0 0.0
    %4348 = vmatprep.subr.mxu0 0.0
    %4349 = vmatpush1.msra.mxu0 0.0
    %4350 = vmatprep.subr.mxu0 0.0
    %4351 = vmatpush1.msra.mxu0 0.0
    %4352 = vmatprep.subr.mxu0 0.0
    %4353 = vmatpush1.msra.mxu0 0.0
    %4354 = vmatprep.subr.mxu0 0.0
    %4355 = vmatpush1.msra.mxu0 0.0
    %4356 = vmatprep.subr.mxu0 0.0
    %4357 = vmatpush1.msra.mxu0 0.0
    %4358 = vmatprep.subr.mxu0 0.0
    %4359 = vmatpush1.msra.mxu0 0.0
    %4360 = vmatprep.subr.mxu0 0.0
    %4361 = vmatpush1.msra.mxu0 0.0
    %4362 = vmatprep.subr.mxu0 0.0
    %4363 = vmatpush1.msra.mxu0 0.0
    %4364 = vmatprep.subr.mxu0 0.0
    %4365 = vmatpush1.msra.mxu0 0.0
    %4366 = vmatprep.subr.mxu0 0.0
    %4367 = vmatpush1.msra.mxu0 0.0
    %4368 = vmatprep.subr.mxu0 0.0
    %4369 = vmatpush1.msra.mxu0 0.0
    %4370 = vmatprep.subr.mxu0 0.0
    %4371 = vmatpush1.msra.mxu0 0.0
    %4372 = vmatprep.subr.mxu0 0.0
    %4373 = vmatpush1.msra.mxu0 %v4331
    %4374 = vmatprep.subr.mxu0 0.0
    %4375 = vmatpush1.msra.mxu0 %v4330
    %4376 = vmatprep.subr.mxu0 0.0
    %4377 = vmatpush2.msra.mxu0 0.0
    %4378 = vmatprep.subr.mxu0 0.0
    %4379 = vmatpush2.msra.mxu0 0.0
    %4380 = vmatprep.subr.mxu0 0.0
    %4381 = vmatpush2.msra.mxu0 0.0
    %4382 = vmatprep.subr.mxu0 0.0
    %4383 = vmatpush2.msra.mxu0 0.0
    %4384 = vmatprep.subr.mxu0 0.0
    %4385 = vmatpush2.msra.mxu0 0.0
    %4386 = vmatprep.subr.mxu0 0.0
    %4387 = vmatpush2.msra.mxu0 0.0
    %4388 = vmatprep.subr.mxu0 0.0
    %4389 = vmatpush2.msra.mxu0 0.0
    %4390 = vmatprep.subr.mxu0 0.0
    %4391 = vmatpush2.msra.mxu0 0.0
    %4392 = vmatprep.subr.mxu0 0.0
    %4393 = vmatpush2.msra.mxu0 0.0
    %4394 = vmatprep.subr.mxu0 0.0
    %4395 = vmatpush2.msra.mxu0 0.0
    %4396 = vmatprep.subr.mxu0 0.0
    %4397 = vmatpush2.msra.mxu0 0.0
    %4398 = vmatprep.subr.mxu0 0.0
    %4399 = vmatpush2.msra.mxu0 0.0
    %4400 = vmatprep.subr.mxu0 0.0
    %4401 = vmatpush2.msra.mxu0 0.0
    %4402 = vmatprep.subr.mxu0 0.0
    %4403 = vmatpush2.msra.mxu0 0.0
    %4404 = vmatprep.subr.mxu0 0.0
    %4405 = vmatpush2.msra.mxu0 0.0
    %4406 = vmatprep.subr.mxu0 0.0
    %4407 = vmatpush2.msra.mxu0 0.0
    %4408 = vmatprep.mubr.f32.mxu0 0.0
    %4409 = vmatmul.mubr.f32.gmra.mxu0 %v4342
    %v4410 = vpop.f32.mrf.mxu0
    %v4411 = vadd.f32 %v4340, %v4410
    %v4412 = vpop.f32.mrf.mxu0
    %4413 = vdwg.mxu0
    %v4414 = vmax.f32 %v4411, 0.0
    %vm4415 = vcmask 8192
    %4416 = vst.msk [vmem:[#allocation26] sm:$0x1] %vm4415, %v4414
    // Predicated region
    $region222: #{forward.1} parent=1 // pred_check
      _
    $region223: #{forward.1} parent=1 // pred_check_branch
      %4418 = sbr.rel (0) target = $region225
    $region224: #{forward.1} parent=1 // pred_region
      %s4420 = ssub.s32 16, 16
      %4421 = vsyncadd [#allocation5], %s4420
      %s4423 = sshll.u32 [#allocation26], 4
      %s4424 = int_to_ptr.vmem [resolvable:$true] %s4423
      %4426 = dma.vmem_to_hbm [thread:$0]  %s4424, 16, %s83, [#allocation5]
    $region225: #{forward.1} parent=1 // pred_fallthru
      _
    // Predicated region
    $region226: #{forward.1} parent=1 // pred_check
      _
    $region227: #{forward.1} parent=1 // pred_check_branch
      %4428 = sbr.rel (0) target = $region229
    $region228: #{forward.1} parent=1 // pred_region
      %4429 = dma.done [#allocation5], 16
    $region229: #{forward.1} parent=1 // pred_fallthru
      _
    %4430 = vsyncpa [#allocation4], 1
    %4431 = vsyncpa [#allocation7], 1
    %4432 = vsyncpa [#allocation10], 1
    %4433 = vsyncpa [#allocation13], 1
    %4434 = vsyncpa [#allocation16], 1
    %4435 = vsyncpa [#allocation19], 1
    %4436 = vsyncpa [#allocation22], 1
    %4437 = vsyncpa [#allocation25], 1
    %4438 = vsyncpa [#allocation5], 1

</llo_original>
